<compile_context>
chip_gen: v6e
topology: v6e:2x2x1
jax: 0.10.0
libtpu: 0.0.40
codegen_flags: <defaults>
</compile_context>

<pallas_src>
import functools

import numpy as np

import jax
import jax.numpy as jnp
from jax.experimental import pallas as pl
from jax.experimental.pallas import tpu as pltpu


# ------------------------------- small helpers ------------------------------ #

def _round_up(x, m):
    return (x + m - 1) // m * m


def _pad_last(a, target):
    if a.shape[-1] == target:
        return a
    pad = [(0, 0)] * a.ndim
    pad[-1] = (0, target - a.shape[-1])
    return jnp.pad(a, pad)


def _pad_to(a, shape):
    pads = [(0, t - s) for s, t in zip(a.shape, shape)]
    if all(p == (0, 0) for p in pads):
        return a
    return jnp.pad(a, pads)


def _pick_tile_m(m):
    # Prefer large row tiles (amortize per-step overhead) but keep >= 2 grid steps
    # so both TensorCores on v7x get work.
    for t in (512, 256, 128):
        if m >= 2 * t:
            return t
    return 128


def _make_pool_matrix(h, w):
    # (Ho*Wo, H*W) matrix with 4 entries of 0.25 per row == 2x2 average pooling.
    ho, wo = h // 2, w // 2
    mat = np.zeros((ho * wo, h * w), np.float32)
    for i in range(ho):
        for j in range(wo):
            r = i * wo + j
            for dy in range(2):
                for dx in range(2):
                    mat[r, (2 * i + dy) * w + (2 * j + dx)] = 0.25
    return jnp.asarray(mat)


# ------------------------------- Pallas kernels ------------------------------ #

def _conv1x1_bias_relu_kernel(x_ref, w_ref, b_ref, o_ref):
    # (tile_m, Cin) @ (Cin, Cout) on the MXU (bf16 in, f32 accumulate), bias + ReLU in f32.
    acc = jnp.dot(x_ref[...], w_ref[...], preferred_element_type=jnp.float32)
    o_ref[...] = jnp.maximum(acc + b_ref[...], 0.0).astype(o_ref.dtype)


def _bottleneck_tail_kernel(h1p_ref, x_ref, w2_ref, w3_ref, b2_ref, b3_ref, *rest,
                            H, W, conv_shortcut, downsample):
    # rest = ([wsc_ref, bsc_ref] if conv_shortcut) + ([pool_ref] if downsample) + [o_ref]
    i = 0
    wsc_ref = bsc_ref = pool_ref = None
    if conv_shortcut:
        wsc_ref, bsc_ref = rest[i], rest[i + 1]
        i += 2
    if downsample:
        pool_ref = rest[i]
        i += 1
    o_ref = rest[i]

    HW = H * W
    c_mid = w2_ref.shape[-1]

    # conv2 (3x3, pad=1): accumulate 9 shifted matmuls from the spatially padded h1.
    acc = None
    for ky in range(3):
        for kx in range(3):
            patch = h1p_ref[0, pl.ds(ky, H), pl.ds(kx, W), :].reshape(HW, c_mid)
            term = jnp.dot(patch, w2_ref[ky * 3 + kx],
                           preferred_element_type=jnp.float32)
            acc = term if acc is None else acc + term
    h2 = jnp.maximum(acc + b2_ref[...], 0.0)                      # bn2 + relu (f32)

    # conv3 (1x1) + bn3
    out = jnp.dot(h2.astype(jnp.bfloat16), w3_ref[...],
                  preferred_element_type=jnp.float32) + b3_ref[...]

    # shortcut (1x1 conv + bn, or identity) fused in
    x2d = x_ref[0]
    if conv_shortcut:
        out = out + jnp.dot(x2d, wsc_ref[...],
                            preferred_element_type=jnp.float32) + bsc_ref[...]
    else:
        out = out + x2d.astype(jnp.float32)

    out = jnp.maximum(out, 0.0)

    # optional fused 2x2 average pool (small matmul with a constant pooling matrix)
    if downsample:
        out = jnp.dot(pool_ref[...], out, preferred_element_type=jnp.float32)

    o_ref[0] = out.astype(o_ref.dtype)


# ------------------------------ Pallas wrappers ------------------------------ #

def conv1x1_bias_relu(x2d, w, b, out_dtype=jnp.bfloat16):
    M, K = x2d.shape
    Kw, Nc = w.shape
    assert K == Kw
    tile_m = _pick_tile_m(M)
    Mp = _round_up(M, tile_m)
    if Mp != M:
        x2d = jnp.pad(x2d, ((0, Mp - M), (0, 0)))
    out = pl.pallas_call(
        _conv1x1_bias_relu_kernel,
        out_shape=jax.ShapeDtypeStruct((Mp, Nc), out_dtype),
        grid=(Mp // tile_m,),
        in_specs=[
            pl.BlockSpec((tile_m, K), lambda i: (i, 0)),
            pl.BlockSpec((K, Nc), lambda i: (0, 0)),
            pl.BlockSpec((1, Nc), lambda i: (0, 0)),
        ],
        out_specs=pl.BlockSpec((tile_m, Nc), lambda i: (i, 0)),
        compiler_params=pltpu.CompilerParams(dimension_semantics=("parallel",)),
    )(x2d, w, b)
    return out[:M] if Mp != M else out


def dis_bottleneck_forward(x_nchw, prep, meta, *, downsample=False, stride=1):
    assert stride == 1, "only stride=1 supported"  # TODO(synk): stride>1 path
    Cin, Cmid, Cexp, Cpin, Cpmid, Cpexp = meta
    N, cin_x, H, W = x_nchw.shape
    assert cin_x == Cin
    # In-kernel (H, W, C) <-> (H*W, C) regrouping is a layout no-op only when the
    # width is sublane-aligned.  # TODO(synk): general W support via explicit row loop.
    assert W % 8 == 0
    if downsample:
        assert H % 2 == 0 and W % 2 == 0

    conv_shortcut = (stride != 1) or (Cin != Cexp)

    # NCHW -> NHWC, pad channels to 128 lanes, cast matmul operands to bf16.
    x_nhwc = jnp.transpose(x_nchw, (0, 2, 3, 1))
    x_p = _pad_last(x_nhwc, Cpin).astype(jnp.bfloat16)

    # conv1 (1x1) + bn1 + relu over all pixels (Kernel A).
    h1 = conv1x1_bias_relu(x_p.reshape(N * H * W, Cpin), prep["w1"], prep["b1"])
    # Pad h1 spatially once (zeros == conv2's padding=1 of the post-bn/relu activation).
    h1_pad = jnp.pad(h1.reshape(N, H, W, Cpmid), ((0, 0), (1, 1), (1, 1), (0, 0)))

    # Fused tail (Kernel B): conv2+bn2+relu, conv3+bn3, shortcut, relu [, avgpool 2x2].
    Ho, Wo = (H // 2, W // 2) if downsample else (H, W)
    HWo = Ho * Wo

    inputs = [h1_pad, x_p.reshape(N, H * W, Cpin),
              prep["w2"], prep["w3"], prep["b2"], prep["b3"]]
    in_specs = [
        pl.BlockSpec((1, H + 2, W + 2, Cpmid), lambda n: (n, 0, 0, 0)),
        pl.BlockSpec((1, H * W, Cpin), lambda n: (n, 0, 0)),
        pl.BlockSpec((9, Cpmid, Cpmid), lambda n: (0, 0, 0)),
        pl.BlockSpec((Cpmid, Cpexp), lambda n: (0, 0)),
        pl.BlockSpec((1, Cpmid), lambda n: (0, 0)),
        pl.BlockSpec((1, Cpexp), lambda n: (0, 0)),
    ]
    if conv_shortcut:
        inputs += [prep["wsc"], prep["bsc"]]
        in_specs += [pl.BlockSpec((Cpin, Cpexp), lambda n: (0, 0)),
                     pl.BlockSpec((1, Cpexp), lambda n: (0, 0))]
    if downsample:
        inputs += [_make_pool_matrix(H, W)]
        in_specs += [pl.BlockSpec((HWo, H * W), lambda n: (0, 0))]

    kernel = functools.partial(_bottleneck_tail_kernel, H=H, W=W,
                               conv_shortcut=conv_shortcut, downsample=downsample)
    out = pl.pallas_call(
        kernel,
        out_shape=jax.ShapeDtypeStruct((N, HWo, Cpexp), jnp.float32),
        grid=(N,),
        in_specs=in_specs,
        out_specs=pl.BlockSpec((1, HWo, Cpexp), lambda n: (n, 0, 0)),
        compiler_params=pltpu.CompilerParams(dimension_semantics=("parallel",)),
    )(*inputs)

    out = out.reshape(N, Ho, Wo, Cpexp)[..., :Cexp]
    return jnp.transpose(out, (0, 3, 1, 2))          # NHWC -> NCHW


# ------------------------------ parameter setup ------------------------------ #

def _fold_bn(gamma, beta, mean, var, eps=1e-5):
    scale = gamma / jnp.sqrt(var + eps)
    bias = beta - mean * scale
    return scale, bias


def init_raw_params(key, in_channels, out_channels, expansion=4):
    c_exp = expansion * out_channels
    ks = jax.random.split(key, 8)

    def bn(k, c):
        k1, k2, k3, k4 = jax.random.split(k, 4)
        gamma = 1.0 + 0.05 * jax.random.normal(k1, (c,), jnp.float32)
        beta = 0.05 * jax.random.normal(k2, (c,), jnp.float32)
        mean = 0.05 * jax.random.normal(k3, (c,), jnp.float32)
        var = 1.0 + 0.05 * jnp.abs(jax.random.normal(k4, (c,), jnp.float32))
        return (gamma, beta, mean, var)

    return {
        "w1": 0.1 * jax.random.normal(ks[0], (in_channels, out_channels), jnp.float32),
        "bn1": bn(ks[1], out_channels),
        "w2_hwio": 0.1 * jax.random.normal(ks[2], (3, 3, out_channels, out_channels), jnp.float32),
        "bn2": bn(ks[3], out_channels),
        "w3": 0.1 * jax.random.normal(ks[4], (out_channels, c_exp), jnp.float32),
        "bn3": bn(ks[5], c_exp),
        "wsc": 0.1 * jax.random.normal(ks[6], (in_channels, c_exp), jnp.float32),
        "bnsc": bn(ks[7], c_exp),
    }


def prepare_params(raw, in_channels, out_channels, expansion=4, lane=128):
    # Fold BN scale into the conv weights, cast weights to bf16, pad channels to 128.
    Cin, Cmid = in_channels, out_channels
    Cexp = expansion * out_channels
    Cpin, Cpmid, Cpexp = (_round_up(c, lane) for c in (Cin, Cmid, Cexp))

    s1, b1 = _fold_bn(*raw["bn1"])
    s2, b2 = _fold_bn(*raw["bn2"])
    s3, b3 = _fold_bn(*raw["bn3"])
    ssc, bsc = _fold_bn(*raw["bnsc"])

    w1 = (raw["w1"] * s1[None, :]).astype(jnp.bfloat16)
    w2 = (raw["w2_hwio"] * s2[None, None, None, :]).reshape(9, Cmid, Cmid).astype(jnp.bfloat16)
    w3 = (raw["w3"] * s3[None, :]).astype(jnp.bfloat16)
    wsc = (raw["wsc"] * ssc[None, :]).astype(jnp.bfloat16)

    prep = {
        "w1": _pad_to(w1, (Cpin, Cpmid)),
        "b1": _pad_last(b1[None, :], Cpmid),
        "w2": _pad_to(w2, (9, Cpmid, Cpmid)),
        "b2": _pad_last(b2[None, :], Cpmid),
        "w3": _pad_to(w3, (Cpmid, Cpexp)),
        "b3": _pad_last(b3[None, :], Cpexp),
        "wsc": _pad_to(wsc, (Cpin, Cpexp)),
        "bsc": _pad_last(bsc[None, :], Cpexp),
    }
    meta = (Cin, Cmid, Cexp, Cpin, Cpmid, Cpexp)
    return prep, meta


# ------------------------------ pure-JAX reference ---------------------------- #

def reference_forward(x_nchw, prep, meta, *, downsample=False):
    # Same math (bf16 operands, f32 accumulation, folded inference BN) in plain JAX.
    Cin, Cmid, Cexp, *_ = meta
    N, _, H, W = x_nchw.shape
    conv_shortcut = (Cin != Cexp)
    x = jnp.transpose(x_nchw, (0, 2, 3, 1)).astype(jnp.bfloat16)

    def mm(a, w):
        return jnp.einsum("nhwc,cd->nhwd", a, w, preferred_element_type=jnp.float32)

    h1 = jnp.maximum(mm(x, prep["w1"][:Cin, :Cmid]) + prep["b1"][0, :Cmid], 0.0)
    h1 = h1.astype(jnp.bfloat16)

    hp = jnp.pad(h1, ((0, 0), (1, 1), (1, 1), (0, 0)))
    acc = jnp.zeros((N, H, W, Cmid), jnp.float32)
    for ky in range(3):
        for kx in range(3):
            acc = acc + mm(hp[:, ky:ky + H, kx:kx + W, :],
                           prep["w2"][ky * 3 + kx, :Cmid, :Cmid])
    h2 = jnp.maximum(acc + prep["b2"][0, :Cmid], 0.0).astype(jnp.bfloat16)

    out = mm(h2, prep["w3"][:Cmid, :Cexp]) + prep["b3"][0, :Cexp]
    if conv_shortcut:
        out = out + mm(x, prep["wsc"][:Cin, :Cexp]) + prep["bsc"][0, :Cexp]
    else:
        out = out + x[..., :Cexp].astype(jnp.float32)
    out = jnp.maximum(out, 0.0)

    if downsample:
        out = 0.25 * (out[:, 0::2, 0::2] + out[:, 0::2, 1::2] +
                      out[:, 1::2, 0::2] + out[:, 1::2, 1::2])
    return jnp.transpose(out, (0, 3, 1, 2))


# ------------------------------------ main ------------------------------------ #

if __name__ == "__main__":
    key = jax.random.PRNGKey(0)
    k_x, k_p = jax.random.split(key)

    N, Cin, H, W = 2, 4, 16, 16
    out_channels = 4            # expansion*out_channels = 16 != Cin -> conv shortcut active
    downsample = True

    x = jax.random.normal(k_x, (N, Cin, H, W), jnp.float32)
    raw = init_raw_params(k_p, Cin, out_channels)
    prep, meta = prepare_params(raw, Cin, out_channels)

    forward = jax.jit(lambda xx: dis_bottleneck_forward(
        xx, prep, meta, downsample=downsample, stride=1))
    out = jax.block_until_ready(forward(x))

    ref = reference_forward(x, prep, meta, downsample=downsample)

    assert out.shape == (N, 4 * out_channels, H // 2, W // 2), out.shape
    assert jnp.allclose(out, ref, atol=1e-2, rtol=1e-2), \
        float(jnp.max(jnp.abs(out - ref)))

    print("KERNEL_OK")
</pallas_src>

<mosaic_0001>
module attributes {stable_mosaic.version = 11 : i64} {
  func.func @_conv1x1_bias_relu_kernel(%arg0: i32, %arg1: memref<256x128xbf16, #tpu.memory_space<vmem>>, %arg2: memref<128x128xbf16, #tpu.memory_space<vmem>>, %arg3: memref<1x128xf32, #tpu.memory_space<vmem>>, %arg4: memref<256x128xbf16, #tpu.memory_space<vmem>>) attributes {dimension_semantics = [#tpu.dimension_semantics<parallel>], iteration_bounds = array<i64: 2>, scalar_prefetch = 0 : i64, scratch_operands = 0 : i64, tpu.core_type = #tpu.core_type<tc>, window_params = [{transform_indices = @transform_0, window_bounds = array<i64: 256, 128>}, {pipeline_mode = #tpu.pipeline_mode<synchronous>, transform_indices = @transform_1, window_bounds = array<i64: 128, 128>}, {pipeline_mode = #tpu.pipeline_mode<synchronous>, transform_indices = @transform_2, window_bounds = array<i64: 1, 128>}, {transform_indices = @transform_3, window_bounds = array<i64: 256, 128>}]} {
    %c0 = arith.constant 0 : index
    %c0_0 = arith.constant 0 : index
    %0 = vector.load %arg1[%c0, %c0_0] : memref<256x128xbf16, #tpu.memory_space<vmem>>, vector<256x128xbf16>
    %c0_1 = arith.constant 0 : index
    %c0_2 = arith.constant 0 : index
    %1 = vector.load %arg2[%c0_1, %c0_2] : memref<128x128xbf16, #tpu.memory_space<vmem>>, vector<128x128xbf16>
    %cst = arith.constant dense<0.000000e+00> : vector<256x128xf32>
    %2 = tpu.matmul %0, %1, %cst {dimension_numbers = #tpu.dot_dimension_numbers<[1], [0], [0], [1], [0, 0, 1, 1], [], []>} : vector<256x128xbf16>, vector<128x128xbf16>, vector<256x128xf32> -> vector<256x128xf32>
    %c0_3 = arith.constant 0 : index
    %c0_4 = arith.constant 0 : index
    %3 = vector.load %arg3[%c0_3, %c0_4] : memref<1x128xf32, #tpu.memory_space<vmem>>, vector<1x128xf32>
    %4 = vector.broadcast %3 : vector<1x128xf32> to vector<256x128xf32>
    %5 = arith.addf %2, %4 : vector<256x128xf32>
    %cst_5 = arith.constant 0.000000e+00 : f32
    %6 = vector.broadcast %cst_5 : f32 to vector<256x128xf32>
    %7 = arith.maximumf %5, %6 : vector<256x128xf32>
    %8 = arith.truncf %7 : vector<256x128xf32> to vector<256x128xbf16>
    %c0_6 = arith.constant 0 : index
    %c0_7 = arith.constant 0 : index
    %9 = vector.load %arg4[%c0_6, %c0_7] : memref<256x128xbf16, #tpu.memory_space<vmem>>, vector<256x128xbf16>
    tpu.vector_store %arg4[%c0_6, %c0_7], %8 {strides = array<i32>} : memref<256x128xbf16, #tpu.memory_space<vmem>>, vector<256x128xbf16>,
    return
  }
  func.func @transform_0(%arg0: i32) -> (i32, i32) {
    %c0_i32 = arith.constant 0 : i32
    %c0_i32_0 = arith.constant 0 : i32
    return %arg0, %c0_i32 : i32, i32
  }
  func.func @transform_1(%arg0: i32) -> (i32, i32) {
    %c0_i32 = arith.constant 0 : i32
    %c0_i32_0 = arith.constant 0 : i32
    %c0_i32_1 = arith.constant 0 : i32
    return %c0_i32, %c0_i32_0 : i32, i32
  }
  func.func @transform_2(%arg0: i32) -> (i32, i32) {
    %c0_i32 = arith.constant 0 : i32
    %c0_i32_0 = arith.constant 0 : i32
    %c0_i32_1 = arith.constant 0 : i32
    return %c0_i32, %c0_i32_0 : i32, i32
  }
  func.func @transform_3(%arg0: i32) -> (i32, i32) {
    %c0_i32 = arith.constant 0 : i32
    %c0_i32_0 = arith.constant 0 : i32
    return %arg0, %c0_i32 : i32, i32
  }
}

module attributes {stable_mosaic.version = 11 : i64} {
  func.func @_bottleneck_tail_kernel(%arg0: i32, %arg1: memref<1x18x18x128xbf16, #tpu.memory_space<vmem>>, %arg2: memref<1x256x128xbf16, #tpu.memory_space<vmem>>, %arg3: memref<9x128x128xbf16, #tpu.memory_space<vmem>>, %arg4: memref<128x128xbf16, #tpu.memory_space<vmem>>, %arg5: memref<1x128xf32, #tpu.memory_space<vmem>>, %arg6: memref<1x128xf32, #tpu.memory_space<vmem>>, %arg7: memref<128x128xbf16, #tpu.memory_space<vmem>>, %arg8: memref<1x128xf32, #tpu.memory_space<vmem>>, %arg9: memref<64x256xf32, #tpu.memory_space<vmem>>, %arg10: memref<1x64x128xf32, #tpu.memory_space<vmem>>) attributes {dimension_semantics = [#tpu.dimension_semantics<parallel>], iteration_bounds = array<i64: 2>, scalar_prefetch = 0 : i64, scratch_operands = 0 : i64, tpu.core_type = #tpu.core_type<tc>, window_params = [{transform_indices = @transform_0, window_bounds = array<i64: 1, 18, 18, 128>}, {transform_indices = @transform_1, window_bounds = array<i64: 1, 256, 128>}, {pipeline_mode = #tpu.pipeline_mode<synchronous>, transform_indices = @transform_2, window_bounds = array<i64: 9, 128, 128>}, {pipeline_mode = #tpu.pipeline_mode<synchronous>, transform_indices = @transform_3, window_bounds = array<i64: 128, 128>}, {pipeline_mode = #tpu.pipeline_mode<synchronous>, transform_indices = @transform_4, window_bounds = array<i64: 1, 128>}, {pipeline_mode = #tpu.pipeline_mode<synchronous>, transform_indices = @transform_5, window_bounds = array<i64: 1, 128>}, {pipeline_mode = #tpu.pipeline_mode<synchronous>, transform_indices = @transform_6, window_bounds = array<i64: 128, 128>}, {pipeline_mode = #tpu.pipeline_mode<synchronous>, transform_indices = @transform_7, window_bounds = array<i64: 1, 128>}, {pipeline_mode = #tpu.pipeline_mode<synchronous>, transform_indices = @transform_8, window_bounds = array<i64: 64, 256>}, {transform_indices = @transform_9, window_bounds = array<i64: 1, 64, 128>}]} {
    %c0 = arith.constant 0 : index
    %c0_0 = arith.constant 0 : index
    %c0_1 = arith.constant 0 : index
    %c0_2 = arith.constant 0 : index
    %0 = vector.load %arg1[%c0, %c0_0, %c0_1, %c0_2] : memref<1x18x18x128xbf16, #tpu.memory_space<vmem>>, vector<1x16x16x128xbf16>
    %1 = vector.shape_cast %0 : vector<1x16x16x128xbf16> to vector<16x16x128xbf16>
    %2 = vector.shape_cast %1 : vector<16x16x128xbf16> to vector<256x128xbf16>
    %c0_3 = arith.constant 0 : index
    %c0_4 = arith.constant 0 : index
    %c0_5 = arith.constant 0 : index
    %3 = vector.load %arg3[%c0_3, %c0_4, %c0_5] : memref<9x128x128xbf16, #tpu.memory_space<vmem>>, vector<1x128x128xbf16>
    %4 = vector.shape_cast %3 : vector<1x128x128xbf16> to vector<128x128xbf16>
    %cst = arith.constant dense<0.000000e+00> : vector<256x128xf32>
    %5 = tpu.matmul %2, %4, %cst {dimension_numbers = #tpu.dot_dimension_numbers<[1], [0], [0], [1], [0, 0, 1, 1], [], []>} : vector<256x128xbf16>, vector<128x128xbf16>, vector<256x128xf32> -> vector<256x128xf32>
    %c0_6 = arith.constant 0 : index
    %c0_7 = arith.constant 0 : index
    %c1 = arith.constant 1 : index
    %c0_8 = arith.constant 0 : index
    %6 = vector.load %arg1[%c0_6, %c0_7, %c1, %c0_8] : memref<1x18x18x128xbf16, #tpu.memory_space<vmem>>, vector<1x16x16x128xbf16>
    %7 = vector.shape_cast %6 : vector<1x16x16x128xbf16> to vector<16x16x128xbf16>
    %8 = vector.shape_cast %7 : vector<16x16x128xbf16> to vector<256x128xbf16>
    %c1_9 = arith.constant 1 : index
    %c0_10 = arith.constant 0 : index
    %c0_11 = arith.constant 0 : index
    %9 = vector.load %arg3[%c1_9, %c0_10, %c0_11] : memref<9x128x128xbf16, #tpu.memory_space<vmem>>, vector<1x128x128xbf16>
    %10 = vector.shape_cast %9 : vector<1x128x128xbf16> to vector<128x128xbf16>
    %cst_12 = arith.constant dense<0.000000e+00> : vector<256x128xf32>
    %11 = tpu.matmul %8, %10, %cst_12 {dimension_numbers = #tpu.dot_dimension_numbers<[1], [0], [0], [1], [0, 0, 1, 1], [], []>} : vector<256x128xbf16>, vector<128x128xbf16>, vector<256x128xf32> -> vector<256x128xf32>
    %12 = arith.addf %5, %11 : vector<256x128xf32>
    %c0_13 = arith.constant 0 : index
    %c0_14 = arith.constant 0 : index
    %c2 = arith.constant 2 : index
    %c0_15 = arith.constant 0 : index
    %13 = vector.load %arg1[%c0_13, %c0_14, %c2, %c0_15] : memref<1x18x18x128xbf16, #tpu.memory_space<vmem>>, vector<1x16x16x128xbf16>
    %14 = vector.shape_cast %13 : vector<1x16x16x128xbf16> to vector<16x16x128xbf16>
    %15 = vector.shape_cast %14 : vector<16x16x128xbf16> to vector<256x128xbf16>
    %c2_16 = arith.constant 2 : index
    %c0_17 = arith.constant 0 : index
    %c0_18 = arith.constant 0 : index
    %16 = vector.load %arg3[%c2_16, %c0_17, %c0_18] : memref<9x128x128xbf16, #tpu.memory_space<vmem>>, vector<1x128x128xbf16>
    %17 = vector.shape_cast %16 : vector<1x128x128xbf16> to vector<128x128xbf16>
    %cst_19 = arith.constant dense<0.000000e+00> : vector<256x128xf32>
    %18 = tpu.matmul %15, %17, %cst_19 {dimension_numbers = #tpu.dot_dimension_numbers<[1], [0], [0], [1], [0, 0, 1, 1], [], []>} : vector<256x128xbf16>, vector<128x128xbf16>, vector<256x128xf32> -> vector<256x128xf32>
    %19 = arith.addf %12, %18 : vector<256x128xf32>
    %c0_20 = arith.constant 0 : index
    %c1_21 = arith.constant 1 : index
    %c0_22 = arith.constant 0 : index
    %c0_23 = arith.constant 0 : index
    %20 = vector.load %arg1[%c0_20, %c1_21, %c0_22, %c0_23] : memref<1x18x18x128xbf16, #tpu.memory_space<vmem>>, vector<1x16x16x128xbf16>
    %21 = vector.shape_cast %20 : vector<1x16x16x128xbf16> to vector<16x16x128xbf16>
    %22 = vector.shape_cast %21 : vector<16x16x128xbf16> to vector<256x128xbf16>
    %c3 = arith.constant 3 : index
    %c0_24 = arith.constant 0 : index
    %c0_25 = arith.constant 0 : index
    %23 = vector.load %arg3[%c3, %c0_24, %c0_25] : memref<9x128x128xbf16, #tpu.memory_space<vmem>>, vector<1x128x128xbf16>
    %24 = vector.shape_cast %23 : vector<1x128x128xbf16> to vector<128x128xbf16>
    %cst_26 = arith.constant dense<0.000000e+00> : vector<256x128xf32>
    %25 = tpu.matmul %22, %24, %cst_26 {dimension_numbers = #tpu.dot_dimension_numbers<[1], [0], [0], [1], [0, 0, 1, 1], [], []>} : vector<256x128xbf16>, vector<128x128xbf16>, vector<256x128xf32> -> vector<256x128xf32>
    %26 = arith.addf %19, %25 : vector<256x128xf32>
    %c0_27 = arith.constant 0 : index
    %c1_28 = arith.constant 1 : index
    %c1_29 = arith.constant 1 : index
    %c0_30 = arith.constant 0 : index
    %27 = vector.load %arg1[%c0_27, %c1_28, %c1_29, %c0_30] : memref<1x18x18x128xbf16, #tpu.memory_space<vmem>>, vector<1x16x16x128xbf16>
    %28 = vector.shape_cast %27 : vector<1x16x16x128xbf16> to vector<16x16x128xbf16>
    %29 = vector.shape_cast %28 : vector<16x16x128xbf16> to vector<256x128xbf16>
    %c4 = arith.constant 4 : index
    %c0_31 = arith.constant 0 : index
    %c0_32 = arith.constant 0 : index
    %30 = vector.load %arg3[%c4, %c0_31, %c0_32] : memref<9x128x128xbf16, #tpu.memory_space<vmem>>, vector<1x128x128xbf16>
    %31 = vector.shape_cast %30 : vector<1x128x128xbf16> to vector<128x128xbf16>
    %cst_33 = arith.constant dense<0.000000e+00> : vector<256x128xf32>
    %32 = tpu.matmul %29, %31, %cst_33 {dimension_numbers = #tpu.dot_dimension_numbers<[1], [0], [0], [1], [0, 0, 1, 1], [], []>} : vector<256x128xbf16>, vector<128x128xbf16>, vector<256x128xf32> -> vector<256x128xf32>
    %33 = arith.addf %26, %32 : vector<256x128xf32>
    %c0_34 = arith.constant 0 : index
    %c1_35 = arith.constant 1 : index
    %c2_36 = arith.constant 2 : index
    %c0_37 = arith.constant 0 : index
    %34 = vector.load %arg1[%c0_34, %c1_35, %c2_36, %c0_37] : memref<1x18x18x128xbf16, #tpu.memory_space<vmem>>, vector<1x16x16x128xbf16>
    %35 = vector.shape_cast %34 : vector<1x16x16x128xbf16> to vector<16x16x128xbf16>
    %36 = vector.shape_cast %35 : vector<16x16x128xbf16> to vector<256x128xbf16>
    %c5 = arith.constant 5 : index
    %c0_38 = arith.constant 0 : index
    %c0_39 = arith.constant 0 : index
    %37 = vector.load %arg3[%c5, %c0_38, %c0_39] : memref<9x128x128xbf16, #tpu.memory_space<vmem>>, vector<1x128x128xbf16>
    %38 = vector.shape_cast %37 : vector<1x128x128xbf16> to vector<128x128xbf16>
    %cst_40 = arith.constant dense<0.000000e+00> : vector<256x128xf32>
    %39 = tpu.matmul %36, %38, %cst_40 {dimension_numbers = #tpu.dot_dimension_numbers<[1], [0], [0], [1], [0, 0, 1, 1], [], []>} : vector<256x128xbf16>, vector<128x128xbf16>, vector<256x128xf32> -> vector<256x128xf32>
    %40 = arith.addf %33, %39 : vector<256x128xf32>
    %c0_41 = arith.constant 0 : index
    %c2_42 = arith.constant 2 : index
    %c0_43 = arith.constant 0 : index
    %c0_44 = arith.constant 0 : index
    %41 = vector.load %arg1[%c0_41, %c2_42, %c0_43, %c0_44] : memref<1x18x18x128xbf16, #tpu.memory_space<vmem>>, vector<1x16x16x128xbf16>
    %42 = vector.shape_cast %41 : vector<1x16x16x128xbf16> to vector<16x16x128xbf16>
    %43 = vector.shape_cast %42 : vector<16x16x128xbf16> to vector<256x128xbf16>
    %c6 = arith.constant 6 : index
    %c0_45 = arith.constant 0 : index
    %c0_46 = arith.constant 0 : index
    %44 = vector.load %arg3[%c6, %c0_45, %c0_46] : memref<9x128x128xbf16, #tpu.memory_space<vmem>>, vector<1x128x128xbf16>
    %45 = vector.shape_cast %44 : vector<1x128x128xbf16> to vector<128x128xbf16>
    %cst_47 = arith.constant dense<0.000000e+00> : vector<256x128xf32>
    %46 = tpu.matmul %43, %45, %cst_47 {dimension_numbers = #tpu.dot_dimension_numbers<[1], [0], [0], [1], [0, 0, 1, 1], [], []>} : vector<256x128xbf16>, vector<128x128xbf16>, vector<256x128xf32> -> vector<256x128xf32>
    %47 = arith.addf %40, %46 : vector<256x128xf32>
    %c0_48 = arith.constant 0 : index
    %c2_49 = arith.constant 2 : index
    %c1_50 = arith.constant 1 : index
    %c0_51 = arith.constant 0 : index
    %48 = vector.load %arg1[%c0_48, %c2_49, %c1_50, %c0_51] : memref<1x18x18x128xbf16, #tpu.memory_space<vmem>>, vector<1x16x16x128xbf16>
    %49 = vector.shape_cast %48 : vector<1x16x16x128xbf16> to vector<16x16x128xbf16>
    %50 = vector.shape_cast %49 : vector<16x16x128xbf16> to vector<256x128xbf16>
    %c7 = arith.constant 7 : index
    %c0_52 = arith.constant 0 : index
    %c0_53 = arith.constant 0 : index
    %51 = vector.load %arg3[%c7, %c0_52, %c0_53] : memref<9x128x128xbf16, #tpu.memory_space<vmem>>, vector<1x128x128xbf16>
    %52 = vector.shape_cast %51 : vector<1x128x128xbf16> to vector<128x128xbf16>
    %cst_54 = arith.constant dense<0.000000e+00> : vector<256x128xf32>
    %53 = tpu.matmul %50, %52, %cst_54 {dimension_numbers = #tpu.dot_dimension_numbers<[1], [0], [0], [1], [0, 0, 1, 1], [], []>} : vector<256x128xbf16>, vector<128x128xbf16>, vector<256x128xf32> -> vector<256x128xf32>
    %54 = arith.addf %47, %53 : vector<256x128xf32>
    %c0_55 = arith.constant 0 : index
    %c2_56 = arith.constant 2 : index
    %c2_57 = arith.constant 2 : index
    %c0_58 = arith.constant 0 : index
    %55 = vector.load %arg1[%c0_55, %c2_56, %c2_57, %c0_58] : memref<1x18x18x128xbf16, #tpu.memory_space<vmem>>, vector<1x16x16x128xbf16>
    %56 = vector.shape_cast %55 : vector<1x16x16x128xbf16> to vector<16x16x128xbf16>
    %57 = vector.shape_cast %56 : vector<16x16x128xbf16> to vector<256x128xbf16>
    %c8 = arith.constant 8 : index
    %c0_59 = arith.constant 0 : index
    %c0_60 = arith.constant 0 : index
    %58 = vector.load %arg3[%c8, %c0_59, %c0_60] : memref<9x128x128xbf16, #tpu.memory_space<vmem>>, vector<1x128x128xbf16>
    %59 = vector.shape_cast %58 : vector<1x128x128xbf16> to vector<128x128xbf16>
    %cst_61 = arith.constant dense<0.000000e+00> : vector<256x128xf32>
    %60 = tpu.matmul %57, %59, %cst_61 {dimension_numbers = #tpu.dot_dimension_numbers<[1], [0], [0], [1], [0, 0, 1, 1], [], []>} : vector<256x128xbf16>, vector<128x128xbf16>, vector<256x128xf32> -> vector<256x128xf32>
    %61 = arith.addf %54, %60 : vector<256x128xf32>
    %c0_62 = arith.constant 0 : index
    %c0_63 = arith.constant 0 : index
    %62 = vector.load %arg5[%c0_62, %c0_63] : memref<1x128xf32, #tpu.memory_space<vmem>>, vector<1x128xf32>
    %63 = vector.broadcast %62 : vector<1x128xf32> to vector<256x128xf32>
    %64 = arith.addf %61, %63 : vector<256x128xf32>
    %cst_64 = arith.constant 0.000000e+00 : f32
    %65 = vector.broadcast %cst_64 : f32 to vector<256x128xf32>
    %66 = arith.maximumf %64, %65 : vector<256x128xf32>
    %67 = arith.truncf %66 : vector<256x128xf32> to vector<256x128xbf16>
    %c0_65 = arith.constant 0 : index
    %c0_66 = arith.constant 0 : index
    %68 = vector.load %arg4[%c0_65, %c0_66] : memref<128x128xbf16, #tpu.memory_space<vmem>>, vector<128x128xbf16>
    %cst_67 = arith.constant dense<0.000000e+00> : vector<256x128xf32>
    %69 = tpu.matmul %67, %68, %cst_67 {dimension_numbers = #tpu.dot_dimension_numbers<[1], [0], [0], [1], [0, 0, 1, 1], [], []>} : vector<256x128xbf16>, vector<128x128xbf16>, vector<256x128xf32> -> vector<256x128xf32>
    %c0_68 = arith.constant 0 : index
    %c0_69 = arith.constant 0 : index
    %70 = vector.load %arg6[%c0_68, %c0_69] : memref<1x128xf32, #tpu.memory_space<vmem>>, vector<1x128xf32>
    %71 = vector.broadcast %70 : vector<1x128xf32> to vector<256x128xf32>
    %72 = arith.addf %69, %71 : vector<256x128xf32>
    %c0_70 = arith.constant 0 : index
    %c0_71 = arith.constant 0 : index
    %c0_72 = arith.constant 0 : index
    %73 = vector.load %arg2[%c0_70, %c0_71, %c0_72] : memref<1x256x128xbf16, #tpu.memory_space<vmem>>, vector<1x256x128xbf16>
    %74 = vector.shape_cast %73 : vector<1x256x128xbf16> to vector<256x128xbf16>
    %c0_73 = arith.constant 0 : index
    %c0_74 = arith.constant 0 : index
    %75 = vector.load %arg7[%c0_73, %c0_74] : memref<128x128xbf16, #tpu.memory_space<vmem>>, vector<128x128xbf16>
    %cst_75 = arith.constant dense<0.000000e+00> : vector<256x128xf32>
    %76 = tpu.matmul %74, %75, %cst_75 {dimension_numbers = #tpu.dot_dimension_numbers<[1], [0], [0], [1], [0, 0, 1, 1], [], []>} : vector<256x128xbf16>, vector<128x128xbf16>, vector<256x128xf32> -> vector<256x128xf32>
    %77 = arith.addf %72, %76 : vector<256x128xf32>
    %c0_76 = arith.constant 0 : index
    %c0_77 = arith.constant 0 : index
    %78 = vector.load %arg8[%c0_76, %c0_77] : memref<1x128xf32, #tpu.memory_space<vmem>>, vector<1x128xf32>
    %79 = vector.broadcast %78 : vector<1x128xf32> to vector<256x128xf32>
    %80 = arith.addf %77, %79 : vector<256x128xf32>
    %cst_78 = arith.constant 0.000000e+00 : f32
    %81 = vector.broadcast %cst_78 : f32 to vector<256x128xf32>
    %82 = arith.maximumf %80, %81 : vector<256x128xf32>
    %c0_79 = arith.constant 0 : index
    %c0_80 = arith.constant 0 : index
    %83 = vector.load %arg9[%c0_79, %c0_80] : memref<64x256xf32, #tpu.memory_space<vmem>>, vector<64x256xf32>
    %cst_81 = arith.constant dense<0.000000e+00> : vector<64x128xf32>
    %84 = tpu.matmul %83, %82, %cst_81 {dimension_numbers = #tpu.dot_dimension_numbers<[1], [0], [0], [1], [0, 0, 1, 1], [], []>} : vector<64x256xf32>, vector<256x128xf32>, vector<64x128xf32> -> vector<64x128xf32>
    %c0_82 = arith.constant 0 : index
    %c0_83 = arith.constant 0 : index
    %c0_84 = arith.constant 0 : index
    %85 = vector.load %arg10[%c0_82, %c0_83, %c0_84] : memref<1x64x128xf32, #tpu.memory_space<vmem>>, vector<1x64x128xf32>
    %86 = vector.shape_cast %85 : vector<1x64x128xf32> to vector<64x128xf32>
    %87 = vector.shape_cast %84 : vector<64x128xf32> to vector<1x64x128xf32>
    tpu.vector_store %arg10[%c0_82, %c0_83, %c0_84], %87 {strides = array<i32>} : memref<1x64x128xf32, #tpu.memory_space<vmem>>, vector<1x64x128xf32>,
    return
  }
  func.func @transform_0(%arg0: i32) -> (i32, i32, i32, i32) {
    %c0_i32 = arith.constant 0 : i32
    %c0_i32_0 = arith.constant 0 : i32
    %c0_i32_1 = arith.constant 0 : i32
    %c0_i32_2 = arith.constant 0 : i32
    return %arg0, %c0_i32, %c0_i32_0, %c0_i32_1 : i32, i32, i32, i32
  }
  func.func @transform_1(%arg0: i32) -> (i32, i32, i32) {
    %c0_i32 = arith.constant 0 : i32
    %c0_i32_0 = arith.constant 0 : i32
    %c0_i32_1 = arith.constant 0 : i32
    return %arg0, %c0_i32, %c0_i32_0 : i32, i32, i32
  }
  func.func @transform_2(%arg0: i32) -> (i32, i32, i32) {
    %c0_i32 = arith.constant 0 : i32
    %c0_i32_0 = arith.constant 0 : i32
    %c0_i32_1 = arith.constant 0 : i32
    %c0_i32_2 = arith.constant 0 : i32
    return %c0_i32, %c0_i32_0, %c0_i32_1 : i32, i32, i32
  }
  func.func @transform_3(%arg0: i32) -> (i32, i32) {
    %c0_i32 = arith.constant 0 : i32
    %c0_i32_0 = arith.constant 0 : i32
    %c0_i32_1 = arith.constant 0 : i32
    return %c0_i32, %c0_i32_0 : i32, i32
  }
  func.func @transform_4(%arg0: i32) -> (i32, i32) {
    %c0_i32 = arith.constant 0 : i32
    %c0_i32_0 = arith.constant 0 : i32
    %c0_i32_1 = arith.constant 0 : i32
    return %c0_i32, %c0_i32_0 : i32, i32
  }
  func.func @transform_5(%arg0: i32) -> (i32, i32) {
    %c0_i32 = arith.constant 0 : i32
    %c0_i32_0 = arith.constant 0 : i32
    %c0_i32_1 = arith.constant 0 : i32
    return %c0_i32, %c0_i32_0 : i32, i32
  }
  func.func @transform_6(%arg0: i32) -> (i32, i32) {
    %c0_i32 = arith.constant 0 : i32
    %c0_i32_0 = arith.constant 0 : i32
    %c0_i32_1 = arith.constant 0 : i32
    return %c0_i32, %c0_i32_0 : i32, i32
  }
  func.func @transform_7(%arg0: i32) -> (i32, i32) {
    %c0_i32 = arith.constant 0 : i32
    %c0_i32_0 = arith.constant 0 : i32
    %c0_i32_1 = arith.constant 0 : i32
    return %c0_i32, %c0_i32_0 : i32, i32
  }
  func.func @transform_8(%arg0: i32) -> (i32, i32) {
    %c0_i32 = arith.constant 0 : i32
    %c0_i32_0 = arith.constant 0 : i32
    %c0_i32_1 = arith.constant 0 : i32
    return %c0_i32, %c0_i32_0 : i32, i32
  }
  func.func @transform_9(%arg0: i32) -> (i32, i32, i32) {
    %c0_i32 = arith.constant 0 : i32
    %c0_i32_0 = arith.constant 0 : i32
    %c0_i32_1 = arith.constant 0 : i32
    return %arg0, %c0_i32, %c0_i32_0 : i32, i32, i32
  }
}

</mosaic_0001>

<llo_original>
// kernel: _lambda_.2
$region0: #{_lambda_.2}
  #allocation0 [shape = 'u32[]', space=smem, size = 0x4, offset = 0x4, fixed_abs, tag = 'smem constant byte address 0x4 - core index']
  #allocation1 [shape = 'u32[144,128]{1,0:T(1,128)}', space=vmem, size = 0x12000, scoped, tag = 'internal scratch']
  %s0 = inlined_call_operand.vmem [shape: bf16[512,128], index: 0, kind: input, shape index: {}]
  %s1 = inlined_call_operand.vmem [shape: bf16[128,128], index: 1, kind: input, shape index: {}]
  %s2 = inlined_call_operand.vmem [shape: f32[1,128], index: 2, kind: input, shape index: {}]
  %s3 = inlined_call_operand.vmem [shape: bf16[512,128], index: 3, kind: output, shape index: {}]
  %s4 = sld [smem:[#allocation0]]
  $region45: #{_lambda_.2} parent=0
    _
  %s6 = ssub.s32 1, %s4
  %s7 = scalar_select 0, %s6, %s4
  loop: start=0, step=1, limit=4
  $region2: #{_lambda_.2} parent=0 // loop_pre_header
    _
  $region3: #{_lambda_.2} parent=0 // loop_header
    %s9 = sphi 0, %s13
    %p10 = scmp.ge.s32.totalorder %s9, 4
    %s19 = sphi 0, %s21
    %s22 = sphi 0, %s19
    %s23 = sphi 0, %s22
    %s39 = sphi 0, %s23
    %s43 = sphi 0, %s43
    %s45 = sphi 0, %s43
    %s46 = sphi 0, %s45
    %s60 = sphi 0, %s46
    %s64 = sphi 0, %s64
    %s66 = sphi 0, %s64
    %s67 = sphi 0, %s66
    %s81 = sphi 0, %s67
    %s87 = sphi 0, %s89
    %s90 = sphi 0, %s87
    %s91 = sphi 0, %s90
    %s107 = sphi 0, %s91
  $region4: #{_lambda_.2} parent=0 // loop_header_branch
    %12 = sbr.rel (%p10) target = $region8
  $region5: #{_lambda_.2} parent=0 // loop_body
    %s14 = ssub.s32 %s9, 1
    %s15 = ssub.s32 %s9, 2
    %s16 = sadd.s32 %s9, 1
    %s17 = ssub.s32 %s9, %s16
    %p18 = scmp.eq.s32.totalorder %s17, 0
    %s20 = sadd.s32 %s19, 1
    %s21 = scalar_select %p18, %s19, %s20
    %p24 = pneg %p18
    %p25 = scmp.eq.s32.totalorder %s9, 1
    %p26 = por %p24, %p25
    %p27 = scmp.ne.s32.totalorder %s19, %s22
    %p28 = scmp.eq.s32.totalorder %s9, 0
    %p29 = por %p27, %p28
    %p30 = scmp.ne.s32.totalorder %s19, %s22
    %p31 = scmp.eq.s32.totalorder %s14, 1
    %p32 = por %p30, %p31
    %p33 = scmp.ne.s32.totalorder %s22, %s23
    %p34 = scmp.eq.s32.totalorder %s14, 0
    %p35 = por %p33, %p34
    %p36 = scmp.ne.s32.totalorder %s22, %s23
    %p37 = scmp.eq.s32.totalorder %s15, 1
    %p38 = por %p36, %p37
    %p40 = scmp.ne.s32.totalorder %s23, %s39
    %p41 = scmp.eq.s32.totalorder %s15, 0
    %p42 = por %p40, %p41
    %s44 = sadd.s32 %s43, 1
    %p47 = scmp.eq.s32.totalorder %s9, 1
    %p48 = scmp.ne.s32.totalorder %s43, %s45
    %p49 = scmp.eq.s32.totalorder %s9, 0
    %p50 = por %p48, %p49
    %p51 = scmp.ne.s32.totalorder %s43, %s45
    %p52 = scmp.eq.s32.totalorder %s14, 1
    %p53 = por %p51, %p52
    %p54 = scmp.ne.s32.totalorder %s45, %s46
    %p55 = scmp.eq.s32.totalorder %s14, 0
    %p56 = por %p54, %p55
    %p57 = scmp.ne.s32.totalorder %s45, %s46
    %p58 = scmp.eq.s32.totalorder %s15, 1
    %p59 = por %p57, %p58
    %p61 = scmp.ne.s32.totalorder %s46, %s60
    %p62 = scmp.eq.s32.totalorder %s15, 0
    %p63 = por %p61, %p62
    %s65 = sadd.s32 %s64, 1
    %p68 = scmp.eq.s32.totalorder %s9, 1
    %p69 = scmp.ne.s32.totalorder %s64, %s66
    %p70 = scmp.eq.s32.totalorder %s9, 0
    %p71 = por %p69, %p70
    %p72 = scmp.ne.s32.totalorder %s64, %s66
    %p73 = scmp.eq.s32.totalorder %s14, 1
    %p74 = por %p72, %p73
    %p75 = scmp.ne.s32.totalorder %s66, %s67
    %p76 = scmp.eq.s32.totalorder %s14, 0
    %p77 = por %p75, %p76
    %p78 = scmp.ne.s32.totalorder %s66, %s67
    %p79 = scmp.eq.s32.totalorder %s15, 1
    %p80 = por %p78, %p79
    %p82 = scmp.ne.s32.totalorder %s67, %s81
    %p83 = scmp.eq.s32.totalorder %s15, 0
    %p84 = por %p82, %p83
    %s85 = ssub.s32 %s9, %s16
    %p86 = scmp.eq.s32.totalorder %s85, 0
    %s88 = sadd.s32 %s87, 1
    %s89 = scalar_select %p86, %s87, %s88
    %p92 = pneg %p86
    %p93 = scmp.eq.s32.totalorder %s9, 1
    %p94 = por %p92, %p93
    %p95 = scmp.ne.s32.totalorder %s87, %s90
    %p96 = scmp.eq.s32.totalorder %s9, 0
    %p97 = por %p95, %p96
    %p98 = scmp.ne.s32.totalorder %s87, %s90
    %p99 = scmp.eq.s32.totalorder %s14, 1
    %p100 = por %p98, %p99
    %p101 = scmp.ne.s32.totalorder %s90, %s91
    %p102 = scmp.eq.s32.totalorder %s14, 0
    %p103 = por %p101, %p102
    %p104 = scmp.ne.s32.totalorder %s90, %s91
    %p105 = scmp.eq.s32.totalorder %s15, 1
    %p106 = por %p104, %p105
    %p108 = scmp.ne.s32.totalorder %s91, %s107
    %p109 = scmp.eq.s32.totalorder %s15, 0
    %p110 = por %p108, %p109
    %p111 = scmp.le.s32.totalorder 1, %s9
    %p112 = scmp.lt.s32.totalorder %s9, 3
    %p113 = pnand %p111, %p112
    %p114 = pneg %p113
    // Predicated region
    $region9: #{_lambda_.2} parent=5 // pred_check
      _
    $region10: #{_lambda_.2} parent=5 // pred_check_branch
      %116 = sbr.rel (%p113) target = $region12
    $region11: #{_lambda_.2} parent=5 // pred_region
      %s117 = ssub.s32 %s9, 1
      // Predicated region
      $region13: #{_lambda_.2} parent=11 // pred_check
        %p118 = pneg %p56
      $region14: #{_lambda_.2} parent=11 // pred_check_branch
        %120 = sbr.rel (%p118) target = $region16
      $region15: #{_lambda_.2} parent=11 // pred_region
        _
      $region16: #{_lambda_.2} parent=11 // pred_fallthru
        _
      // Predicated region
      $region17: #{_lambda_.2} parent=11 // pred_check
        %p121 = pneg %p77
      $region18: #{_lambda_.2} parent=11 // pred_check_branch
        %123 = sbr.rel (%p121) target = $region20
      $region19: #{_lambda_.2} parent=11 // pred_region
        _
      $region20: #{_lambda_.2} parent=11 // pred_fallthru
        _
    $region12: #{_lambda_.2} parent=5 // pred_fallthru
      _
    %p124 = scmp.lt.s32.totalorder %s9, 2
    // Predicated region
    $region21: #{_lambda_.2} parent=5 // pred_check
      %p125 = pneg %p124
    $region22: #{_lambda_.2} parent=5 // pred_check_branch
      %127 = sbr.rel (%p125) target = $region24
    $region23: #{_lambda_.2} parent=5 // pred_region
      // Predicated region
      $region25: #{_lambda_.2} parent=23 // pred_check
        %p128 = pneg %p29
      $region26: #{_lambda_.2} parent=23 // pred_check_branch
        %130 = sbr.rel (%p128) target = $region28
      $region27: #{_lambda_.2} parent=23 // pred_region
        %s131 = smul.u32 32, %s9
        %p132 = scmp.lt.s32.totalorder %s131, 63
        %s133 = scalar_select %p132, %s131, 63
        %s134 = smul.addr %s133, 4
        %s135 = scalar_lea.vmem %s0, %s134
        %s136 = smul.u32 32, %s9
      $region28: #{_lambda_.2} parent=23 // pred_fallthru
        _
    $region24: #{_lambda_.2} parent=5 // pred_fallthru
      _
    %p137 = scmp.le.s32.totalorder 1, %s9
    %p138 = scmp.lt.s32.totalorder %s9, 3
    %p139 = pnand %p137, %p138
    %p140 = pneg %p139
    // Predicated region
    $region29: #{_lambda_.2} parent=5 // pred_check
      _
    $region30: #{_lambda_.2} parent=5 // pred_check_branch
      %142 = sbr.rel (%p139) target = $region32
    $region31: #{_lambda_.2} parent=5 // pred_region
      %s143 = ssub.s32 %s9, 1
      %s144 = smul.u32 32, %s14
      %p145 = scmp.lt.s32.totalorder %s144, 63
      %s146 = scalar_select %p145, %s144, 63
      %s147 = smul.addr %s146, 4
      %s148 = scalar_lea.vmem %s0, %s147
      %p149 = pneg %p35
      %p150 = pneg %p32
      %p151 = pneg %p56
      %p152 = pneg %p53
      %p153 = pneg %p77
      %p154 = pneg %p74
      %p155 = pneg %p103
      %p156 = pneg %p100
      %s157 = smul.u32 32, %s14
      %p158 = scmp.lt.s32.totalorder %s157, 63
      %s159 = scalar_select %p158, %s157, 63
      %s160 = smul.addr %s159, 4
      %s161 = scalar_lea.vmem %s3, %s160
      %s162 = smul.u32 32, %s14
      %p163 = scmp.lt.s32.totalorder %s162, 63
      %s164 = scalar_select %p163, %s162, 63
      %s165 = smul.addr %s164, 4
      %s166 = scalar_lea.vmem %s0, %s165
      %s167 = smul.u32 32, %s14
      %s168 = smul.u32 32, %s14
      %p169 = scmp.lt.s32.totalorder %s168, 63
      %s170 = scalar_select %p169, %s168, 63
      %s171 = smul.addr %s170, 4
      %s172 = scalar_lea.vmem %s3, %s171
      %s173 = smul.u32 32, %s14
      %v175 = vld [vmem:[%s166] sm:$0xf]
      %v176 = vld [vmem:[%s166 + $0x4] sm:$0xf]
      %v177 = vld [vmem:[%s166 + $0x8] sm:$0xf]
      %v178 = vld [vmem:[%s166 + $0xc] sm:$0xf]
      %v179 = vld [vmem:[%s166 + $0x10] sm:$0xf]
      %v180 = vld [vmem:[%s166 + $0x14] sm:$0xf]
      %v181 = vld [vmem:[%s166 + $0x18] sm:$0xf]
      %v182 = vld [vmem:[%s166 + $0x1c] sm:$0xf]
      %v183 = vld [vmem:[%s166 + $0x20] sm:$0xf]
      %v184 = vld [vmem:[%s166 + $0x24] sm:$0xf]
      %v185 = vld [vmem:[%s166 + $0x28] sm:$0xf]
      %v186 = vld [vmem:[%s166 + $0x2c] sm:$0xf]
      %v187 = vld [vmem:[%s166 + $0x30] sm:$0xf]
      %v188 = vld [vmem:[%s166 + $0x34] sm:$0xf]
      %v189 = vld [vmem:[%s166 + $0x38] sm:$0xf]
      %v190 = vld [vmem:[%s166 + $0x3c] sm:$0xf]
      %v191 = vld [vmem:[%s166 + $0x40] sm:$0xf]
      %v192 = vld [vmem:[%s166 + $0x44] sm:$0xf]
      %v193 = vld [vmem:[%s166 + $0x48] sm:$0xf]
      %v194 = vld [vmem:[%s166 + $0x4c] sm:$0xf]
      %v195 = vld [vmem:[%s166 + $0x50] sm:$0xf]
      %v196 = vld [vmem:[%s166 + $0x54] sm:$0xf]
      %v197 = vld [vmem:[%s166 + $0x58] sm:$0xf]
      %v198 = vld [vmem:[%s166 + $0x5c] sm:$0xf]
      %v199 = vld [vmem:[%s166 + $0x60] sm:$0xf]
      %v200 = vld [vmem:[%s166 + $0x64] sm:$0xf]
      %v201 = vld [vmem:[%s166 + $0x68] sm:$0xf]
      %v202 = vld [vmem:[%s166 + $0x6c] sm:$0xf]
      %v203 = vld [vmem:[%s166 + $0x70] sm:$0xf]
      %v204 = vld [vmem:[%s166 + $0x74] sm:$0xf]
      %v205 = vld [vmem:[%s166 + $0x78] sm:$0xf]
      %v206 = vld [vmem:[%s166 + $0x7c] sm:$0xf]
      %v207 = vld [vmem:[%s1] sm:$0xf]
      %v208 = vld [vmem:[%s1 + $0x4] sm:$0xf]
      %v209 = vld [vmem:[%s1 + $0x8] sm:$0xf]
      %v210 = vld [vmem:[%s1 + $0xc] sm:$0xf]
      %v211 = vld [vmem:[%s1 + $0x10] sm:$0xf]
      %v212 = vld [vmem:[%s1 + $0x14] sm:$0xf]
      %v213 = vld [vmem:[%s1 + $0x18] sm:$0xf]
      %v214 = vld [vmem:[%s1 + $0x1c] sm:$0xf]
      %v215 = vld [vmem:[%s1 + $0x20] sm:$0xf]
      %v216 = vld [vmem:[%s1 + $0x24] sm:$0xf]
      %v217 = vld [vmem:[%s1 + $0x28] sm:$0xf]
      %v218 = vld [vmem:[%s1 + $0x2c] sm:$0xf]
      %v219 = vld [vmem:[%s1 + $0x30] sm:$0xf]
      %v220 = vld [vmem:[%s1 + $0x34] sm:$0xf]
      %v221 = vld [vmem:[%s1 + $0x38] sm:$0xf]
      %v222 = vld [vmem:[%s1 + $0x3c] sm:$0xf]
      %v223 = vld [vmem:[%s2] sm:$0x1]
      %v225 = vlaneseq
      %v226 = vshrl.u32 %v225, 7
      %v227 = vsub.s32 0, %v226
      %v228 = vrot.slane %v223, %v227
      %v262 = vunpack.c.l.b16 %v175
      %v263 = vunpack.c.l.b16 %v176
      %v264 = vunpack.c.l.b16 %v177
      %v265 = vunpack.c.l.b16 %v178
      %v266 = vunpack.c.l.b16 %v179
      %v267 = vunpack.c.l.b16 %v180
      %v268 = vunpack.c.l.b16 %v181
      %v269 = vunpack.c.l.b16 %v182
      %v270 = vunpack.c.l.b16 %v183
      %v271 = vunpack.c.l.b16 %v184
      %v272 = vunpack.c.l.b16 %v185
      %v273 = vunpack.c.l.b16 %v186
      %v274 = vunpack.c.l.b16 %v187
      %v275 = vunpack.c.l.b16 %v188
      %v276 = vunpack.c.l.b16 %v189
      %v277 = vunpack.c.l.b16 %v190
      %v278 = vunpack.c.l.b16 %v191
      %v279 = vunpack.c.l.b16 %v192
      %v280 = vunpack.c.l.b16 %v193
      %v281 = vunpack.c.l.b16 %v194
      %v282 = vunpack.c.l.b16 %v195
      %v283 = vunpack.c.l.b16 %v196
      %v284 = vunpack.c.l.b16 %v197
      %v285 = vunpack.c.l.b16 %v198
      %v286 = vunpack.c.l.b16 %v199
      %v287 = vunpack.c.l.b16 %v200
      %v288 = vunpack.c.l.b16 %v201
      %v289 = vunpack.c.l.b16 %v202
      %v290 = vunpack.c.l.b16 %v203
      %v291 = vunpack.c.l.b16 %v204
      %v292 = vunpack.c.l.b16 %v205
      %v293 = vunpack.c.l.b16 %v206
      %v294 = vpack.c.b16 %v263, %v262
      %v295 = vpack.c.b16 %v265, %v264
      %v296 = vpack.c.b16 %v267, %v266
      %v297 = vpack.c.b16 %v269, %v268
      %v298 = vpack.c.b16 %v271, %v270
      %v299 = vpack.c.b16 %v273, %v272
      %v300 = vpack.c.b16 %v275, %v274
      %v301 = vpack.c.b16 %v277, %v276
      %v302 = vpack.c.b16 %v279, %v278
      %v303 = vpack.c.b16 %v281, %v280
      %v304 = vpack.c.b16 %v283, %v282
      %v305 = vpack.c.b16 %v285, %v284
      %v306 = vpack.c.b16 %v287, %v286
      %v307 = vpack.c.b16 %v289, %v288
      %v308 = vpack.c.b16 %v291, %v290
      %v309 = vpack.c.b16 %v293, %v292
      %v342 = vunpack.c.l.b16 %v207
      %v343 = vunpack.c.l.b16 %v208
      %v344 = vunpack.c.l.b16 %v209
      %v345 = vunpack.c.l.b16 %v210
      %v346 = vunpack.c.l.b16 %v211
      %v347 = vunpack.c.l.b16 %v212
      %v348 = vunpack.c.l.b16 %v213
      %v349 = vunpack.c.l.b16 %v214
      %v350 = vunpack.c.l.b16 %v215
      %v351 = vunpack.c.l.b16 %v216
      %v352 = vunpack.c.l.b16 %v217
      %v353 = vunpack.c.l.b16 %v218
      %v354 = vunpack.c.l.b16 %v219
      %v355 = vunpack.c.l.b16 %v220
      %v356 = vunpack.c.l.b16 %v221
      %v357 = vunpack.c.l.b16 %v222
      %v358 = vpack.c.b16 %v343, %v342
      %v359 = vpack.c.b16 %v345, %v344
      %v360 = vpack.c.b16 %v347, %v346
      %v361 = vpack.c.b16 %v349, %v348
      %v362 = vpack.c.b16 %v351, %v350
      %v363 = vpack.c.b16 %v353, %v352
      %v364 = vpack.c.b16 %v355, %v354
      %v365 = vpack.c.b16 %v357, %v356
      %374 = vmatprep.subr.bf16.mxu0 0
      %375 = vmatpush1.bf16.msra.mxu0 %v365
      %376 = vmatprep.subr.bf16.mxu0 0
      %377 = vmatpush1.bf16.msra.mxu0 %v364
      %378 = vmatprep.subr.bf16.mxu0 0
      %379 = vmatpush1.bf16.msra.mxu0 %v363
      %380 = vmatprep.subr.bf16.mxu0 0
      %381 = vmatpush1.bf16.msra.mxu0 %v362
      %382 = vmatprep.subr.bf16.mxu0 0
      %383 = vmatpush1.bf16.msra.mxu0 %v361
      %384 = vmatprep.subr.bf16.mxu0 0
      %385 = vmatpush1.bf16.msra.mxu0 %v360
      %386 = vmatprep.subr.bf16.mxu0 0
      %387 = vmatpush1.bf16.msra.mxu0 %v359
      %388 = vmatprep.subr.bf16.mxu0 0
      %389 = vmatpush1.bf16.msra.mxu0 %v358
      %390 = vmatprep.subr.bf16.mxu0 0
      %391 = vmatpush2.bf16.msra.mxu0 0
      %392 = vmatprep.subr.bf16.mxu0 0
      %393 = vmatpush2.bf16.msra.mxu0 0
      %394 = vmatprep.subr.bf16.mxu0 0
      %395 = vmatpush2.bf16.msra.mxu0 0
      %396 = vmatprep.subr.bf16.mxu0 0
      %397 = vmatpush2.bf16.msra.mxu0 0
      %398 = vmatprep.subr.bf16.mxu0 0
      %399 = vmatpush2.bf16.msra.mxu0 0
      %400 = vmatprep.subr.bf16.mxu0 0
      %401 = vmatpush2.bf16.msra.mxu0 0
      %402 = vmatprep.subr.bf16.mxu0 0
      %403 = vmatpush2.bf16.msra.mxu0 0
      %404 = vmatprep.subr.bf16.mxu0 0
      %405 = vmatpush2.bf16.msra.mxu0 0
      %406 = vmatprep.mubr.bf16.mxu0 0
      %407 = vmatmul.mubr.bf16.gmra.mxu0 %v294
      %v408 = vpop.f32.mrf.mxu0
      %v409 = vadd.f32 %v228, %v408
      %v410 = vpop.f32.mrf.mxu0
      %v411 = vpop.f32.mrf.mxu0
      %v412 = vadd.f32 %v228, %v411
      %v413 = vpop.f32.mrf.mxu0
      %414 = vmatprep.mubr.bf16.mxu0 0
      %415 = vmatmul.mubr.bf16.gmra.mxu0 %v295
      %v416 = vpop.f32.mrf.mxu0
      %v417 = vadd.f32 %v228, %v416
      %v418 = vpop.f32.mrf.mxu0
      %v419 = vpop.f32.mrf.mxu0
      %v420 = vadd.f32 %v228, %v419
      %v421 = vpop.f32.mrf.mxu0
      %422 = vmatprep.mubr.bf16.mxu0 0
      %423 = vmatmul.mubr.bf16.gmra.mxu0 %v296
      %v424 = vpop.f32.mrf.mxu0
      %v425 = vadd.f32 %v228, %v424
      %v426 = vpop.f32.mrf.mxu0
      %v427 = vpop.f32.mrf.mxu0
      %v428 = vadd.f32 %v228, %v427
      %v429 = vpop.f32.mrf.mxu0
      %430 = vmatprep.mubr.bf16.mxu0 0
      %431 = vmatmul.mubr.bf16.gmra.mxu0 %v297
      %v432 = vpop.f32.mrf.mxu0
      %v433 = vadd.f32 %v228, %v432
      %v434 = vpop.f32.mrf.mxu0
      %v435 = vpop.f32.mrf.mxu0
      %v436 = vadd.f32 %v228, %v435
      %v437 = vpop.f32.mrf.mxu0
      %438 = vmatprep.mubr.bf16.mxu0 0
      %439 = vmatmul.mubr.bf16.gmra.mxu0 %v298
      %v440 = vpop.f32.mrf.mxu0
      %v441 = vadd.f32 %v228, %v440
      %v442 = vpop.f32.mrf.mxu0
      %v443 = vpop.f32.mrf.mxu0
      %v444 = vadd.f32 %v228, %v443
      %v445 = vpop.f32.mrf.mxu0
      %446 = vmatprep.mubr.bf16.mxu0 0
      %447 = vmatmul.mubr.bf16.gmra.mxu0 %v299
      %v448 = vpop.f32.mrf.mxu0
      %v449 = vadd.f32 %v228, %v448
      %v450 = vpop.f32.mrf.mxu0
      %v451 = vpop.f32.mrf.mxu0
      %v452 = vadd.f32 %v228, %v451
      %v453 = vpop.f32.mrf.mxu0
      %454 = vmatprep.mubr.bf16.mxu0 0
      %455 = vmatmul.mubr.bf16.gmra.mxu0 %v300
      %v456 = vpop.f32.mrf.mxu0
      %v457 = vadd.f32 %v228, %v456
      %v458 = vpop.f32.mrf.mxu0
      %v459 = vpop.f32.mrf.mxu0
      %v460 = vadd.f32 %v228, %v459
      %v461 = vpop.f32.mrf.mxu0
      %462 = vmatprep.mubr.bf16.mxu0 0
      %463 = vmatmul.mubr.bf16.gmra.mxu0 %v301
      %v464 = vpop.f32.mrf.mxu0
      %v465 = vadd.f32 %v228, %v464
      %v466 = vpop.f32.mrf.mxu0
      %v467 = vpop.f32.mrf.mxu0
      %v468 = vadd.f32 %v228, %v467
      %v469 = vpop.f32.mrf.mxu0
      %470 = vmatprep.mubr.bf16.mxu0 0
      %471 = vmatmul.mubr.bf16.gmra.mxu0 %v302
      %v472 = vpop.f32.mrf.mxu0
      %v473 = vadd.f32 %v228, %v472
      %v474 = vpop.f32.mrf.mxu0
      %v475 = vpop.f32.mrf.mxu0
      %v476 = vadd.f32 %v228, %v475
      %v477 = vpop.f32.mrf.mxu0
      %478 = vmatprep.mubr.bf16.mxu0 0
      %479 = vmatmul.mubr.bf16.gmra.mxu0 %v303
      %v480 = vpop.f32.mrf.mxu0
      %v481 = vadd.f32 %v228, %v480
      %v482 = vpop.f32.mrf.mxu0
      %v483 = vpop.f32.mrf.mxu0
      %v484 = vadd.f32 %v228, %v483
      %v485 = vpop.f32.mrf.mxu0
      %486 = vmatprep.mubr.bf16.mxu0 0
      %487 = vmatmul.mubr.bf16.gmra.mxu0 %v304
      %v488 = vpop.f32.mrf.mxu0
      %v489 = vadd.f32 %v228, %v488
      %v490 = vpop.f32.mrf.mxu0
      %v491 = vpop.f32.mrf.mxu0
      %v492 = vadd.f32 %v228, %v491
      %v493 = vpop.f32.mrf.mxu0
      %494 = vmatprep.mubr.bf16.mxu0 0
      %495 = vmatmul.mubr.bf16.gmra.mxu0 %v305
      %v496 = vpop.f32.mrf.mxu0
      %v497 = vadd.f32 %v228, %v496
      %v498 = vpop.f32.mrf.mxu0
      %v499 = vpop.f32.mrf.mxu0
      %v500 = vadd.f32 %v228, %v499
      %v501 = vpop.f32.mrf.mxu0
      %502 = vmatprep.mubr.bf16.mxu0 0
      %503 = vmatmul.mubr.bf16.gmra.mxu0 %v306
      %v504 = vpop.f32.mrf.mxu0
      %v505 = vadd.f32 %v228, %v504
      %v506 = vpop.f32.mrf.mxu0
      %v507 = vpop.f32.mrf.mxu0
      %v508 = vadd.f32 %v228, %v507
      %v509 = vpop.f32.mrf.mxu0
      %510 = vmatprep.mubr.bf16.mxu0 0
      %511 = vmatmul.mubr.bf16.gmra.mxu0 %v307
      %v512 = vpop.f32.mrf.mxu0
      %v513 = vadd.f32 %v228, %v512
      %v514 = vpop.f32.mrf.mxu0
      %v515 = vpop.f32.mrf.mxu0
      %v516 = vadd.f32 %v228, %v515
      %v517 = vpop.f32.mrf.mxu0
      %518 = vmatprep.mubr.bf16.mxu0 0
      %519 = vmatmul.mubr.bf16.gmra.mxu0 %v308
      %v520 = vpop.f32.mrf.mxu0
      %v521 = vadd.f32 %v228, %v520
      %v522 = vpop.f32.mrf.mxu0
      %v523 = vpop.f32.mrf.mxu0
      %v524 = vadd.f32 %v228, %v523
      %v525 = vpop.f32.mrf.mxu0
      %526 = vmatprep.mubr.bf16.mxu0 0
      %527 = vmatmul.mubr.bf16.gmra.mxu0 %v309
      %v528 = vpop.f32.mrf.mxu0
      %v529 = vadd.f32 %v228, %v528
      %v530 = vpop.f32.mrf.mxu0
      %v531 = vpop.f32.mrf.mxu0
      %v532 = vadd.f32 %v228, %v531
      %v533 = vpop.f32.mrf.mxu0
      %534 = vdwg.mxu0
      %v535 = vmax.f32 %v409, 0.0
      %v536 = vmax.f32 %v412, 0.0
      %v537 = vmax.f32 %v417, 0.0
      %v538 = vmax.f32 %v420, 0.0
      %v539 = vmax.f32 %v425, 0.0
      %v540 = vmax.f32 %v428, 0.0
      %v541 = vmax.f32 %v433, 0.0
      %v542 = vmax.f32 %v436, 0.0
      %v543 = vmax.f32 %v441, 0.0
      %v544 = vmax.f32 %v444, 0.0
      %v545 = vmax.f32 %v449, 0.0
      %v546 = vmax.f32 %v452, 0.0
      %v547 = vmax.f32 %v457, 0.0
      %v548 = vmax.f32 %v460, 0.0
      %v549 = vmax.f32 %v465, 0.0
      %v550 = vmax.f32 %v468, 0.0
      %v551 = vmax.f32 %v473, 0.0
      %v552 = vmax.f32 %v476, 0.0
      %v553 = vmax.f32 %v481, 0.0
      %v554 = vmax.f32 %v484, 0.0
      %v555 = vmax.f32 %v489, 0.0
      %v556 = vmax.f32 %v492, 0.0
      %v557 = vmax.f32 %v497, 0.0
      %v558 = vmax.f32 %v500, 0.0
      %v559 = vmax.f32 %v505, 0.0
      %v560 = vmax.f32 %v508, 0.0
      %v561 = vmax.f32 %v513, 0.0
      %v562 = vmax.f32 %v516, 0.0
      %v563 = vmax.f32 %v521, 0.0
      %v564 = vmax.f32 %v524, 0.0
      %v565 = vmax.f32 %v529, 0.0
      %v566 = vmax.f32 %v532, 0.0
      %v567 = vpack.c.bf16 %v536, %v535
      %v568 = vpack.c.bf16 %v538, %v537
      %v569 = vpack.c.bf16 %v540, %v539
      %v570 = vpack.c.bf16 %v542, %v541
      %v571 = vpack.c.bf16 %v544, %v543
      %v572 = vpack.c.bf16 %v546, %v545
      %v573 = vpack.c.bf16 %v548, %v547
      %v574 = vpack.c.bf16 %v550, %v549
      %v575 = vpack.c.bf16 %v552, %v551
      %v576 = vpack.c.bf16 %v554, %v553
      %v577 = vpack.c.bf16 %v556, %v555
      %v578 = vpack.c.bf16 %v558, %v557
      %v579 = vpack.c.bf16 %v560, %v559
      %v580 = vpack.c.bf16 %v562, %v561
      %v581 = vpack.c.bf16 %v564, %v563
      %v582 = vpack.c.bf16 %v566, %v565
      %v599 = vunpack.c.l.b16 %v567
      %v600 = vunpack.c.h.b16 %v567
      %v601 = vunpack.c.l.b16 %v568
      %v602 = vunpack.c.h.b16 %v568
      %v603 = vunpack.c.l.b16 %v569
      %v604 = vunpack.c.h.b16 %v569
      %v605 = vunpack.c.l.b16 %v570
      %v606 = vunpack.c.h.b16 %v570
      %v607 = vunpack.c.l.b16 %v571
      %v608 = vunpack.c.h.b16 %v571
      %v609 = vunpack.c.l.b16 %v572
      %v610 = vunpack.c.h.b16 %v572
      %v611 = vunpack.c.l.b16 %v573
      %v612 = vunpack.c.h.b16 %v573
      %v613 = vunpack.c.l.b16 %v574
      %v614 = vunpack.c.h.b16 %v574
      %v615 = vunpack.c.l.b16 %v575
      %v616 = vunpack.c.h.b16 %v575
      %v617 = vunpack.c.l.b16 %v576
      %v618 = vunpack.c.h.b16 %v576
      %v619 = vunpack.c.l.b16 %v577
      %v620 = vunpack.c.h.b16 %v577
      %v621 = vunpack.c.l.b16 %v578
      %v622 = vunpack.c.h.b16 %v578
      %v623 = vunpack.c.l.b16 %v579
      %v624 = vunpack.c.h.b16 %v579
      %v625 = vunpack.c.l.b16 %v580
      %v626 = vunpack.c.h.b16 %v580
      %v627 = vunpack.c.l.b16 %v581
      %v628 = vunpack.c.h.b16 %v581
      %v629 = vunpack.c.l.b16 %v582
      %v630 = vunpack.c.h.b16 %v582
      %v631 = vpack.c.b16 %v599, %v599
      %v632 = vpack.c.b16 %v600, %v600
      %v633 = vpack.c.b16 %v601, %v601
      %v634 = vpack.c.b16 %v602, %v602
      %v635 = vpack.c.b16 %v603, %v603
      %v636 = vpack.c.b16 %v604, %v604
      %v637 = vpack.c.b16 %v605, %v605
      %v638 = vpack.c.b16 %v606, %v606
      %v639 = vpack.c.b16 %v607, %v607
      %v640 = vpack.c.b16 %v608, %v608
      %v641 = vpack.c.b16 %v609, %v609
      %v642 = vpack.c.b16 %v610, %v610
      %v643 = vpack.c.b16 %v611, %v611
      %v644 = vpack.c.b16 %v612, %v612
      %v645 = vpack.c.b16 %v613, %v613
      %v646 = vpack.c.b16 %v614, %v614
      %v647 = vpack.c.b16 %v615, %v615
      %v648 = vpack.c.b16 %v616, %v616
      %v649 = vpack.c.b16 %v617, %v617
      %v650 = vpack.c.b16 %v618, %v618
      %v651 = vpack.c.b16 %v619, %v619
      %v652 = vpack.c.b16 %v620, %v620
      %v653 = vpack.c.b16 %v621, %v621
      %v654 = vpack.c.b16 %v622, %v622
      %v655 = vpack.c.b16 %v623, %v623
      %v656 = vpack.c.b16 %v624, %v624
      %v657 = vpack.c.b16 %v625, %v625
      %v658 = vpack.c.b16 %v626, %v626
      %v659 = vpack.c.b16 %v627, %v627
      %v660 = vpack.c.b16 %v628, %v628
      %v661 = vpack.c.b16 %v629, %v629
      %v662 = vpack.c.b16 %v630, %v630
      %695 = vst [vmem:[%s172] sm:$0xf] %v631
      %696 = vst [vmem:[%s172 + $0x4] sm:$0xf] %v632
      %697 = vst [vmem:[%s172 + $0x8] sm:$0xf] %v633
      %698 = vst [vmem:[%s172 + $0xc] sm:$0xf] %v634
      %699 = vst [vmem:[%s172 + $0x10] sm:$0xf] %v635
      %700 = vst [vmem:[%s172 + $0x14] sm:$0xf] %v636
      %701 = vst [vmem:[%s172 + $0x18] sm:$0xf] %v637
      %702 = vst [vmem:[%s172 + $0x1c] sm:$0xf] %v638
      %703 = vst [vmem:[%s172 + $0x20] sm:$0xf] %v639
      %704 = vst [vmem:[%s172 + $0x24] sm:$0xf] %v640
      %705 = vst [vmem:[%s172 + $0x28] sm:$0xf] %v641
      %706 = vst [vmem:[%s172 + $0x2c] sm:$0xf] %v642
      %707 = vst [vmem:[%s172 + $0x30] sm:$0xf] %v643
      %708 = vst [vmem:[%s172 + $0x34] sm:$0xf] %v644
      %709 = vst [vmem:[%s172 + $0x38] sm:$0xf] %v645
      %710 = vst [vmem:[%s172 + $0x3c] sm:$0xf] %v646
      %711 = vst [vmem:[%s172 + $0x40] sm:$0xf] %v647
      %712 = vst [vmem:[%s172 + $0x44] sm:$0xf] %v648
      %713 = vst [vmem:[%s172 + $0x48] sm:$0xf] %v649
      %714 = vst [vmem:[%s172 + $0x4c] sm:$0xf] %v650
      %715 = vst [vmem:[%s172 + $0x50] sm:$0xf] %v651
      %716 = vst [vmem:[%s172 + $0x54] sm:$0xf] %v652
      %717 = vst [vmem:[%s172 + $0x58] sm:$0xf] %v653
      %718 = vst [vmem:[%s172 + $0x5c] sm:$0xf] %v654
      %719 = vst [vmem:[%s172 + $0x60] sm:$0xf] %v655
      %720 = vst [vmem:[%s172 + $0x64] sm:$0xf] %v656
      %721 = vst [vmem:[%s172 + $0x68] sm:$0xf] %v657
      %722 = vst [vmem:[%s172 + $0x6c] sm:$0xf] %v658
      %723 = vst [vmem:[%s172 + $0x70] sm:$0xf] %v659
      %724 = vst [vmem:[%s172 + $0x74] sm:$0xf] %v660
      %725 = vst [vmem:[%s172 + $0x78] sm:$0xf] %v661
      %726 = vst [vmem:[%s172 + $0x7c] sm:$0xf] %v662
      %s727 = smul.u32 32, %s14
      %p728 = scmp.lt.s32.totalorder %s727, 63
      %s729 = scalar_select %p728, %s727, 63
      %s730 = smul.addr %s729, 4
      %s731 = scalar_lea.vmem %s3, %s730
      // Predicated region
      $region33: #{_lambda_.2} parent=31 // pred_check
        %p732 = pneg %p100
      $region34: #{_lambda_.2} parent=31 // pred_check_branch
        %734 = sbr.rel (%p732) target = $region36
      $region35: #{_lambda_.2} parent=31 // pred_region
        %s735 = smul.u32 32, %s14
      $region36: #{_lambda_.2} parent=31 // pred_fallthru
        _
    $region32: #{_lambda_.2} parent=5 // pred_fallthru
      _
    %p736 = scmp.le.s32.totalorder 2, %s9
    // Predicated region
    $region37: #{_lambda_.2} parent=5 // pred_check
      %p737 = pneg %p736
    $region38: #{_lambda_.2} parent=5 // pred_check_branch
      %739 = sbr.rel (%p737) target = $region40
    $region39: #{_lambda_.2} parent=5 // pred_region
      %s740 = ssub.s32 %s9, 2
      // Predicated region
      $region41: #{_lambda_.2} parent=39 // pred_check
        %p741 = pneg %p106
      $region42: #{_lambda_.2} parent=39 // pred_check_branch
        %743 = sbr.rel (%p741) target = $region44
      $region43: #{_lambda_.2} parent=39 // pred_region
        %s744 = smul.u32 32, %s15
        %p745 = scmp.lt.s32.totalorder %s744, 63
        %s746 = scalar_select %p745, %s744, 63
        %s747 = smul.addr %s746, 4
        %s748 = scalar_lea.vmem %s3, %s747
      $region44: #{_lambda_.2} parent=39 // pred_fallthru
        _
    $region40: #{_lambda_.2} parent=5 // pred_fallthru
      _
  $region6: #{_lambda_.2} parent=0 // loop_footer
    %s13 = sadd.s32 1, %s9
  $region7: #{_lambda_.2} parent=0 // loop_footer_branch
    %8 = sbr.rel target = $region3
  $region8: #{_lambda_.2} parent=0 // loop_exit
    _

// kernel: _lambda_.3
$region0: #{_lambda_.3}
  #allocation0 [shape = 'u32[]', space=smem, size = 0x4, offset = 0x4, fixed_abs, tag = 'smem constant byte address 0x4 - core index']
  #allocation1 [shape = 'u32[144,128]{1,0:T(1,128)}', space=vmem, size = 0x12000, scoped, tag = 'internal scratch']
  %s0 = inlined_call_operand.vmem [shape: bf16[2,18,18,128], index: 0, kind: input, shape index: {}]
  %s1 = inlined_call_operand.vmem [shape: bf16[2,256,128], index: 1, kind: input, shape index: {}]
  %s2 = inlined_call_operand.vmem [shape: bf16[9,128,128], index: 2, kind: input, shape index: {}]
  %s3 = inlined_call_operand.vmem [shape: bf16[128,128], index: 3, kind: input, shape index: {}]
  %s4 = inlined_call_operand.vmem [shape: f32[1,128], index: 4, kind: input, shape index: {}]
  %s5 = inlined_call_operand.vmem [shape: f32[1,128], index: 5, kind: input, shape index: {}]
  %s6 = inlined_call_operand.vmem [shape: bf16[128,128], index: 6, kind: input, shape index: {}]
  %s7 = inlined_call_operand.vmem [shape: f32[1,128], index: 7, kind: input, shape index: {}]
  %s8 = inlined_call_operand.vmem [shape: f32[64,256], index: 8, kind: input, shape index: {}]
  %s9 = inlined_call_operand.vmem [shape: f32[2,64,128], index: 9, kind: output, shape index: {}]
  %s10 = sld [smem:[#allocation0]]
  $region69: #{_lambda_.3} parent=0
    _
  %s12 = ssub.s32 1, %s10
  %s13 = scalar_select 0, %s12, %s10
  loop: start=0, step=1, limit=4
  $region2: #{_lambda_.3} parent=0 // loop_pre_header
    _
  $region3: #{_lambda_.3} parent=0 // loop_header
    %s15 = sphi 0, %s19
    %p16 = scmp.ge.s32.totalorder %s15, 4
    %s25 = sphi 0, %s27
    %s28 = sphi 0, %s25
    %s29 = sphi 0, %s28
    %s45 = sphi 0, %s29
    %s51 = sphi 0, %s53
    %s54 = sphi 0, %s51
    %s55 = sphi 0, %s54
    %s71 = sphi 0, %s55
    %s75 = sphi 0, %s75
    %s77 = sphi 0, %s75
    %s78 = sphi 0, %s77
    %s92 = sphi 0, %s78
    %s96 = sphi 0, %s96
    %s98 = sphi 0, %s96
    %s99 = sphi 0, %s98
    %s113 = sphi 0, %s99
    %s117 = sphi 0, %s117
    %s119 = sphi 0, %s117
    %s120 = sphi 0, %s119
    %s134 = sphi 0, %s120
    %s138 = sphi 0, %s138
    %s140 = sphi 0, %s138
    %s141 = sphi 0, %s140
    %s155 = sphi 0, %s141
    %s159 = sphi 0, %s159
    %s161 = sphi 0, %s159
    %s162 = sphi 0, %s161
    %s176 = sphi 0, %s162
    %s180 = sphi 0, %s180
    %s182 = sphi 0, %s180
    %s183 = sphi 0, %s182
    %s197 = sphi 0, %s183
    %s201 = sphi 0, %s201
    %s203 = sphi 0, %s201
    %s204 = sphi 0, %s203
    %s218 = sphi 0, %s204
    %s224 = sphi 0, %s226
    %s227 = sphi 0, %s224
    %s228 = sphi 0, %s227
    %s244 = sphi 0, %s228
  $region4: #{_lambda_.3} parent=0 // loop_header_branch
    %18 = sbr.rel (%p16) target = $region8
  $region5: #{_lambda_.3} parent=0 // loop_body
    %s20 = ssub.s32 %s15, 1
    %s21 = ssub.s32 %s15, 2
    %s22 = sadd.s32 %s15, 1
    %s23 = ssub.s32 %s15, %s22
    %p24 = scmp.eq.s32.totalorder %s23, 0
    %s26 = sadd.s32 %s25, 1
    %s27 = scalar_select %p24, %s25, %s26
    %p30 = pneg %p24
    %p31 = scmp.eq.s32.totalorder %s15, 1
    %p32 = por %p30, %p31
    %p33 = scmp.ne.s32.totalorder %s25, %s28
    %p34 = scmp.eq.s32.totalorder %s15, 0
    %p35 = por %p33, %p34
    %p36 = scmp.ne.s32.totalorder %s25, %s28
    %p37 = scmp.eq.s32.totalorder %s20, 1
    %p38 = por %p36, %p37
    %p39 = scmp.ne.s32.totalorder %s28, %s29
    %p40 = scmp.eq.s32.totalorder %s20, 0
    %p41 = por %p39, %p40
    %p42 = scmp.ne.s32.totalorder %s28, %s29
    %p43 = scmp.eq.s32.totalorder %s21, 1
    %p44 = por %p42, %p43
    %p46 = scmp.ne.s32.totalorder %s29, %s45
    %p47 = scmp.eq.s32.totalorder %s21, 0
    %p48 = por %p46, %p47
    %s49 = ssub.s32 %s15, %s22
    %p50 = scmp.eq.s32.totalorder %s49, 0
    %s52 = sadd.s32 %s51, 1
    %s53 = scalar_select %p50, %s51, %s52
    %p56 = pneg %p50
    %p57 = scmp.eq.s32.totalorder %s15, 1
    %p58 = por %p56, %p57
    %p59 = scmp.ne.s32.totalorder %s51, %s54
    %p60 = scmp.eq.s32.totalorder %s15, 0
    %p61 = por %p59, %p60
    %p62 = scmp.ne.s32.totalorder %s51, %s54
    %p63 = scmp.eq.s32.totalorder %s20, 1
    %p64 = por %p62, %p63
    %p65 = scmp.ne.s32.totalorder %s54, %s55
    %p66 = scmp.eq.s32.totalorder %s20, 0
    %p67 = por %p65, %p66
    %p68 = scmp.ne.s32.totalorder %s54, %s55
    %p69 = scmp.eq.s32.totalorder %s21, 1
    %p70 = por %p68, %p69
    %p72 = scmp.ne.s32.totalorder %s55, %s71
    %p73 = scmp.eq.s32.totalorder %s21, 0
    %p74 = por %p72, %p73
    %s76 = sadd.s32 %s75, 1
    %p79 = scmp.eq.s32.totalorder %s15, 1
    %p80 = scmp.ne.s32.totalorder %s75, %s77
    %p81 = scmp.eq.s32.totalorder %s15, 0
    %p82 = por %p80, %p81
    %p83 = scmp.ne.s32.totalorder %s75, %s77
    %p84 = scmp.eq.s32.totalorder %s20, 1
    %p85 = por %p83, %p84
    %p86 = scmp.ne.s32.totalorder %s77, %s78
    %p87 = scmp.eq.s32.totalorder %s20, 0
    %p88 = por %p86, %p87
    %p89 = scmp.ne.s32.totalorder %s77, %s78
    %p90 = scmp.eq.s32.totalorder %s21, 1
    %p91 = por %p89, %p90
    %p93 = scmp.ne.s32.totalorder %s78, %s92
    %p94 = scmp.eq.s32.totalorder %s21, 0
    %p95 = por %p93, %p94
    %s97 = sadd.s32 %s96, 1
    %p100 = scmp.eq.s32.totalorder %s15, 1
    %p101 = scmp.ne.s32.totalorder %s96, %s98
    %p102 = scmp.eq.s32.totalorder %s15, 0
    %p103 = por %p101, %p102
    %p104 = scmp.ne.s32.totalorder %s96, %s98
    %p105 = scmp.eq.s32.totalorder %s20, 1
    %p106 = por %p104, %p105
    %p107 = scmp.ne.s32.totalorder %s98, %s99
    %p108 = scmp.eq.s32.totalorder %s20, 0
    %p109 = por %p107, %p108
    %p110 = scmp.ne.s32.totalorder %s98, %s99
    %p111 = scmp.eq.s32.totalorder %s21, 1
    %p112 = por %p110, %p111
    %p114 = scmp.ne.s32.totalorder %s99, %s113
    %p115 = scmp.eq.s32.totalorder %s21, 0
    %p116 = por %p114, %p115
    %s118 = sadd.s32 %s117, 1
    %p121 = scmp.eq.s32.totalorder %s15, 1
    %p122 = scmp.ne.s32.totalorder %s117, %s119
    %p123 = scmp.eq.s32.totalorder %s15, 0
    %p124 = por %p122, %p123
    %p125 = scmp.ne.s32.totalorder %s117, %s119
    %p126 = scmp.eq.s32.totalorder %s20, 1
    %p127 = por %p125, %p126
    %p128 = scmp.ne.s32.totalorder %s119, %s120
    %p129 = scmp.eq.s32.totalorder %s20, 0
    %p130 = por %p128, %p129
    %p131 = scmp.ne.s32.totalorder %s119, %s120
    %p132 = scmp.eq.s32.totalorder %s21, 1
    %p133 = por %p131, %p132
    %p135 = scmp.ne.s32.totalorder %s120, %s134
    %p136 = scmp.eq.s32.totalorder %s21, 0
    %p137 = por %p135, %p136
    %s139 = sadd.s32 %s138, 1
    %p142 = scmp.eq.s32.totalorder %s15, 1
    %p143 = scmp.ne.s32.totalorder %s138, %s140
    %p144 = scmp.eq.s32.totalorder %s15, 0
    %p145 = por %p143, %p144
    %p146 = scmp.ne.s32.totalorder %s138, %s140
    %p147 = scmp.eq.s32.totalorder %s20, 1
    %p148 = por %p146, %p147
    %p149 = scmp.ne.s32.totalorder %s140, %s141
    %p150 = scmp.eq.s32.totalorder %s20, 0
    %p151 = por %p149, %p150
    %p152 = scmp.ne.s32.totalorder %s140, %s141
    %p153 = scmp.eq.s32.totalorder %s21, 1
    %p154 = por %p152, %p153
    %p156 = scmp.ne.s32.totalorder %s141, %s155
    %p157 = scmp.eq.s32.totalorder %s21, 0
    %p158 = por %p156, %p157
    %s160 = sadd.s32 %s159, 1
    %p163 = scmp.eq.s32.totalorder %s15, 1
    %p164 = scmp.ne.s32.totalorder %s159, %s161
    %p165 = scmp.eq.s32.totalorder %s15, 0
    %p166 = por %p164, %p165
    %p167 = scmp.ne.s32.totalorder %s159, %s161
    %p168 = scmp.eq.s32.totalorder %s20, 1
    %p169 = por %p167, %p168
    %p170 = scmp.ne.s32.totalorder %s161, %s162
    %p171 = scmp.eq.s32.totalorder %s20, 0
    %p172 = por %p170, %p171
    %p173 = scmp.ne.s32.totalorder %s161, %s162
    %p174 = scmp.eq.s32.totalorder %s21, 1
    %p175 = por %p173, %p174
    %p177 = scmp.ne.s32.totalorder %s162, %s176
    %p178 = scmp.eq.s32.totalorder %s21, 0
    %p179 = por %p177, %p178
    %s181 = sadd.s32 %s180, 1
    %p184 = scmp.eq.s32.totalorder %s15, 1
    %p185 = scmp.ne.s32.totalorder %s180, %s182
    %p186 = scmp.eq.s32.totalorder %s15, 0
    %p187 = por %p185, %p186
    %p188 = scmp.ne.s32.totalorder %s180, %s182
    %p189 = scmp.eq.s32.totalorder %s20, 1
    %p190 = por %p188, %p189
    %p191 = scmp.ne.s32.totalorder %s182, %s183
    %p192 = scmp.eq.s32.totalorder %s20, 0
    %p193 = por %p191, %p192
    %p194 = scmp.ne.s32.totalorder %s182, %s183
    %p195 = scmp.eq.s32.totalorder %s21, 1
    %p196 = por %p194, %p195
    %p198 = scmp.ne.s32.totalorder %s183, %s197
    %p199 = scmp.eq.s32.totalorder %s21, 0
    %p200 = por %p198, %p199
    %s202 = sadd.s32 %s201, 1
    %p205 = scmp.eq.s32.totalorder %s15, 1
    %p206 = scmp.ne.s32.totalorder %s201, %s203
    %p207 = scmp.eq.s32.totalorder %s15, 0
    %p208 = por %p206, %p207
    %p209 = scmp.ne.s32.totalorder %s201, %s203
    %p210 = scmp.eq.s32.totalorder %s20, 1
    %p211 = por %p209, %p210
    %p212 = scmp.ne.s32.totalorder %s203, %s204
    %p213 = scmp.eq.s32.totalorder %s20, 0
    %p214 = por %p212, %p213
    %p215 = scmp.ne.s32.totalorder %s203, %s204
    %p216 = scmp.eq.s32.totalorder %s21, 1
    %p217 = por %p215, %p216
    %p219 = scmp.ne.s32.totalorder %s204, %s218
    %p220 = scmp.eq.s32.totalorder %s21, 0
    %p221 = por %p219, %p220
    %s222 = ssub.s32 %s15, %s22
    %p223 = scmp.eq.s32.totalorder %s222, 0
    %s225 = sadd.s32 %s224, 1
    %s226 = scalar_select %p223, %s224, %s225
    %p229 = pneg %p223
    %p230 = scmp.eq.s32.totalorder %s15, 1
    %p231 = por %p229, %p230
    %p232 = scmp.ne.s32.totalorder %s224, %s227
    %p233 = scmp.eq.s32.totalorder %s15, 0
    %p234 = por %p232, %p233
    %p235 = scmp.ne.s32.totalorder %s224, %s227
    %p236 = scmp.eq.s32.totalorder %s20, 1
    %p237 = por %p235, %p236
    %p238 = scmp.ne.s32.totalorder %s227, %s228
    %p239 = scmp.eq.s32.totalorder %s20, 0
    %p240 = por %p238, %p239
    %p241 = scmp.ne.s32.totalorder %s227, %s228
    %p242 = scmp.eq.s32.totalorder %s21, 1
    %p243 = por %p241, %p242
    %p245 = scmp.ne.s32.totalorder %s228, %s244
    %p246 = scmp.eq.s32.totalorder %s21, 0
    %p247 = por %p245, %p246
    %p248 = scmp.le.s32.totalorder 1, %s15
    %p249 = scmp.lt.s32.totalorder %s15, 3
    %p250 = pnand %p248, %p249
    %p251 = pneg %p250
    // Predicated region
    $region9: #{_lambda_.3} parent=5 // pred_check
      _
    $region10: #{_lambda_.3} parent=5 // pred_check_branch
      %253 = sbr.rel (%p250) target = $region12
    $region11: #{_lambda_.3} parent=5 // pred_region
      %s254 = ssub.s32 %s15, 1
      // Predicated region
      $region13: #{_lambda_.3} parent=11 // pred_check
        %p255 = pneg %p88
      $region14: #{_lambda_.3} parent=11 // pred_check_branch
        %257 = sbr.rel (%p255) target = $region16
      $region15: #{_lambda_.3} parent=11 // pred_region
        _
      $region16: #{_lambda_.3} parent=11 // pred_fallthru
        _
      // Predicated region
      $region17: #{_lambda_.3} parent=11 // pred_check
        %p258 = pneg %p109
      $region18: #{_lambda_.3} parent=11 // pred_check_branch
        %260 = sbr.rel (%p258) target = $region20
      $region19: #{_lambda_.3} parent=11 // pred_region
        _
      $region20: #{_lambda_.3} parent=11 // pred_fallthru
        _
      // Predicated region
      $region21: #{_lambda_.3} parent=11 // pred_check
        %p261 = pneg %p130
      $region22: #{_lambda_.3} parent=11 // pred_check_branch
        %263 = sbr.rel (%p261) target = $region24
      $region23: #{_lambda_.3} parent=11 // pred_region
        _
      $region24: #{_lambda_.3} parent=11 // pred_fallthru
        _
      // Predicated region
      $region25: #{_lambda_.3} parent=11 // pred_check
        %p264 = pneg %p151
      $region26: #{_lambda_.3} parent=11 // pred_check_branch
        %266 = sbr.rel (%p264) target = $region28
      $region27: #{_lambda_.3} parent=11 // pred_region
        _
      $region28: #{_lambda_.3} parent=11 // pred_fallthru
        _
      // Predicated region
      $region29: #{_lambda_.3} parent=11 // pred_check
        %p267 = pneg %p172
      $region30: #{_lambda_.3} parent=11 // pred_check_branch
        %269 = sbr.rel (%p267) target = $region32
      $region31: #{_lambda_.3} parent=11 // pred_region
        _
      $region32: #{_lambda_.3} parent=11 // pred_fallthru
        _
      // Predicated region
      $region33: #{_lambda_.3} parent=11 // pred_check
        %p270 = pneg %p193
      $region34: #{_lambda_.3} parent=11 // pred_check_branch
        %272 = sbr.rel (%p270) target = $region36
      $region35: #{_lambda_.3} parent=11 // pred_region
        _
      $region36: #{_lambda_.3} parent=11 // pred_fallthru
        _
      // Predicated region
      $region37: #{_lambda_.3} parent=11 // pred_check
        %p273 = pneg %p214
      $region38: #{_lambda_.3} parent=11 // pred_check_branch
        %275 = sbr.rel (%p273) target = $region40
      $region39: #{_lambda_.3} parent=11 // pred_region
        _
      $region40: #{_lambda_.3} parent=11 // pred_fallthru
        _
    $region12: #{_lambda_.3} parent=5 // pred_fallthru
      _
    %p276 = scmp.lt.s32.totalorder %s15, 2
    // Predicated region
    $region41: #{_lambda_.3} parent=5 // pred_check
      %p277 = pneg %p276
    $region42: #{_lambda_.3} parent=5 // pred_check_branch
      %279 = sbr.rel (%p277) target = $region44
    $region43: #{_lambda_.3} parent=5 // pred_region
      // Predicated region
      $region45: #{_lambda_.3} parent=43 // pred_check
        %p280 = pneg %p35
      $region46: #{_lambda_.3} parent=43 // pred_check_branch
        %282 = sbr.rel (%p280) target = $region48
      $region47: #{_lambda_.3} parent=43 // pred_region
        %p283 = scmp.lt.s32.totalorder %s15, 1
        %s284 = scalar_select %p283, %s15, 1
        %s285 = smul.addr %s284, 54
        %s286 = smul.addr %s285, 4
        %s287 = scalar_lea.vmem %s0, %s286
      $region48: #{_lambda_.3} parent=43 // pred_fallthru
        _
      // Predicated region
      $region49: #{_lambda_.3} parent=43 // pred_check
        %p288 = pneg %p61
      $region50: #{_lambda_.3} parent=43 // pred_check_branch
        %290 = sbr.rel (%p288) target = $region52
      $region51: #{_lambda_.3} parent=43 // pred_region
        %p291 = scmp.lt.s32.totalorder %s15, 1
        %s292 = scalar_select %p291, %s15, 1
        %s293 = smul.addr %s292, 32
        %s294 = smul.addr %s293, 4
        %s295 = scalar_lea.vmem %s1, %s294
      $region52: #{_lambda_.3} parent=43 // pred_fallthru
        _
    $region44: #{_lambda_.3} parent=5 // pred_fallthru
      _
    %p296 = scmp.le.s32.totalorder 1, %s15
    %p297 = scmp.lt.s32.totalorder %s15, 3
    %p298 = pnand %p296, %p297
    %p299 = pneg %p298
    // Predicated region
    $region53: #{_lambda_.3} parent=5 // pred_check
      _
    $region54: #{_lambda_.3} parent=5 // pred_check_branch
      %301 = sbr.rel (%p298) target = $region56
    $region55: #{_lambda_.3} parent=5 // pred_region
      %s302 = ssub.s32 %s15, 1
      %p303 = scmp.lt.s32.totalorder %s20, 1
      %s304 = scalar_select %p303, %s20, 1
      %s305 = smul.addr %s304, 54
      %s306 = smul.addr %s305, 4
      %s307 = scalar_lea.vmem %s0, %s306
      %p308 = pneg %p41
      %p309 = pneg %p38
      %p310 = scmp.lt.s32.totalorder %s20, 1
      %s311 = scalar_select %p310, %s20, 1
      %s312 = smul.addr %s311, 32
      %s313 = smul.addr %s312, 4
      %s314 = scalar_lea.vmem %s1, %s313
      %p315 = pneg %p67
      %p316 = pneg %p64
      %p317 = pneg %p88
      %p318 = pneg %p85
      %p319 = pneg %p109
      %p320 = pneg %p106
      %p321 = pneg %p130
      %p322 = pneg %p127
      %p323 = pneg %p151
      %p324 = pneg %p148
      %p325 = pneg %p172
      %p326 = pneg %p169
      %p327 = pneg %p193
      %p328 = pneg %p190
      %p329 = pneg %p214
      %p330 = pneg %p211
      %p331 = pneg %p240
      %p332 = pneg %p237
      %p333 = scmp.lt.s32.totalorder %s20, 1
      %s334 = scalar_select %p333, %s20, 1
      %s335 = smul.addr %s334, 8
      %s336 = smul.addr %s335, 8
      %s337 = scalar_lea.vmem %s9, %s336
      %p338 = scmp.lt.s32.totalorder %s20, 1
      %s339 = scalar_select %p338, %s20, 1
      %s340 = smul.addr %s339, 54
      %s341 = smul.addr %s340, 4
      %s342 = scalar_lea.vmem %s0, %s341
      %p343 = scmp.lt.s32.totalorder %s20, 1
      %s344 = scalar_select %p343, %s20, 1
      %s345 = smul.addr %s344, 32
      %s346 = smul.addr %s345, 4
      %s347 = scalar_lea.vmem %s1, %s346
      %p348 = scmp.lt.s32.totalorder %s20, 1
      %s349 = scalar_select %p348, %s20, 1
      %s350 = smul.addr %s349, 8
      %s351 = smul.addr %s350, 8
      %s352 = scalar_lea.vmem %s9, %s351
      %v354 = vld [vmem:[%s342] sm:$0xf]
      %v355 = vld [vmem:[%s342 + $0x4] sm:$0xf]
      %v356 = vld [vmem:[%s342 + $0xc] sm:$0xf]
      %v357 = vld [vmem:[%s342 + $0x10] sm:$0xf]
      %v358 = vld [vmem:[%s342 + $0x18] sm:$0xf]
      %v359 = vld [vmem:[%s342 + $0x1c] sm:$0xf]
      %v360 = vld [vmem:[%s342 + $0x24] sm:$0xf]
      %v361 = vld [vmem:[%s342 + $0x28] sm:$0xf]
      %v362 = vld [vmem:[%s342 + $0x30] sm:$0xf]
      %v363 = vld [vmem:[%s342 + $0x34] sm:$0xf]
      %v364 = vld [vmem:[%s342 + $0x3c] sm:$0xf]
      %v365 = vld [vmem:[%s342 + $0x40] sm:$0xf]
      %v366 = vld [vmem:[%s342 + $0x48] sm:$0xf]
      %v367 = vld [vmem:[%s342 + $0x4c] sm:$0xf]
      %v368 = vld [vmem:[%s342 + $0x54] sm:$0xf]
      %v369 = vld [vmem:[%s342 + $0x58] sm:$0xf]
      %v370 = vld [vmem:[%s342 + $0x60] sm:$0xf]
      %v371 = vld [vmem:[%s342 + $0x64] sm:$0xf]
      %v372 = vld [vmem:[%s342 + $0x6c] sm:$0xf]
      %v373 = vld [vmem:[%s342 + $0x70] sm:$0xf]
      %v374 = vld [vmem:[%s342 + $0x78] sm:$0xf]
      %v375 = vld [vmem:[%s342 + $0x7c] sm:$0xf]
      %v376 = vld [vmem:[%s342 + $0x84] sm:$0xf]
      %v377 = vld [vmem:[%s342 + $0x88] sm:$0xf]
      %v378 = vld [vmem:[%s342 + $0x90] sm:$0xf]
      %v379 = vld [vmem:[%s342 + $0x94] sm:$0xf]
      %v380 = vld [vmem:[%s342 + $0x9c] sm:$0xf]
      %v381 = vld [vmem:[%s342 + $0xa0] sm:$0xf]
      %v382 = vld [vmem:[%s342 + $0xa8] sm:$0xf]
      %v383 = vld [vmem:[%s342 + $0xac] sm:$0xf]
      %v384 = vld [vmem:[%s342 + $0xb4] sm:$0xf]
      %v385 = vld [vmem:[%s342 + $0xb8] sm:$0xf]
      %v386 = vld [vmem:[%s2] sm:$0xf]
      %v387 = vld [vmem:[%s2 + $0x4] sm:$0xf]
      %v388 = vld [vmem:[%s2 + $0x8] sm:$0xf]
      %v389 = vld [vmem:[%s2 + $0xc] sm:$0xf]
      %v390 = vld [vmem:[%s2 + $0x10] sm:$0xf]
      %v391 = vld [vmem:[%s2 + $0x14] sm:$0xf]
      %v392 = vld [vmem:[%s2 + $0x18] sm:$0xf]
      %v393 = vld [vmem:[%s2 + $0x1c] sm:$0xf]
      %v394 = vld [vmem:[%s2 + $0x20] sm:$0xf]
      %v395 = vld [vmem:[%s2 + $0x24] sm:$0xf]
      %v396 = vld [vmem:[%s2 + $0x28] sm:$0xf]
      %v397 = vld [vmem:[%s2 + $0x2c] sm:$0xf]
      %v398 = vld [vmem:[%s2 + $0x30] sm:$0xf]
      %v399 = vld [vmem:[%s2 + $0x34] sm:$0xf]
      %v400 = vld [vmem:[%s2 + $0x38] sm:$0xf]
      %v401 = vld [vmem:[%s2 + $0x3c] sm:$0xf]
      %v402 = vld [vmem:[%s342 + $0x8] sm:$0x1]
      %v403 = vld [vmem:[%s342 + $0x14] sm:$0x1]
      %v404 = vld [vmem:[%s342 + $0x20] sm:$0x1]
      %v405 = vld [vmem:[%s342 + $0x2c] sm:$0x1]
      %v406 = vld [vmem:[%s342 + $0x38] sm:$0x1]
      %v407 = vld [vmem:[%s342 + $0x44] sm:$0x1]
      %v408 = vld [vmem:[%s342 + $0x50] sm:$0x1]
      %v409 = vld [vmem:[%s342 + $0x5c] sm:$0x1]
      %v410 = vld [vmem:[%s342 + $0x68] sm:$0x1]
      %v411 = vld [vmem:[%s342 + $0x74] sm:$0x1]
      %v412 = vld [vmem:[%s342 + $0x80] sm:$0x1]
      %v413 = vld [vmem:[%s342 + $0x8c] sm:$0x1]
      %v414 = vld [vmem:[%s342 + $0x98] sm:$0x1]
      %v415 = vld [vmem:[%s342 + $0xa4] sm:$0x1]
      %v416 = vld [vmem:[%s342 + $0xb0] sm:$0x1]
      %v417 = vld [vmem:[%s342 + $0xbc] sm:$0x1]
      %vm418 = vsmask.f32 3328
      %vm419 = vsmask.f32 7440
      %vm420 = vmor %vm418, %vm419
      %v422 = vshrl.u32 %v354, 16
      %v424 = vrot.slane %v422, 4
      %v425 = vshll.u32 %v354, 16
      %v427 = vrot.slane %v425, 5
      %v428 = vor.u32 %v424, %v427
      %v429 = vrot.slane %v428, 4
      %v431 = vshll.u32 %v355, 16
      %v433 = vrot.slane %v431, 5
      %v434 = vsel %vm420, %v429, %v433
      %v435 = vshrl.u32 %v355, 16
      %v437 = vrot.slane %v435, 4
      %v438 = vor.u32 %v437, %v433
      %v439 = vrot.slane %v438, 4
      %v441 = vshll.u32 %v402, 16
      %v443 = vrot.slane %v441, 5
      %v444 = vsel %vm420, %v439, %v443
      %v446 = vshrl.u32 %v356, 16
      %v448 = vrot.slane %v446, 4
      %v449 = vshll.u32 %v356, 16
      %v451 = vrot.slane %v449, 5
      %v452 = vor.u32 %v448, %v451
      %v453 = vrot.slane %v452, 4
      %v455 = vshll.u32 %v357, 16
      %v457 = vrot.slane %v455, 5
      %v458 = vsel %vm420, %v453, %v457
      %v459 = vshrl.u32 %v357, 16
      %v461 = vrot.slane %v459, 4
      %v462 = vor.u32 %v461, %v457
      %v463 = vrot.slane %v462, 4
      %v465 = vshll.u32 %v403, 16
      %v467 = vrot.slane %v465, 5
      %v468 = vsel %vm420, %v463, %v467
      %v470 = vshrl.u32 %v358, 16
      %v472 = vrot.slane %v470, 4
      %v473 = vshll.u32 %v358, 16
      %v475 = vrot.slane %v473, 5
      %v476 = vor.u32 %v472, %v475
      %v477 = vrot.slane %v476, 4
      %v479 = vshll.u32 %v359, 16
      %v481 = vrot.slane %v479, 5
      %v482 = vsel %vm420, %v477, %v481
      %v483 = vshrl.u32 %v359, 16
      %v485 = vrot.slane %v483, 4
      %v486 = vor.u32 %v485, %v481
      %v487 = vrot.slane %v486, 4
      %v489 = vshll.u32 %v404, 16
      %v491 = vrot.slane %v489, 5
      %v492 = vsel %vm420, %v487, %v491
      %v494 = vshrl.u32 %v360, 16
      %v496 = vrot.slane %v494, 4
      %v497 = vshll.u32 %v360, 16
      %v499 = vrot.slane %v497, 5
      %v500 = vor.u32 %v496, %v499
      %v501 = vrot.slane %v500, 4
      %v503 = vshll.u32 %v361, 16
      %v505 = vrot.slane %v503, 5
      %v506 = vsel %vm420, %v501, %v505
      %v507 = vshrl.u32 %v361, 16
      %v509 = vrot.slane %v507, 4
      %v510 = vor.u32 %v509, %v505
      %v511 = vrot.slane %v510, 4
      %v513 = vshll.u32 %v405, 16
      %v515 = vrot.slane %v513, 5
      %v516 = vsel %vm420, %v511, %v515
      %v518 = vshrl.u32 %v362, 16
      %v520 = vrot.slane %v518, 4
      %v521 = vshll.u32 %v362, 16
      %v523 = vrot.slane %v521, 5
      %v524 = vor.u32 %v520, %v523
      %v525 = vrot.slane %v524, 4
      %v527 = vshll.u32 %v363, 16
      %v529 = vrot.slane %v527, 5
      %v530 = vsel %vm420, %v525, %v529
      %v531 = vshrl.u32 %v363, 16
      %v533 = vrot.slane %v531, 4
      %v534 = vor.u32 %v533, %v529
      %v535 = vrot.slane %v534, 4
      %v537 = vshll.u32 %v406, 16
      %v539 = vrot.slane %v537, 5
      %v540 = vsel %vm420, %v535, %v539
      %v542 = vshrl.u32 %v364, 16
      %v544 = vrot.slane %v542, 4
      %v545 = vshll.u32 %v364, 16
      %v547 = vrot.slane %v545, 5
      %v548 = vor.u32 %v544, %v547
      %v549 = vrot.slane %v548, 4
      %v551 = vshll.u32 %v365, 16
      %v553 = vrot.slane %v551, 5
      %v554 = vsel %vm420, %v549, %v553
      %v555 = vshrl.u32 %v365, 16
      %v557 = vrot.slane %v555, 4
      %v558 = vor.u32 %v557, %v553
      %v559 = vrot.slane %v558, 4
      %v561 = vshll.u32 %v407, 16
      %v563 = vrot.slane %v561, 5
      %v564 = vsel %vm420, %v559, %v563
      %v566 = vshrl.u32 %v366, 16
      %v568 = vrot.slane %v566, 4
      %v569 = vshll.u32 %v366, 16
      %v571 = vrot.slane %v569, 5
      %v572 = vor.u32 %v568, %v571
      %v573 = vrot.slane %v572, 4
      %v575 = vshll.u32 %v367, 16
      %v577 = vrot.slane %v575, 5
      %v578 = vsel %vm420, %v573, %v577
      %v579 = vshrl.u32 %v367, 16
      %v581 = vrot.slane %v579, 4
      %v582 = vor.u32 %v581, %v577
      %v583 = vrot.slane %v582, 4
      %v585 = vshll.u32 %v408, 16
      %v587 = vrot.slane %v585, 5
      %v588 = vsel %vm420, %v583, %v587
      %v590 = vshrl.u32 %v368, 16
      %v592 = vrot.slane %v590, 4
      %v593 = vshll.u32 %v368, 16
      %v595 = vrot.slane %v593, 5
      %v596 = vor.u32 %v592, %v595
      %v597 = vrot.slane %v596, 4
      %v599 = vshll.u32 %v369, 16
      %v601 = vrot.slane %v599, 5
      %v602 = vsel %vm420, %v597, %v601
      %v603 = vshrl.u32 %v369, 16
      %v605 = vrot.slane %v603, 4
      %v606 = vor.u32 %v605, %v601
      %v607 = vrot.slane %v606, 4
      %v609 = vshll.u32 %v409, 16
      %v611 = vrot.slane %v609, 5
      %v612 = vsel %vm420, %v607, %v611
      %v614 = vshrl.u32 %v370, 16
      %v616 = vrot.slane %v614, 4
      %v617 = vshll.u32 %v370, 16
      %v619 = vrot.slane %v617, 5
      %v620 = vor.u32 %v616, %v619
      %v621 = vrot.slane %v620, 4
      %v623 = vshll.u32 %v371, 16
      %v625 = vrot.slane %v623, 5
      %v626 = vsel %vm420, %v621, %v625
      %v627 = vshrl.u32 %v371, 16
      %v629 = vrot.slane %v627, 4
      %v630 = vor.u32 %v629, %v625
      %v631 = vrot.slane %v630, 4
      %v633 = vshll.u32 %v410, 16
      %v635 = vrot.slane %v633, 5
      %v636 = vsel %vm420, %v631, %v635
      %v638 = vshrl.u32 %v372, 16
      %v640 = vrot.slane %v638, 4
      %v641 = vshll.u32 %v372, 16
      %v643 = vrot.slane %v641, 5
      %v644 = vor.u32 %v640, %v643
      %v645 = vrot.slane %v644, 4
      %v647 = vshll.u32 %v373, 16
      %v649 = vrot.slane %v647, 5
      %v650 = vsel %vm420, %v645, %v649
      %v651 = vshrl.u32 %v373, 16
      %v653 = vrot.slane %v651, 4
      %v654 = vor.u32 %v653, %v649
      %v655 = vrot.slane %v654, 4
      %v657 = vshll.u32 %v411, 16
      %v659 = vrot.slane %v657, 5
      %v660 = vsel %vm420, %v655, %v659
      %v662 = vshrl.u32 %v374, 16
      %v664 = vrot.slane %v662, 4
      %v665 = vshll.u32 %v374, 16
      %v667 = vrot.slane %v665, 5
      %v668 = vor.u32 %v664, %v667
      %v669 = vrot.slane %v668, 4
      %v671 = vshll.u32 %v375, 16
      %v673 = vrot.slane %v671, 5
      %v674 = vsel %vm420, %v669, %v673
      %v675 = vshrl.u32 %v375, 16
      %v677 = vrot.slane %v675, 4
      %v678 = vor.u32 %v677, %v673
      %v679 = vrot.slane %v678, 4
      %v681 = vshll.u32 %v412, 16
      %v683 = vrot.slane %v681, 5
      %v684 = vsel %vm420, %v679, %v683
      %v686 = vshrl.u32 %v376, 16
      %v688 = vrot.slane %v686, 4
      %v689 = vshll.u32 %v376, 16
      %v691 = vrot.slane %v689, 5
      %v692 = vor.u32 %v688, %v691
      %v693 = vrot.slane %v692, 4
      %v695 = vshll.u32 %v377, 16
      %v697 = vrot.slane %v695, 5
      %v698 = vsel %vm420, %v693, %v697
      %v699 = vshrl.u32 %v377, 16
      %v701 = vrot.slane %v699, 4
      %v702 = vor.u32 %v701, %v697
      %v703 = vrot.slane %v702, 4
      %v705 = vshll.u32 %v413, 16
      %v707 = vrot.slane %v705, 5
      %v708 = vsel %vm420, %v703, %v707
      %v710 = vshrl.u32 %v378, 16
      %v712 = vrot.slane %v710, 4
      %v713 = vshll.u32 %v378, 16
      %v715 = vrot.slane %v713, 5
      %v716 = vor.u32 %v712, %v715
      %v717 = vrot.slane %v716, 4
      %v719 = vshll.u32 %v379, 16
      %v721 = vrot.slane %v719, 5
      %v722 = vsel %vm420, %v717, %v721
      %v723 = vshrl.u32 %v379, 16
      %v725 = vrot.slane %v723, 4
      %v726 = vor.u32 %v725, %v721
      %v727 = vrot.slane %v726, 4
      %v729 = vshll.u32 %v414, 16
      %v731 = vrot.slane %v729, 5
      %v732 = vsel %vm420, %v727, %v731
      %v734 = vshrl.u32 %v380, 16
      %v736 = vrot.slane %v734, 4
      %v737 = vshll.u32 %v380, 16
      %v739 = vrot.slane %v737, 5
      %v740 = vor.u32 %v736, %v739
      %v741 = vrot.slane %v740, 4
      %v743 = vshll.u32 %v381, 16
      %v745 = vrot.slane %v743, 5
      %v746 = vsel %vm420, %v741, %v745
      %v747 = vshrl.u32 %v381, 16
      %v749 = vrot.slane %v747, 4
      %v750 = vor.u32 %v749, %v745
      %v751 = vrot.slane %v750, 4
      %v753 = vshll.u32 %v415, 16
      %v755 = vrot.slane %v753, 5
      %v756 = vsel %vm420, %v751, %v755
      %v758 = vshrl.u32 %v382, 16
      %v760 = vrot.slane %v758, 4
      %v761 = vshll.u32 %v382, 16
      %v763 = vrot.slane %v761, 5
      %v764 = vor.u32 %v760, %v763
      %v765 = vrot.slane %v764, 4
      %v767 = vshll.u32 %v383, 16
      %v769 = vrot.slane %v767, 5
      %v770 = vsel %vm420, %v765, %v769
      %v771 = vshrl.u32 %v383, 16
      %v773 = vrot.slane %v771, 4
      %v774 = vor.u32 %v773, %v769
      %v775 = vrot.slane %v774, 4
      %v777 = vshll.u32 %v416, 16
      %v779 = vrot.slane %v777, 5
      %v780 = vsel %vm420, %v775, %v779
      %v782 = vshrl.u32 %v384, 16
      %v784 = vrot.slane %v782, 4
      %v785 = vshll.u32 %v384, 16
      %v787 = vrot.slane %v785, 5
      %v788 = vor.u32 %v784, %v787
      %v789 = vrot.slane %v788, 4
      %v791 = vshll.u32 %v385, 16
      %v793 = vrot.slane %v791, 5
      %v794 = vsel %vm420, %v789, %v793
      %v795 = vshrl.u32 %v385, 16
      %v797 = vrot.slane %v795, 4
      %v798 = vor.u32 %v797, %v793
      %v799 = vrot.slane %v798, 4
      %v801 = vshll.u32 %v417, 16
      %v803 = vrot.slane %v801, 5
      %v804 = vsel %vm420, %v799, %v803
      %s805 = scalar_lea.vmem %s2, 64
      %v806 = vld [vmem:[%s805] sm:$0xf]
      %v807 = vld [vmem:[%s805 + $0x4] sm:$0xf]
      %v808 = vld [vmem:[%s805 + $0x8] sm:$0xf]
      %v809 = vld [vmem:[%s805 + $0xc] sm:$0xf]
      %v810 = vld [vmem:[%s805 + $0x10] sm:$0xf]
      %v811 = vld [vmem:[%s805 + $0x14] sm:$0xf]
      %v812 = vld [vmem:[%s805 + $0x18] sm:$0xf]
      %v813 = vld [vmem:[%s805 + $0x1c] sm:$0xf]
      %v814 = vld [vmem:[%s805 + $0x20] sm:$0xf]
      %v815 = vld [vmem:[%s805 + $0x24] sm:$0xf]
      %v816 = vld [vmem:[%s805 + $0x28] sm:$0xf]
      %v817 = vld [vmem:[%s805 + $0x2c] sm:$0xf]
      %v818 = vld [vmem:[%s805 + $0x30] sm:$0xf]
      %v819 = vld [vmem:[%s805 + $0x34] sm:$0xf]
      %v820 = vld [vmem:[%s805 + $0x38] sm:$0xf]
      %v821 = vld [vmem:[%s805 + $0x3c] sm:$0xf]
      %v822 = vunpack.c.l.b16 %v434
      %v823 = vunpack.c.l.b16 %v444
      %v824 = vunpack.c.l.b16 %v458
      %v825 = vunpack.c.l.b16 %v468
      %v826 = vunpack.c.l.b16 %v482
      %v827 = vunpack.c.l.b16 %v492
      %v828 = vunpack.c.l.b16 %v506
      %v829 = vunpack.c.l.b16 %v516
      %v830 = vunpack.c.l.b16 %v530
      %v831 = vunpack.c.l.b16 %v540
      %v832 = vunpack.c.l.b16 %v554
      %v833 = vunpack.c.l.b16 %v564
      %v834 = vunpack.c.l.b16 %v578
      %v835 = vunpack.c.l.b16 %v588
      %v836 = vunpack.c.l.b16 %v602
      %v837 = vunpack.c.l.b16 %v612
      %v838 = vunpack.c.l.b16 %v626
      %v839 = vunpack.c.l.b16 %v636
      %v840 = vunpack.c.l.b16 %v650
      %v841 = vunpack.c.l.b16 %v660
      %v842 = vunpack.c.l.b16 %v674
      %v843 = vunpack.c.l.b16 %v684
      %v844 = vunpack.c.l.b16 %v698
      %v845 = vunpack.c.l.b16 %v708
      %v846 = vunpack.c.l.b16 %v722
      %v847 = vunpack.c.l.b16 %v732
      %v848 = vunpack.c.l.b16 %v746
      %v849 = vunpack.c.l.b16 %v756
      %v850 = vunpack.c.l.b16 %v770
      %v851 = vunpack.c.l.b16 %v780
      %v852 = vunpack.c.l.b16 %v794
      %v853 = vunpack.c.l.b16 %v804
      %v854 = vpack.c.b16 %v823, %v822
      %v855 = vpack.c.b16 %v825, %v824
      %v856 = vpack.c.b16 %v827, %v826
      %v857 = vpack.c.b16 %v829, %v828
      %v858 = vpack.c.b16 %v831, %v830
      %v859 = vpack.c.b16 %v833, %v832
      %v860 = vpack.c.b16 %v835, %v834
      %v861 = vpack.c.b16 %v837, %v836
      %v862 = vpack.c.b16 %v839, %v838
      %v863 = vpack.c.b16 %v841, %v840
      %v864 = vpack.c.b16 %v843, %v842
      %v865 = vpack.c.b16 %v845, %v844
      %v866 = vpack.c.b16 %v847, %v846
      %v867 = vpack.c.b16 %v849, %v848
      %v868 = vpack.c.b16 %v851, %v850
      %v869 = vpack.c.b16 %v853, %v852
      %v902 = vunpack.c.l.b16 %v806
      %v903 = vunpack.c.l.b16 %v807
      %v904 = vunpack.c.l.b16 %v808
      %v905 = vunpack.c.l.b16 %v809
      %v906 = vunpack.c.l.b16 %v810
      %v907 = vunpack.c.l.b16 %v811
      %v908 = vunpack.c.l.b16 %v812
      %v909 = vunpack.c.l.b16 %v813
      %v910 = vunpack.c.l.b16 %v814
      %v911 = vunpack.c.l.b16 %v815
      %v912 = vunpack.c.l.b16 %v816
      %v913 = vunpack.c.l.b16 %v817
      %v914 = vunpack.c.l.b16 %v818
      %v915 = vunpack.c.l.b16 %v819
      %v916 = vunpack.c.l.b16 %v820
      %v917 = vunpack.c.l.b16 %v821
      %v918 = vpack.c.b16 %v903, %v902
      %v919 = vpack.c.b16 %v905, %v904
      %v920 = vpack.c.b16 %v907, %v906
      %v921 = vpack.c.b16 %v909, %v908
      %v922 = vpack.c.b16 %v911, %v910
      %v923 = vpack.c.b16 %v913, %v912
      %v924 = vpack.c.b16 %v915, %v914
      %v925 = vpack.c.b16 %v917, %v916
      %934 = vmatprep.subr.bf16.mxu0 0
      %935 = vmatpush1.bf16.msra.mxu0 %v925
      %936 = vmatprep.subr.bf16.mxu0 0
      %937 = vmatpush1.bf16.msra.mxu0 %v924
      %938 = vmatprep.subr.bf16.mxu0 0
      %939 = vmatpush1.bf16.msra.mxu0 %v923
      %940 = vmatprep.subr.bf16.mxu0 0
      %941 = vmatpush1.bf16.msra.mxu0 %v922
      %942 = vmatprep.subr.bf16.mxu0 0
      %943 = vmatpush1.bf16.msra.mxu0 %v921
      %944 = vmatprep.subr.bf16.mxu0 0
      %945 = vmatpush1.bf16.msra.mxu0 %v920
      %946 = vmatprep.subr.bf16.mxu0 0
      %947 = vmatpush1.bf16.msra.mxu0 %v919
      %948 = vmatprep.subr.bf16.mxu0 0
      %949 = vmatpush1.bf16.msra.mxu0 %v918
      %950 = vmatprep.subr.bf16.mxu0 0
      %951 = vmatpush2.bf16.msra.mxu0 0
      %952 = vmatprep.subr.bf16.mxu0 0
      %953 = vmatpush2.bf16.msra.mxu0 0
      %954 = vmatprep.subr.bf16.mxu0 0
      %955 = vmatpush2.bf16.msra.mxu0 0
      %956 = vmatprep.subr.bf16.mxu0 0
      %957 = vmatpush2.bf16.msra.mxu0 0
      %958 = vmatprep.subr.bf16.mxu0 0
      %959 = vmatpush2.bf16.msra.mxu0 0
      %960 = vmatprep.subr.bf16.mxu0 0
      %961 = vmatpush2.bf16.msra.mxu0 0
      %962 = vmatprep.subr.bf16.mxu0 0
      %963 = vmatpush2.bf16.msra.mxu0 0
      %964 = vmatprep.subr.bf16.mxu0 0
      %965 = vmatpush2.bf16.msra.mxu0 0
      %966 = vmatprep.mubr.bf16.mxu0 0
      %967 = vmatmul.mubr.bf16.gmra.mxu0 %v854
      %v968 = vpop.f32.mrf.mxu0
      %v969 = vadd.f32 0.0, %v968
      %v970 = vpop.f32.mrf.mxu0
      %v971 = vpop.f32.mrf.mxu0
      %v972 = vadd.f32 0.0, %v971
      %v973 = vpop.f32.mrf.mxu0
      %974 = vmatprep.mubr.bf16.mxu0 0
      %975 = vmatmul.mubr.bf16.gmra.mxu0 %v855
      %v976 = vpop.f32.mrf.mxu0
      %v977 = vadd.f32 0.0, %v976
      %v978 = vpop.f32.mrf.mxu0
      %v979 = vpop.f32.mrf.mxu0
      %v980 = vadd.f32 0.0, %v979
      %v981 = vpop.f32.mrf.mxu0
      %982 = vmatprep.mubr.bf16.mxu0 0
      %983 = vmatmul.mubr.bf16.gmra.mxu0 %v856
      %v984 = vpop.f32.mrf.mxu0
      %v985 = vadd.f32 0.0, %v984
      %v986 = vpop.f32.mrf.mxu0
      %v987 = vpop.f32.mrf.mxu0
      %v988 = vadd.f32 0.0, %v987
      %v989 = vpop.f32.mrf.mxu0
      %990 = vmatprep.mubr.bf16.mxu0 0
      %991 = vmatmul.mubr.bf16.gmra.mxu0 %v857
      %v992 = vpop.f32.mrf.mxu0
      %v993 = vadd.f32 0.0, %v992
      %v994 = vpop.f32.mrf.mxu0
      %v995 = vpop.f32.mrf.mxu0
      %v996 = vadd.f32 0.0, %v995
      %v997 = vpop.f32.mrf.mxu0
      %998 = vmatprep.mubr.bf16.mxu0 0
      %999 = vmatmul.mubr.bf16.gmra.mxu0 %v858
      %v1000 = vpop.f32.mrf.mxu0
      %v1001 = vadd.f32 0.0, %v1000
      %v1002 = vpop.f32.mrf.mxu0
      %v1003 = vpop.f32.mrf.mxu0
      %v1004 = vadd.f32 0.0, %v1003
      %v1005 = vpop.f32.mrf.mxu0
      %1006 = vmatprep.mubr.bf16.mxu0 0
      %1007 = vmatmul.mubr.bf16.gmra.mxu0 %v859
      %v1008 = vpop.f32.mrf.mxu0
      %v1009 = vadd.f32 0.0, %v1008
      %v1010 = vpop.f32.mrf.mxu0
      %v1011 = vpop.f32.mrf.mxu0
      %v1012 = vadd.f32 0.0, %v1011
      %v1013 = vpop.f32.mrf.mxu0
      %1014 = vmatprep.mubr.bf16.mxu0 0
      %1015 = vmatmul.mubr.bf16.gmra.mxu0 %v860
      %v1016 = vpop.f32.mrf.mxu0
      %v1017 = vadd.f32 0.0, %v1016
      %v1018 = vpop.f32.mrf.mxu0
      %v1019 = vpop.f32.mrf.mxu0
      %v1020 = vadd.f32 0.0, %v1019
      %v1021 = vpop.f32.mrf.mxu0
      %1022 = vmatprep.mubr.bf16.mxu0 0
      %1023 = vmatmul.mubr.bf16.gmra.mxu0 %v861
      %v1024 = vpop.f32.mrf.mxu0
      %v1025 = vadd.f32 0.0, %v1024
      %v1026 = vpop.f32.mrf.mxu0
      %v1027 = vpop.f32.mrf.mxu0
      %v1028 = vadd.f32 0.0, %v1027
      %v1029 = vpop.f32.mrf.mxu0
      %1030 = vmatprep.mubr.bf16.mxu0 0
      %1031 = vmatmul.mubr.bf16.gmra.mxu0 %v862
      %v1032 = vpop.f32.mrf.mxu0
      %v1033 = vadd.f32 0.0, %v1032
      %v1034 = vpop.f32.mrf.mxu0
      %v1035 = vpop.f32.mrf.mxu0
      %v1036 = vadd.f32 0.0, %v1035
      %v1037 = vpop.f32.mrf.mxu0
      %1038 = vmatprep.mubr.bf16.mxu0 0
      %1039 = vmatmul.mubr.bf16.gmra.mxu0 %v863
      %v1040 = vpop.f32.mrf.mxu0
      %v1041 = vadd.f32 0.0, %v1040
      %v1042 = vpop.f32.mrf.mxu0
      %v1043 = vpop.f32.mrf.mxu0
      %v1044 = vadd.f32 0.0, %v1043
      %v1045 = vpop.f32.mrf.mxu0
      %1046 = vmatprep.mubr.bf16.mxu0 0
      %1047 = vmatmul.mubr.bf16.gmra.mxu0 %v864
      %v1048 = vpop.f32.mrf.mxu0
      %v1049 = vadd.f32 0.0, %v1048
      %v1050 = vpop.f32.mrf.mxu0
      %v1051 = vpop.f32.mrf.mxu0
      %v1052 = vadd.f32 0.0, %v1051
      %v1053 = vpop.f32.mrf.mxu0
      %1054 = vmatprep.mubr.bf16.mxu0 0
      %1055 = vmatmul.mubr.bf16.gmra.mxu0 %v865
      %v1056 = vpop.f32.mrf.mxu0
      %v1057 = vadd.f32 0.0, %v1056
      %v1058 = vpop.f32.mrf.mxu0
      %v1059 = vpop.f32.mrf.mxu0
      %v1060 = vadd.f32 0.0, %v1059
      %v1061 = vpop.f32.mrf.mxu0
      %1062 = vmatprep.mubr.bf16.mxu0 0
      %1063 = vmatmul.mubr.bf16.gmra.mxu0 %v866
      %v1064 = vpop.f32.mrf.mxu0
      %v1065 = vadd.f32 0.0, %v1064
      %v1066 = vpop.f32.mrf.mxu0
      %v1067 = vpop.f32.mrf.mxu0
      %v1068 = vadd.f32 0.0, %v1067
      %v1069 = vpop.f32.mrf.mxu0
      %1070 = vmatprep.mubr.bf16.mxu0 0
      %1071 = vmatmul.mubr.bf16.gmra.mxu0 %v867
      %v1072 = vpop.f32.mrf.mxu0
      %v1073 = vadd.f32 0.0, %v1072
      %v1074 = vpop.f32.mrf.mxu0
      %v1075 = vpop.f32.mrf.mxu0
      %v1076 = vadd.f32 0.0, %v1075
      %v1077 = vpop.f32.mrf.mxu0
      %1078 = vmatprep.mubr.bf16.mxu0 0
      %1079 = vmatmul.mubr.bf16.gmra.mxu0 %v868
      %v1080 = vpop.f32.mrf.mxu0
      %v1081 = vadd.f32 0.0, %v1080
      %v1082 = vpop.f32.mrf.mxu0
      %v1083 = vpop.f32.mrf.mxu0
      %v1084 = vadd.f32 0.0, %v1083
      %v1085 = vpop.f32.mrf.mxu0
      %1086 = vmatprep.mubr.bf16.mxu0 0
      %1087 = vmatmul.mubr.bf16.gmra.mxu0 %v869
      %v1088 = vpop.f32.mrf.mxu0
      %v1089 = vadd.f32 0.0, %v1088
      %v1090 = vpop.f32.mrf.mxu0
      %v1091 = vpop.f32.mrf.mxu0
      %v1092 = vadd.f32 0.0, %v1091
      %v1093 = vpop.f32.mrf.mxu0
      %1094 = vdwg.mxu0
      %v1127 = vunpack.c.l.b16 %v354
      %v1128 = vunpack.c.l.b16 %v355
      %v1129 = vunpack.c.l.b16 %v356
      %v1130 = vunpack.c.l.b16 %v357
      %v1131 = vunpack.c.l.b16 %v358
      %v1132 = vunpack.c.l.b16 %v359
      %v1133 = vunpack.c.l.b16 %v360
      %v1134 = vunpack.c.l.b16 %v361
      %v1135 = vunpack.c.l.b16 %v362
      %v1136 = vunpack.c.l.b16 %v363
      %v1137 = vunpack.c.l.b16 %v364
      %v1138 = vunpack.c.l.b16 %v365
      %v1139 = vunpack.c.l.b16 %v366
      %v1140 = vunpack.c.l.b16 %v367
      %v1141 = vunpack.c.l.b16 %v368
      %v1142 = vunpack.c.l.b16 %v369
      %v1143 = vunpack.c.l.b16 %v370
      %v1144 = vunpack.c.l.b16 %v371
      %v1145 = vunpack.c.l.b16 %v372
      %v1146 = vunpack.c.l.b16 %v373
      %v1147 = vunpack.c.l.b16 %v374
      %v1148 = vunpack.c.l.b16 %v375
      %v1149 = vunpack.c.l.b16 %v376
      %v1150 = vunpack.c.l.b16 %v377
      %v1151 = vunpack.c.l.b16 %v378
      %v1152 = vunpack.c.l.b16 %v379
      %v1153 = vunpack.c.l.b16 %v380
      %v1154 = vunpack.c.l.b16 %v381
      %v1155 = vunpack.c.l.b16 %v382
      %v1156 = vunpack.c.l.b16 %v383
      %v1157 = vunpack.c.l.b16 %v384
      %v1158 = vunpack.c.l.b16 %v385
      %v1159 = vpack.c.b16 %v1128, %v1127
      %v1160 = vpack.c.b16 %v1130, %v1129
      %v1161 = vpack.c.b16 %v1132, %v1131
      %v1162 = vpack.c.b16 %v1134, %v1133
      %v1163 = vpack.c.b16 %v1136, %v1135
      %v1164 = vpack.c.b16 %v1138, %v1137
      %v1165 = vpack.c.b16 %v1140, %v1139
      %v1166 = vpack.c.b16 %v1142, %v1141
      %v1167 = vpack.c.b16 %v1144, %v1143
      %v1168 = vpack.c.b16 %v1146, %v1145
      %v1169 = vpack.c.b16 %v1148, %v1147
      %v1170 = vpack.c.b16 %v1150, %v1149
      %v1171 = vpack.c.b16 %v1152, %v1151
      %v1172 = vpack.c.b16 %v1154, %v1153
      %v1173 = vpack.c.b16 %v1156, %v1155
      %v1174 = vpack.c.b16 %v1158, %v1157
      %v1207 = vunpack.c.l.b16 %v386
      %v1208 = vunpack.c.l.b16 %v387
      %v1209 = vunpack.c.l.b16 %v388
      %v1210 = vunpack.c.l.b16 %v389
      %v1211 = vunpack.c.l.b16 %v390
      %v1212 = vunpack.c.l.b16 %v391
      %v1213 = vunpack.c.l.b16 %v392
      %v1214 = vunpack.c.l.b16 %v393
      %v1215 = vunpack.c.l.b16 %v394
      %v1216 = vunpack.c.l.b16 %v395
      %v1217 = vunpack.c.l.b16 %v396
      %v1218 = vunpack.c.l.b16 %v397
      %v1219 = vunpack.c.l.b16 %v398
      %v1220 = vunpack.c.l.b16 %v399
      %v1221 = vunpack.c.l.b16 %v400
      %v1222 = vunpack.c.l.b16 %v401
      %v1223 = vpack.c.b16 %v1208, %v1207
      %v1224 = vpack.c.b16 %v1210, %v1209
      %v1225 = vpack.c.b16 %v1212, %v1211
      %v1226 = vpack.c.b16 %v1214, %v1213
      %v1227 = vpack.c.b16 %v1216, %v1215
      %v1228 = vpack.c.b16 %v1218, %v1217
      %v1229 = vpack.c.b16 %v1220, %v1219
      %v1230 = vpack.c.b16 %v1222, %v1221
      %1239 = vmatprep.subr.bf16.mxu0 0
      %1240 = vmatpush1.bf16.msra.mxu0 %v1230
      %1241 = vmatprep.subr.bf16.mxu0 0
      %1242 = vmatpush1.bf16.msra.mxu0 %v1229
      %1243 = vmatprep.subr.bf16.mxu0 0
      %1244 = vmatpush1.bf16.msra.mxu0 %v1228
      %1245 = vmatprep.subr.bf16.mxu0 0
      %1246 = vmatpush1.bf16.msra.mxu0 %v1227
      %1247 = vmatprep.subr.bf16.mxu0 0
      %1248 = vmatpush1.bf16.msra.mxu0 %v1226
      %1249 = vmatprep.subr.bf16.mxu0 0
      %1250 = vmatpush1.bf16.msra.mxu0 %v1225
      %1251 = vmatprep.subr.bf16.mxu0 0
      %1252 = vmatpush1.bf16.msra.mxu0 %v1224
      %1253 = vmatprep.subr.bf16.mxu0 0
      %1254 = vmatpush1.bf16.msra.mxu0 %v1223
      %1255 = vmatprep.subr.bf16.mxu0 0
      %1256 = vmatpush2.bf16.msra.mxu0 0
      %1257 = vmatprep.subr.bf16.mxu0 0
      %1258 = vmatpush2.bf16.msra.mxu0 0
      %1259 = vmatprep.subr.bf16.mxu0 0
      %1260 = vmatpush2.bf16.msra.mxu0 0
      %1261 = vmatprep.subr.bf16.mxu0 0
      %1262 = vmatpush2.bf16.msra.mxu0 0
      %1263 = vmatprep.subr.bf16.mxu0 0
      %1264 = vmatpush2.bf16.msra.mxu0 0
      %1265 = vmatprep.subr.bf16.mxu0 0
      %1266 = vmatpush2.bf16.msra.mxu0 0
      %1267 = vmatprep.subr.bf16.mxu0 0
      %1268 = vmatpush2.bf16.msra.mxu0 0
      %1269 = vmatprep.subr.bf16.mxu0 0
      %1270 = vmatpush2.bf16.msra.mxu0 0
      %1271 = vmatprep.mubr.bf16.mxu0 0
      %1272 = vmatmul.mubr.bf16.gmra.mxu0 %v1159
      %v1273 = vpop.f32.mrf.mxu0
      %v1274 = vadd.f32 %v969, %v1273
      %v1275 = vpop.f32.mrf.mxu0
      %v1276 = vpop.f32.mrf.mxu0
      %v1277 = vadd.f32 %v972, %v1276
      %v1278 = vpop.f32.mrf.mxu0
      %1279 = vmatprep.mubr.bf16.mxu0 0
      %1280 = vmatmul.mubr.bf16.gmra.mxu0 %v1160
      %v1281 = vpop.f32.mrf.mxu0
      %v1282 = vadd.f32 %v977, %v1281
      %v1283 = vpop.f32.mrf.mxu0
      %v1284 = vpop.f32.mrf.mxu0
      %v1285 = vadd.f32 %v980, %v1284
      %v1286 = vpop.f32.mrf.mxu0
      %1287 = vmatprep.mubr.bf16.mxu0 0
      %1288 = vmatmul.mubr.bf16.gmra.mxu0 %v1161
      %v1289 = vpop.f32.mrf.mxu0
      %v1290 = vadd.f32 %v985, %v1289
      %v1291 = vpop.f32.mrf.mxu0
      %v1292 = vpop.f32.mrf.mxu0
      %v1293 = vadd.f32 %v988, %v1292
      %v1294 = vpop.f32.mrf.mxu0
      %1295 = vmatprep.mubr.bf16.mxu0 0
      %1296 = vmatmul.mubr.bf16.gmra.mxu0 %v1162
      %v1297 = vpop.f32.mrf.mxu0
      %v1298 = vadd.f32 %v993, %v1297
      %v1299 = vpop.f32.mrf.mxu0
      %v1300 = vpop.f32.mrf.mxu0
      %v1301 = vadd.f32 %v996, %v1300
      %v1302 = vpop.f32.mrf.mxu0
      %1303 = vmatprep.mubr.bf16.mxu0 0
      %1304 = vmatmul.mubr.bf16.gmra.mxu0 %v1163
      %v1305 = vpop.f32.mrf.mxu0
      %v1306 = vadd.f32 %v1001, %v1305
      %v1307 = vpop.f32.mrf.mxu0
      %v1308 = vpop.f32.mrf.mxu0
      %v1309 = vadd.f32 %v1004, %v1308
      %v1310 = vpop.f32.mrf.mxu0
      %1311 = vmatprep.mubr.bf16.mxu0 0
      %1312 = vmatmul.mubr.bf16.gmra.mxu0 %v1164
      %v1313 = vpop.f32.mrf.mxu0
      %v1314 = vadd.f32 %v1009, %v1313
      %v1315 = vpop.f32.mrf.mxu0
      %v1316 = vpop.f32.mrf.mxu0
      %v1317 = vadd.f32 %v1012, %v1316
      %v1318 = vpop.f32.mrf.mxu0
      %1319 = vmatprep.mubr.bf16.mxu0 0
      %1320 = vmatmul.mubr.bf16.gmra.mxu0 %v1165
      %v1321 = vpop.f32.mrf.mxu0
      %v1322 = vadd.f32 %v1017, %v1321
      %v1323 = vpop.f32.mrf.mxu0
      %v1324 = vpop.f32.mrf.mxu0
      %v1325 = vadd.f32 %v1020, %v1324
      %v1326 = vpop.f32.mrf.mxu0
      %1327 = vmatprep.mubr.bf16.mxu0 0
      %1328 = vmatmul.mubr.bf16.gmra.mxu0 %v1166
      %v1329 = vpop.f32.mrf.mxu0
      %v1330 = vadd.f32 %v1025, %v1329
      %v1331 = vpop.f32.mrf.mxu0
      %v1332 = vpop.f32.mrf.mxu0
      %v1333 = vadd.f32 %v1028, %v1332
      %v1334 = vpop.f32.mrf.mxu0
      %1335 = vmatprep.mubr.bf16.mxu0 0
      %1336 = vmatmul.mubr.bf16.gmra.mxu0 %v1167
      %v1337 = vpop.f32.mrf.mxu0
      %v1338 = vadd.f32 %v1033, %v1337
      %v1339 = vpop.f32.mrf.mxu0
      %v1340 = vpop.f32.mrf.mxu0
      %v1341 = vadd.f32 %v1036, %v1340
      %v1342 = vpop.f32.mrf.mxu0
      %1343 = vmatprep.mubr.bf16.mxu0 0
      %1344 = vmatmul.mubr.bf16.gmra.mxu0 %v1168
      %v1345 = vpop.f32.mrf.mxu0
      %v1346 = vadd.f32 %v1041, %v1345
      %v1347 = vpop.f32.mrf.mxu0
      %v1348 = vpop.f32.mrf.mxu0
      %v1349 = vadd.f32 %v1044, %v1348
      %v1350 = vpop.f32.mrf.mxu0
      %1351 = vmatprep.mubr.bf16.mxu0 0
      %1352 = vmatmul.mubr.bf16.gmra.mxu0 %v1169
      %v1353 = vpop.f32.mrf.mxu0
      %v1354 = vadd.f32 %v1049, %v1353
      %v1355 = vpop.f32.mrf.mxu0
      %v1356 = vpop.f32.mrf.mxu0
      %v1357 = vadd.f32 %v1052, %v1356
      %v1358 = vpop.f32.mrf.mxu0
      %1359 = vmatprep.mubr.bf16.mxu0 0
      %1360 = vmatmul.mubr.bf16.gmra.mxu0 %v1170
      %v1361 = vpop.f32.mrf.mxu0
      %v1362 = vadd.f32 %v1057, %v1361
      %v1363 = vpop.f32.mrf.mxu0
      %v1364 = vpop.f32.mrf.mxu0
      %v1365 = vadd.f32 %v1060, %v1364
      %v1366 = vpop.f32.mrf.mxu0
      %1367 = vmatprep.mubr.bf16.mxu0 0
      %1368 = vmatmul.mubr.bf16.gmra.mxu0 %v1171
      %v1369 = vpop.f32.mrf.mxu0
      %v1370 = vadd.f32 %v1065, %v1369
      %v1371 = vpop.f32.mrf.mxu0
      %v1372 = vpop.f32.mrf.mxu0
      %v1373 = vadd.f32 %v1068, %v1372
      %v1374 = vpop.f32.mrf.mxu0
      %1375 = vmatprep.mubr.bf16.mxu0 0
      %1376 = vmatmul.mubr.bf16.gmra.mxu0 %v1172
      %v1377 = vpop.f32.mrf.mxu0
      %v1378 = vadd.f32 %v1073, %v1377
      %v1379 = vpop.f32.mrf.mxu0
      %v1380 = vpop.f32.mrf.mxu0
      %v1381 = vadd.f32 %v1076, %v1380
      %v1382 = vpop.f32.mrf.mxu0
      %1383 = vmatprep.mubr.bf16.mxu0 0
      %1384 = vmatmul.mubr.bf16.gmra.mxu0 %v1173
      %v1385 = vpop.f32.mrf.mxu0
      %v1386 = vadd.f32 %v1081, %v1385
      %v1387 = vpop.f32.mrf.mxu0
      %v1388 = vpop.f32.mrf.mxu0
      %v1389 = vadd.f32 %v1084, %v1388
      %v1390 = vpop.f32.mrf.mxu0
      %1391 = vmatprep.mubr.bf16.mxu0 0
      %1392 = vmatmul.mubr.bf16.gmra.mxu0 %v1174
      %v1393 = vpop.f32.mrf.mxu0
      %v1394 = vadd.f32 %v1089, %v1393
      %v1395 = vpop.f32.mrf.mxu0
      %v1396 = vpop.f32.mrf.mxu0
      %v1397 = vadd.f32 %v1092, %v1396
      %v1398 = vpop.f32.mrf.mxu0
      %1399 = vdwg.mxu0
      %v1400 = vld [vmem:[%s342] sm:$0xe]
      %v1401 = vld [vmem:[%s342 + $0xc] sm:$0xe]
      %v1402 = vld [vmem:[%s342 + $0x18] sm:$0xe]
      %v1403 = vld [vmem:[%s342 + $0x24] sm:$0xe]
      %v1404 = vld [vmem:[%s342 + $0x30] sm:$0xe]
      %v1405 = vld [vmem:[%s342 + $0x3c] sm:$0xe]
      %v1406 = vld [vmem:[%s342 + $0x48] sm:$0xe]
      %v1407 = vld [vmem:[%s342 + $0x54] sm:$0xe]
      %v1408 = vld [vmem:[%s342 + $0x60] sm:$0xe]
      %v1409 = vld [vmem:[%s342 + $0x6c] sm:$0xe]
      %v1410 = vld [vmem:[%s342 + $0x78] sm:$0xe]
      %v1411 = vld [vmem:[%s342 + $0x84] sm:$0xe]
      %v1412 = vld [vmem:[%s342 + $0x90] sm:$0xe]
      %v1413 = vld [vmem:[%s342 + $0x9c] sm:$0xe]
      %v1414 = vld [vmem:[%s342 + $0xa8] sm:$0xe]
      %v1415 = vld [vmem:[%s342 + $0xb4] sm:$0xe]
      %vm1448 = vcmask 1042432
      %vm1449 = vcmask 1046532
      %vm1450 = vmor %vm1448, %vm1449
      %v1451 = vrot.slane %v1400, 5
      %v1452 = vrot.slane %v1451, 4
      %v1453 = vrot.slane %v355, 5
      %v1454 = vsel %vm1450, %v1452, %v1453
      %v1455 = vrot.slane %v1453, 4
      %v1456 = vrot.slane %v402, 5
      %v1457 = vsel %vm1450, %v1455, %v1456
      %v1458 = vrot.slane %v1401, 5
      %v1459 = vrot.slane %v1458, 4
      %v1460 = vrot.slane %v357, 5
      %v1461 = vsel %vm1450, %v1459, %v1460
      %v1462 = vrot.slane %v1460, 4
      %v1463 = vrot.slane %v403, 5
      %v1464 = vsel %vm1450, %v1462, %v1463
      %v1465 = vrot.slane %v1402, 5
      %v1466 = vrot.slane %v1465, 4
      %v1467 = vrot.slane %v359, 5
      %v1468 = vsel %vm1450, %v1466, %v1467
      %v1469 = vrot.slane %v1467, 4
      %v1470 = vrot.slane %v404, 5
      %v1471 = vsel %vm1450, %v1469, %v1470
      %v1472 = vrot.slane %v1403, 5
      %v1473 = vrot.slane %v1472, 4
      %v1474 = vrot.slane %v361, 5
      %v1475 = vsel %vm1450, %v1473, %v1474
      %v1476 = vrot.slane %v1474, 4
      %v1477 = vrot.slane %v405, 5
      %v1478 = vsel %vm1450, %v1476, %v1477
      %v1479 = vrot.slane %v1404, 5
      %v1480 = vrot.slane %v1479, 4
      %v1481 = vrot.slane %v363, 5
      %v1482 = vsel %vm1450, %v1480, %v1481
      %v1483 = vrot.slane %v1481, 4
      %v1484 = vrot.slane %v406, 5
      %v1485 = vsel %vm1450, %v1483, %v1484
      %v1486 = vrot.slane %v1405, 5
      %v1487 = vrot.slane %v1486, 4
      %v1488 = vrot.slane %v365, 5
      %v1489 = vsel %vm1450, %v1487, %v1488
      %v1490 = vrot.slane %v1488, 4
      %v1491 = vrot.slane %v407, 5
      %v1492 = vsel %vm1450, %v1490, %v1491
      %v1493 = vrot.slane %v1406, 5
      %v1494 = vrot.slane %v1493, 4
      %v1495 = vrot.slane %v367, 5
      %v1496 = vsel %vm1450, %v1494, %v1495
      %v1497 = vrot.slane %v1495, 4
      %v1498 = vrot.slane %v408, 5
      %v1499 = vsel %vm1450, %v1497, %v1498
      %v1500 = vrot.slane %v1407, 5
      %v1501 = vrot.slane %v1500, 4
      %v1502 = vrot.slane %v369, 5
      %v1503 = vsel %vm1450, %v1501, %v1502
      %v1504 = vrot.slane %v1502, 4
      %v1505 = vrot.slane %v409, 5
      %v1506 = vsel %vm1450, %v1504, %v1505
      %v1507 = vrot.slane %v1408, 5
      %v1508 = vrot.slane %v1507, 4
      %v1509 = vrot.slane %v371, 5
      %v1510 = vsel %vm1450, %v1508, %v1509
      %v1511 = vrot.slane %v1509, 4
      %v1512 = vrot.slane %v410, 5
      %v1513 = vsel %vm1450, %v1511, %v1512
      %v1514 = vrot.slane %v1409, 5
      %v1515 = vrot.slane %v1514, 4
      %v1516 = vrot.slane %v373, 5
      %v1517 = vsel %vm1450, %v1515, %v1516
      %v1518 = vrot.slane %v1516, 4
      %v1519 = vrot.slane %v411, 5
      %v1520 = vsel %vm1450, %v1518, %v1519
      %v1521 = vrot.slane %v1410, 5
      %v1522 = vrot.slane %v1521, 4
      %v1523 = vrot.slane %v375, 5
      %v1524 = vsel %vm1450, %v1522, %v1523
      %v1525 = vrot.slane %v1523, 4
      %v1526 = vrot.slane %v412, 5
      %v1527 = vsel %vm1450, %v1525, %v1526
      %v1528 = vrot.slane %v1411, 5
      %v1529 = vrot.slane %v1528, 4
      %v1530 = vrot.slane %v377, 5
      %v1531 = vsel %vm1450, %v1529, %v1530
      %v1532 = vrot.slane %v1530, 4
      %v1533 = vrot.slane %v413, 5
      %v1534 = vsel %vm1450, %v1532, %v1533
      %v1535 = vrot.slane %v1412, 5
      %v1536 = vrot.slane %v1535, 4
      %v1537 = vrot.slane %v379, 5
      %v1538 = vsel %vm1450, %v1536, %v1537
      %v1539 = vrot.slane %v1537, 4
      %v1540 = vrot.slane %v414, 5
      %v1541 = vsel %vm1450, %v1539, %v1540
      %v1542 = vrot.slane %v1413, 5
      %v1543 = vrot.slane %v1542, 4
      %v1544 = vrot.slane %v381, 5
      %v1545 = vsel %vm1450, %v1543, %v1544
      %v1546 = vrot.slane %v1544, 4
      %v1547 = vrot.slane %v415, 5
      %v1548 = vsel %vm1450, %v1546, %v1547
      %v1549 = vrot.slane %v1414, 5
      %v1550 = vrot.slane %v1549, 4
      %v1551 = vrot.slane %v383, 5
      %v1552 = vsel %vm1450, %v1550, %v1551
      %v1553 = vrot.slane %v1551, 4
      %v1554 = vrot.slane %v416, 5
      %v1555 = vsel %vm1450, %v1553, %v1554
      %v1556 = vrot.slane %v1415, 5
      %v1557 = vrot.slane %v1556, 4
      %v1558 = vrot.slane %v385, 5
      %v1559 = vsel %vm1450, %v1557, %v1558
      %v1560 = vrot.slane %v1558, 4
      %v1561 = vrot.slane %v417, 5
      %v1562 = vsel %vm1450, %v1560, %v1561
      %s1563 = scalar_lea.vmem %s2, 128
      %v1564 = vld [vmem:[%s1563] sm:$0xf]
      %v1565 = vld [vmem:[%s1563 + $0x4] sm:$0xf]
      %v1566 = vld [vmem:[%s1563 + $0x8] sm:$0xf]
      %v1567 = vld [vmem:[%s1563 + $0xc] sm:$0xf]
      %v1568 = vld [vmem:[%s1563 + $0x10] sm:$0xf]
      %v1569 = vld [vmem:[%s1563 + $0x14] sm:$0xf]
      %v1570 = vld [vmem:[%s1563 + $0x18] sm:$0xf]
      %v1571 = vld [vmem:[%s1563 + $0x1c] sm:$0xf]
      %v1572 = vld [vmem:[%s1563 + $0x20] sm:$0xf]
      %v1573 = vld [vmem:[%s1563 + $0x24] sm:$0xf]
      %v1574 = vld [vmem:[%s1563 + $0x28] sm:$0xf]
      %v1575 = vld [vmem:[%s1563 + $0x2c] sm:$0xf]
      %v1576 = vld [vmem:[%s1563 + $0x30] sm:$0xf]
      %v1577 = vld [vmem:[%s1563 + $0x34] sm:$0xf]
      %v1578 = vld [vmem:[%s1563 + $0x38] sm:$0xf]
      %v1579 = vld [vmem:[%s1563 + $0x3c] sm:$0xf]
      %v1580 = vunpack.c.l.b16 %v1454
      %v1581 = vunpack.c.l.b16 %v1457
      %v1582 = vunpack.c.l.b16 %v1461
      %v1583 = vunpack.c.l.b16 %v1464
      %v1584 = vunpack.c.l.b16 %v1468
      %v1585 = vunpack.c.l.b16 %v1471
      %v1586 = vunpack.c.l.b16 %v1475
      %v1587 = vunpack.c.l.b16 %v1478
      %v1588 = vunpack.c.l.b16 %v1482
      %v1589 = vunpack.c.l.b16 %v1485
      %v1590 = vunpack.c.l.b16 %v1489
      %v1591 = vunpack.c.l.b16 %v1492
      %v1592 = vunpack.c.l.b16 %v1496
      %v1593 = vunpack.c.l.b16 %v1499
      %v1594 = vunpack.c.l.b16 %v1503
      %v1595 = vunpack.c.l.b16 %v1506
      %v1596 = vunpack.c.l.b16 %v1510
      %v1597 = vunpack.c.l.b16 %v1513
      %v1598 = vunpack.c.l.b16 %v1517
      %v1599 = vunpack.c.l.b16 %v1520
      %v1600 = vunpack.c.l.b16 %v1524
      %v1601 = vunpack.c.l.b16 %v1527
      %v1602 = vunpack.c.l.b16 %v1531
      %v1603 = vunpack.c.l.b16 %v1534
      %v1604 = vunpack.c.l.b16 %v1538
      %v1605 = vunpack.c.l.b16 %v1541
      %v1606 = vunpack.c.l.b16 %v1545
      %v1607 = vunpack.c.l.b16 %v1548
      %v1608 = vunpack.c.l.b16 %v1552
      %v1609 = vunpack.c.l.b16 %v1555
      %v1610 = vunpack.c.l.b16 %v1559
      %v1611 = vunpack.c.l.b16 %v1562
      %v1612 = vpack.c.b16 %v1581, %v1580
      %v1613 = vpack.c.b16 %v1583, %v1582
      %v1614 = vpack.c.b16 %v1585, %v1584
      %v1615 = vpack.c.b16 %v1587, %v1586
      %v1616 = vpack.c.b16 %v1589, %v1588
      %v1617 = vpack.c.b16 %v1591, %v1590
      %v1618 = vpack.c.b16 %v1593, %v1592
      %v1619 = vpack.c.b16 %v1595, %v1594
      %v1620 = vpack.c.b16 %v1597, %v1596
      %v1621 = vpack.c.b16 %v1599, %v1598
      %v1622 = vpack.c.b16 %v1601, %v1600
      %v1623 = vpack.c.b16 %v1603, %v1602
      %v1624 = vpack.c.b16 %v1605, %v1604
      %v1625 = vpack.c.b16 %v1607, %v1606
      %v1626 = vpack.c.b16 %v1609, %v1608
      %v1627 = vpack.c.b16 %v1611, %v1610
      %v1660 = vunpack.c.l.b16 %v1564
      %v1661 = vunpack.c.l.b16 %v1565
      %v1662 = vunpack.c.l.b16 %v1566
      %v1663 = vunpack.c.l.b16 %v1567
      %v1664 = vunpack.c.l.b16 %v1568
      %v1665 = vunpack.c.l.b16 %v1569
      %v1666 = vunpack.c.l.b16 %v1570
      %v1667 = vunpack.c.l.b16 %v1571
      %v1668 = vunpack.c.l.b16 %v1572
      %v1669 = vunpack.c.l.b16 %v1573
      %v1670 = vunpack.c.l.b16 %v1574
      %v1671 = vunpack.c.l.b16 %v1575
      %v1672 = vunpack.c.l.b16 %v1576
      %v1673 = vunpack.c.l.b16 %v1577
      %v1674 = vunpack.c.l.b16 %v1578
      %v1675 = vunpack.c.l.b16 %v1579
      %v1676 = vpack.c.b16 %v1661, %v1660
      %v1677 = vpack.c.b16 %v1663, %v1662
      %v1678 = vpack.c.b16 %v1665, %v1664
      %v1679 = vpack.c.b16 %v1667, %v1666
      %v1680 = vpack.c.b16 %v1669, %v1668
      %v1681 = vpack.c.b16 %v1671, %v1670
      %v1682 = vpack.c.b16 %v1673, %v1672
      %v1683 = vpack.c.b16 %v1675, %v1674
      %1692 = vmatprep.subr.bf16.mxu0 0
      %1693 = vmatpush1.bf16.msra.mxu0 %v1683
      %1694 = vmatprep.subr.bf16.mxu0 0
      %1695 = vmatpush1.bf16.msra.mxu0 %v1682
      %1696 = vmatprep.subr.bf16.mxu0 0
      %1697 = vmatpush1.bf16.msra.mxu0 %v1681
      %1698 = vmatprep.subr.bf16.mxu0 0
      %1699 = vmatpush1.bf16.msra.mxu0 %v1680
      %1700 = vmatprep.subr.bf16.mxu0 0
      %1701 = vmatpush1.bf16.msra.mxu0 %v1679
      %1702 = vmatprep.subr.bf16.mxu0 0
      %1703 = vmatpush1.bf16.msra.mxu0 %v1678
      %1704 = vmatprep.subr.bf16.mxu0 0
      %1705 = vmatpush1.bf16.msra.mxu0 %v1677
      %1706 = vmatprep.subr.bf16.mxu0 0
      %1707 = vmatpush1.bf16.msra.mxu0 %v1676
      %1708 = vmatprep.subr.bf16.mxu0 0
      %1709 = vmatpush2.bf16.msra.mxu0 0
      %1710 = vmatprep.subr.bf16.mxu0 0
      %1711 = vmatpush2.bf16.msra.mxu0 0
      %1712 = vmatprep.subr.bf16.mxu0 0
      %1713 = vmatpush2.bf16.msra.mxu0 0
      %1714 = vmatprep.subr.bf16.mxu0 0
      %1715 = vmatpush2.bf16.msra.mxu0 0
      %1716 = vmatprep.subr.bf16.mxu0 0
      %1717 = vmatpush2.bf16.msra.mxu0 0
      %1718 = vmatprep.subr.bf16.mxu0 0
      %1719 = vmatpush2.bf16.msra.mxu0 0
      %1720 = vmatprep.subr.bf16.mxu0 0
      %1721 = vmatpush2.bf16.msra.mxu0 0
      %1722 = vmatprep.subr.bf16.mxu0 0
      %1723 = vmatpush2.bf16.msra.mxu0 0
      %1724 = vmatprep.mubr.bf16.mxu0 0
      %1725 = vmatmul.mubr.bf16.gmra.mxu0 %v1612
      %v1726 = vpop.f32.mrf.mxu0
      %v1727 = vadd.f32 0.0, %v1726
      %v1728 = vpop.f32.mrf.mxu0
      %v1729 = vpop.f32.mrf.mxu0
      %v1730 = vadd.f32 0.0, %v1729
      %v1731 = vpop.f32.mrf.mxu0
      %1732 = vmatprep.mubr.bf16.mxu0 0
      %1733 = vmatmul.mubr.bf16.gmra.mxu0 %v1613
      %v1734 = vpop.f32.mrf.mxu0
      %v1735 = vadd.f32 0.0, %v1734
      %v1736 = vpop.f32.mrf.mxu0
      %v1737 = vpop.f32.mrf.mxu0
      %v1738 = vadd.f32 0.0, %v1737
      %v1739 = vpop.f32.mrf.mxu0
      %1740 = vmatprep.mubr.bf16.mxu0 0
      %1741 = vmatmul.mubr.bf16.gmra.mxu0 %v1614
      %v1742 = vpop.f32.mrf.mxu0
      %v1743 = vadd.f32 0.0, %v1742
      %v1744 = vpop.f32.mrf.mxu0
      %v1745 = vpop.f32.mrf.mxu0
      %v1746 = vadd.f32 0.0, %v1745
      %v1747 = vpop.f32.mrf.mxu0
      %1748 = vmatprep.mubr.bf16.mxu0 0
      %1749 = vmatmul.mubr.bf16.gmra.mxu0 %v1615
      %v1750 = vpop.f32.mrf.mxu0
      %v1751 = vadd.f32 0.0, %v1750
      %v1752 = vpop.f32.mrf.mxu0
      %v1753 = vpop.f32.mrf.mxu0
      %v1754 = vadd.f32 0.0, %v1753
      %v1755 = vpop.f32.mrf.mxu0
      %1756 = vmatprep.mubr.bf16.mxu0 0
      %1757 = vmatmul.mubr.bf16.gmra.mxu0 %v1616
      %v1758 = vpop.f32.mrf.mxu0
      %v1759 = vadd.f32 0.0, %v1758
      %v1760 = vpop.f32.mrf.mxu0
      %v1761 = vpop.f32.mrf.mxu0
      %v1762 = vadd.f32 0.0, %v1761
      %v1763 = vpop.f32.mrf.mxu0
      %1764 = vmatprep.mubr.bf16.mxu0 0
      %1765 = vmatmul.mubr.bf16.gmra.mxu0 %v1617
      %v1766 = vpop.f32.mrf.mxu0
      %v1767 = vadd.f32 0.0, %v1766
      %v1768 = vpop.f32.mrf.mxu0
      %v1769 = vpop.f32.mrf.mxu0
      %v1770 = vadd.f32 0.0, %v1769
      %v1771 = vpop.f32.mrf.mxu0
      %1772 = vmatprep.mubr.bf16.mxu0 0
      %1773 = vmatmul.mubr.bf16.gmra.mxu0 %v1618
      %v1774 = vpop.f32.mrf.mxu0
      %v1775 = vadd.f32 0.0, %v1774
      %v1776 = vpop.f32.mrf.mxu0
      %v1777 = vpop.f32.mrf.mxu0
      %v1778 = vadd.f32 0.0, %v1777
      %v1779 = vpop.f32.mrf.mxu0
      %1780 = vmatprep.mubr.bf16.mxu0 0
      %1781 = vmatmul.mubr.bf16.gmra.mxu0 %v1619
      %v1782 = vpop.f32.mrf.mxu0
      %v1783 = vadd.f32 0.0, %v1782
      %v1784 = vpop.f32.mrf.mxu0
      %v1785 = vpop.f32.mrf.mxu0
      %v1786 = vadd.f32 0.0, %v1785
      %v1787 = vpop.f32.mrf.mxu0
      %1788 = vmatprep.mubr.bf16.mxu0 0
      %1789 = vmatmul.mubr.bf16.gmra.mxu0 %v1620
      %v1790 = vpop.f32.mrf.mxu0
      %v1791 = vadd.f32 0.0, %v1790
      %v1792 = vpop.f32.mrf.mxu0
      %v1793 = vpop.f32.mrf.mxu0
      %v1794 = vadd.f32 0.0, %v1793
      %v1795 = vpop.f32.mrf.mxu0
      %1796 = vmatprep.mubr.bf16.mxu0 0
      %1797 = vmatmul.mubr.bf16.gmra.mxu0 %v1621
      %v1798 = vpop.f32.mrf.mxu0
      %v1799 = vadd.f32 0.0, %v1798
      %v1800 = vpop.f32.mrf.mxu0
      %v1801 = vpop.f32.mrf.mxu0
      %v1802 = vadd.f32 0.0, %v1801
      %v1803 = vpop.f32.mrf.mxu0
      %1804 = vmatprep.mubr.bf16.mxu0 0
      %1805 = vmatmul.mubr.bf16.gmra.mxu0 %v1622
      %v1806 = vpop.f32.mrf.mxu0
      %v1807 = vadd.f32 0.0, %v1806
      %v1808 = vpop.f32.mrf.mxu0
      %v1809 = vpop.f32.mrf.mxu0
      %v1810 = vadd.f32 0.0, %v1809
      %v1811 = vpop.f32.mrf.mxu0
      %1812 = vmatprep.mubr.bf16.mxu0 0
      %1813 = vmatmul.mubr.bf16.gmra.mxu0 %v1623
      %v1814 = vpop.f32.mrf.mxu0
      %v1815 = vadd.f32 0.0, %v1814
      %v1816 = vpop.f32.mrf.mxu0
      %v1817 = vpop.f32.mrf.mxu0
      %v1818 = vadd.f32 0.0, %v1817
      %v1819 = vpop.f32.mrf.mxu0
      %1820 = vmatprep.mubr.bf16.mxu0 0
      %1821 = vmatmul.mubr.bf16.gmra.mxu0 %v1624
      %v1822 = vpop.f32.mrf.mxu0
      %v1823 = vadd.f32 0.0, %v1822
      %v1824 = vpop.f32.mrf.mxu0
      %v1825 = vpop.f32.mrf.mxu0
      %v1826 = vadd.f32 0.0, %v1825
      %v1827 = vpop.f32.mrf.mxu0
      %1828 = vmatprep.mubr.bf16.mxu0 0
      %1829 = vmatmul.mubr.bf16.gmra.mxu0 %v1625
      %v1830 = vpop.f32.mrf.mxu0
      %v1831 = vadd.f32 0.0, %v1830
      %v1832 = vpop.f32.mrf.mxu0
      %v1833 = vpop.f32.mrf.mxu0
      %v1834 = vadd.f32 0.0, %v1833
      %v1835 = vpop.f32.mrf.mxu0
      %1836 = vmatprep.mubr.bf16.mxu0 0
      %1837 = vmatmul.mubr.bf16.gmra.mxu0 %v1626
      %v1838 = vpop.f32.mrf.mxu0
      %v1839 = vadd.f32 0.0, %v1838
      %v1840 = vpop.f32.mrf.mxu0
      %v1841 = vpop.f32.mrf.mxu0
      %v1842 = vadd.f32 0.0, %v1841
      %v1843 = vpop.f32.mrf.mxu0
      %1844 = vmatprep.mubr.bf16.mxu0 0
      %1845 = vmatmul.mubr.bf16.gmra.mxu0 %v1627
      %v1846 = vpop.f32.mrf.mxu0
      %v1847 = vadd.f32 0.0, %v1846
      %v1848 = vpop.f32.mrf.mxu0
      %v1849 = vpop.f32.mrf.mxu0
      %v1850 = vadd.f32 0.0, %v1849
      %v1851 = vpop.f32.mrf.mxu0
      %1852 = vdwg.mxu0
      %v1853 = vadd.f32 %v1274, %v1727
      %v1854 = vadd.f32 %v1277, %v1730
      %v1855 = vadd.f32 %v1282, %v1735
      %v1856 = vadd.f32 %v1285, %v1738
      %v1857 = vadd.f32 %v1290, %v1743
      %v1858 = vadd.f32 %v1293, %v1746
      %v1859 = vadd.f32 %v1298, %v1751
      %v1860 = vadd.f32 %v1301, %v1754
      %v1861 = vadd.f32 %v1306, %v1759
      %v1862 = vadd.f32 %v1309, %v1762
      %v1863 = vadd.f32 %v1314, %v1767
      %v1864 = vadd.f32 %v1317, %v1770
      %v1865 = vadd.f32 %v1322, %v1775
      %v1866 = vadd.f32 %v1325, %v1778
      %v1867 = vadd.f32 %v1330, %v1783
      %v1868 = vadd.f32 %v1333, %v1786
      %v1869 = vadd.f32 %v1338, %v1791
      %v1870 = vadd.f32 %v1341, %v1794
      %v1871 = vadd.f32 %v1346, %v1799
      %v1872 = vadd.f32 %v1349, %v1802
      %v1873 = vadd.f32 %v1354, %v1807
      %v1874 = vadd.f32 %v1357, %v1810
      %v1875 = vadd.f32 %v1362, %v1815
      %v1876 = vadd.f32 %v1365, %v1818
      %v1877 = vadd.f32 %v1370, %v1823
      %v1878 = vadd.f32 %v1373, %v1826
      %v1879 = vadd.f32 %v1378, %v1831
      %v1880 = vadd.f32 %v1381, %v1834
      %v1881 = vadd.f32 %v1386, %v1839
      %v1882 = vadd.f32 %v1389, %v1842
      %v1883 = vadd.f32 %v1394, %v1847
      %v1884 = vadd.f32 %v1397, %v1850
      %s1885 = scalar_lea.vmem %s342, 12
      %v1886 = vld [vmem:[%s1885] sm:$0xf]
      %v1887 = vld [vmem:[%s1885 + $0x4] sm:$0xf]
      %v1888 = vld [vmem:[%s1885 + $0xc] sm:$0xf]
      %v1889 = vld [vmem:[%s1885 + $0x10] sm:$0xf]
      %v1890 = vld [vmem:[%s1885 + $0x18] sm:$0xf]
      %v1891 = vld [vmem:[%s1885 + $0x1c] sm:$0xf]
      %v1892 = vld [vmem:[%s1885 + $0x24] sm:$0xf]
      %v1893 = vld [vmem:[%s1885 + $0x28] sm:$0xf]
      %v1894 = vld [vmem:[%s1885 + $0x30] sm:$0xf]
      %v1895 = vld [vmem:[%s1885 + $0x34] sm:$0xf]
      %v1896 = vld [vmem:[%s1885 + $0x3c] sm:$0xf]
      %v1897 = vld [vmem:[%s1885 + $0x40] sm:$0xf]
      %v1898 = vld [vmem:[%s1885 + $0x48] sm:$0xf]
      %v1899 = vld [vmem:[%s1885 + $0x4c] sm:$0xf]
      %v1900 = vld [vmem:[%s1885 + $0x54] sm:$0xf]
      %v1901 = vld [vmem:[%s1885 + $0x58] sm:$0xf]
      %v1902 = vld [vmem:[%s1885 + $0x60] sm:$0xf]
      %v1903 = vld [vmem:[%s1885 + $0x64] sm:$0xf]
      %v1904 = vld [vmem:[%s1885 + $0x6c] sm:$0xf]
      %v1905 = vld [vmem:[%s1885 + $0x70] sm:$0xf]
      %v1906 = vld [vmem:[%s1885 + $0x78] sm:$0xf]
      %v1907 = vld [vmem:[%s1885 + $0x7c] sm:$0xf]
      %v1908 = vld [vmem:[%s1885 + $0x84] sm:$0xf]
      %v1909 = vld [vmem:[%s1885 + $0x88] sm:$0xf]
      %v1910 = vld [vmem:[%s1885 + $0x90] sm:$0xf]
      %v1911 = vld [vmem:[%s1885 + $0x94] sm:$0xf]
      %v1912 = vld [vmem:[%s1885 + $0x9c] sm:$0xf]
      %v1913 = vld [vmem:[%s1885 + $0xa0] sm:$0xf]
      %v1914 = vld [vmem:[%s1885 + $0xa8] sm:$0xf]
      %v1915 = vld [vmem:[%s1885 + $0xac] sm:$0xf]
      %v1916 = vld [vmem:[%s1885 + $0xb4] sm:$0xf]
      %v1917 = vld [vmem:[%s1885 + $0xb8] sm:$0xf]
      %s1918 = scalar_lea.vmem %s2, 192
      %v1919 = vld [vmem:[%s1918] sm:$0xf]
      %v1920 = vld [vmem:[%s1918 + $0x4] sm:$0xf]
      %v1921 = vld [vmem:[%s1918 + $0x8] sm:$0xf]
      %v1922 = vld [vmem:[%s1918 + $0xc] sm:$0xf]
      %v1923 = vld [vmem:[%s1918 + $0x10] sm:$0xf]
      %v1924 = vld [vmem:[%s1918 + $0x14] sm:$0xf]
      %v1925 = vld [vmem:[%s1918 + $0x18] sm:$0xf]
      %v1926 = vld [vmem:[%s1918 + $0x1c] sm:$0xf]
      %v1927 = vld [vmem:[%s1918 + $0x20] sm:$0xf]
      %v1928 = vld [vmem:[%s1918 + $0x24] sm:$0xf]
      %v1929 = vld [vmem:[%s1918 + $0x28] sm:$0xf]
      %v1930 = vld [vmem:[%s1918 + $0x2c] sm:$0xf]
      %v1931 = vld [vmem:[%s1918 + $0x30] sm:$0xf]
      %v1932 = vld [vmem:[%s1918 + $0x34] sm:$0xf]
      %v1933 = vld [vmem:[%s1918 + $0x38] sm:$0xf]
      %v1934 = vld [vmem:[%s1918 + $0x3c] sm:$0xf]
      %v1967 = vunpack.c.l.b16 %v1886
      %v1968 = vunpack.c.l.b16 %v1887
      %v1969 = vunpack.c.l.b16 %v1888
      %v1970 = vunpack.c.l.b16 %v1889
      %v1971 = vunpack.c.l.b16 %v1890
      %v1972 = vunpack.c.l.b16 %v1891
      %v1973 = vunpack.c.l.b16 %v1892
      %v1974 = vunpack.c.l.b16 %v1893
      %v1975 = vunpack.c.l.b16 %v1894
      %v1976 = vunpack.c.l.b16 %v1895
      %v1977 = vunpack.c.l.b16 %v1896
      %v1978 = vunpack.c.l.b16 %v1897
      %v1979 = vunpack.c.l.b16 %v1898
      %v1980 = vunpack.c.l.b16 %v1899
      %v1981 = vunpack.c.l.b16 %v1900
      %v1982 = vunpack.c.l.b16 %v1901
      %v1983 = vunpack.c.l.b16 %v1902
      %v1984 = vunpack.c.l.b16 %v1903
      %v1985 = vunpack.c.l.b16 %v1904
      %v1986 = vunpack.c.l.b16 %v1905
      %v1987 = vunpack.c.l.b16 %v1906
      %v1988 = vunpack.c.l.b16 %v1907
      %v1989 = vunpack.c.l.b16 %v1908
      %v1990 = vunpack.c.l.b16 %v1909
      %v1991 = vunpack.c.l.b16 %v1910
      %v1992 = vunpack.c.l.b16 %v1911
      %v1993 = vunpack.c.l.b16 %v1912
      %v1994 = vunpack.c.l.b16 %v1913
      %v1995 = vunpack.c.l.b16 %v1914
      %v1996 = vunpack.c.l.b16 %v1915
      %v1997 = vunpack.c.l.b16 %v1916
      %v1998 = vunpack.c.l.b16 %v1917
      %v1999 = vpack.c.b16 %v1968, %v1967
      %v2000 = vpack.c.b16 %v1970, %v1969
      %v2001 = vpack.c.b16 %v1972, %v1971
      %v2002 = vpack.c.b16 %v1974, %v1973
      %v2003 = vpack.c.b16 %v1976, %v1975
      %v2004 = vpack.c.b16 %v1978, %v1977
      %v2005 = vpack.c.b16 %v1980, %v1979
      %v2006 = vpack.c.b16 %v1982, %v1981
      %v2007 = vpack.c.b16 %v1984, %v1983
      %v2008 = vpack.c.b16 %v1986, %v1985
      %v2009 = vpack.c.b16 %v1988, %v1987
      %v2010 = vpack.c.b16 %v1990, %v1989
      %v2011 = vpack.c.b16 %v1992, %v1991
      %v2012 = vpack.c.b16 %v1994, %v1993
      %v2013 = vpack.c.b16 %v1996, %v1995
      %v2014 = vpack.c.b16 %v1998, %v1997
      %v2047 = vunpack.c.l.b16 %v1919
      %v2048 = vunpack.c.l.b16 %v1920
      %v2049 = vunpack.c.l.b16 %v1921
      %v2050 = vunpack.c.l.b16 %v1922
      %v2051 = vunpack.c.l.b16 %v1923
      %v2052 = vunpack.c.l.b16 %v1924
      %v2053 = vunpack.c.l.b16 %v1925
      %v2054 = vunpack.c.l.b16 %v1926
      %v2055 = vunpack.c.l.b16 %v1927
      %v2056 = vunpack.c.l.b16 %v1928
      %v2057 = vunpack.c.l.b16 %v1929
      %v2058 = vunpack.c.l.b16 %v1930
      %v2059 = vunpack.c.l.b16 %v1931
      %v2060 = vunpack.c.l.b16 %v1932
      %v2061 = vunpack.c.l.b16 %v1933
      %v2062 = vunpack.c.l.b16 %v1934
      %v2063 = vpack.c.b16 %v2048, %v2047
      %v2064 = vpack.c.b16 %v2050, %v2049
      %v2065 = vpack.c.b16 %v2052, %v2051
      %v2066 = vpack.c.b16 %v2054, %v2053
      %v2067 = vpack.c.b16 %v2056, %v2055
      %v2068 = vpack.c.b16 %v2058, %v2057
      %v2069 = vpack.c.b16 %v2060, %v2059
      %v2070 = vpack.c.b16 %v2062, %v2061
      %2079 = vmatprep.subr.bf16.mxu0 0
      %2080 = vmatpush1.bf16.msra.mxu0 %v2070
      %2081 = vmatprep.subr.bf16.mxu0 0
      %2082 = vmatpush1.bf16.msra.mxu0 %v2069
      %2083 = vmatprep.subr.bf16.mxu0 0
      %2084 = vmatpush1.bf16.msra.mxu0 %v2068
      %2085 = vmatprep.subr.bf16.mxu0 0
      %2086 = vmatpush1.bf16.msra.mxu0 %v2067
      %2087 = vmatprep.subr.bf16.mxu0 0
      %2088 = vmatpush1.bf16.msra.mxu0 %v2066
      %2089 = vmatprep.subr.bf16.mxu0 0
      %2090 = vmatpush1.bf16.msra.mxu0 %v2065
      %2091 = vmatprep.subr.bf16.mxu0 0
      %2092 = vmatpush1.bf16.msra.mxu0 %v2064
      %2093 = vmatprep.subr.bf16.mxu0 0
      %2094 = vmatpush1.bf16.msra.mxu0 %v2063
      %2095 = vmatprep.subr.bf16.mxu0 0
      %2096 = vmatpush2.bf16.msra.mxu0 0
      %2097 = vmatprep.subr.bf16.mxu0 0
      %2098 = vmatpush2.bf16.msra.mxu0 0
      %2099 = vmatprep.subr.bf16.mxu0 0
      %2100 = vmatpush2.bf16.msra.mxu0 0
      %2101 = vmatprep.subr.bf16.mxu0 0
      %2102 = vmatpush2.bf16.msra.mxu0 0
      %2103 = vmatprep.subr.bf16.mxu0 0
      %2104 = vmatpush2.bf16.msra.mxu0 0
      %2105 = vmatprep.subr.bf16.mxu0 0
      %2106 = vmatpush2.bf16.msra.mxu0 0
      %2107 = vmatprep.subr.bf16.mxu0 0
      %2108 = vmatpush2.bf16.msra.mxu0 0
      %2109 = vmatprep.subr.bf16.mxu0 0
      %2110 = vmatpush2.bf16.msra.mxu0 0
      %2111 = vmatprep.mubr.bf16.mxu0 0
      %2112 = vmatmul.mubr.bf16.gmra.mxu0 %v1999
      %v2113 = vpop.f32.mrf.mxu0
      %v2114 = vadd.f32 0.0, %v2113
      %v2115 = vpop.f32.mrf.mxu0
      %v2116 = vpop.f32.mrf.mxu0
      %v2117 = vadd.f32 0.0, %v2116
      %v2118 = vpop.f32.mrf.mxu0
      %2119 = vmatprep.mubr.bf16.mxu0 0
      %2120 = vmatmul.mubr.bf16.gmra.mxu0 %v2000
      %v2121 = vpop.f32.mrf.mxu0
      %v2122 = vadd.f32 0.0, %v2121
      %v2123 = vpop.f32.mrf.mxu0
      %v2124 = vpop.f32.mrf.mxu0
      %v2125 = vadd.f32 0.0, %v2124
      %v2126 = vpop.f32.mrf.mxu0
      %2127 = vmatprep.mubr.bf16.mxu0 0
      %2128 = vmatmul.mubr.bf16.gmra.mxu0 %v2001
      %v2129 = vpop.f32.mrf.mxu0
      %v2130 = vadd.f32 0.0, %v2129
      %v2131 = vpop.f32.mrf.mxu0
      %v2132 = vpop.f32.mrf.mxu0
      %v2133 = vadd.f32 0.0, %v2132
      %v2134 = vpop.f32.mrf.mxu0
      %2135 = vmatprep.mubr.bf16.mxu0 0
      %2136 = vmatmul.mubr.bf16.gmra.mxu0 %v2002
      %v2137 = vpop.f32.mrf.mxu0
      %v2138 = vadd.f32 0.0, %v2137
      %v2139 = vpop.f32.mrf.mxu0
      %v2140 = vpop.f32.mrf.mxu0
      %v2141 = vadd.f32 0.0, %v2140
      %v2142 = vpop.f32.mrf.mxu0
      %2143 = vmatprep.mubr.bf16.mxu0 0
      %2144 = vmatmul.mubr.bf16.gmra.mxu0 %v2003
      %v2145 = vpop.f32.mrf.mxu0
      %v2146 = vadd.f32 0.0, %v2145
      %v2147 = vpop.f32.mrf.mxu0
      %v2148 = vpop.f32.mrf.mxu0
      %v2149 = vadd.f32 0.0, %v2148
      %v2150 = vpop.f32.mrf.mxu0
      %2151 = vmatprep.mubr.bf16.mxu0 0
      %2152 = vmatmul.mubr.bf16.gmra.mxu0 %v2004
      %v2153 = vpop.f32.mrf.mxu0
      %v2154 = vadd.f32 0.0, %v2153
      %v2155 = vpop.f32.mrf.mxu0
      %v2156 = vpop.f32.mrf.mxu0
      %v2157 = vadd.f32 0.0, %v2156
      %v2158 = vpop.f32.mrf.mxu0
      %2159 = vmatprep.mubr.bf16.mxu0 0
      %2160 = vmatmul.mubr.bf16.gmra.mxu0 %v2005
      %v2161 = vpop.f32.mrf.mxu0
      %v2162 = vadd.f32 0.0, %v2161
      %v2163 = vpop.f32.mrf.mxu0
      %v2164 = vpop.f32.mrf.mxu0
      %v2165 = vadd.f32 0.0, %v2164
      %v2166 = vpop.f32.mrf.mxu0
      %2167 = vmatprep.mubr.bf16.mxu0 0
      %2168 = vmatmul.mubr.bf16.gmra.mxu0 %v2006
      %v2169 = vpop.f32.mrf.mxu0
      %v2170 = vadd.f32 0.0, %v2169
      %v2171 = vpop.f32.mrf.mxu0
      %v2172 = vpop.f32.mrf.mxu0
      %v2173 = vadd.f32 0.0, %v2172
      %v2174 = vpop.f32.mrf.mxu0
      %2175 = vmatprep.mubr.bf16.mxu0 0
      %2176 = vmatmul.mubr.bf16.gmra.mxu0 %v2007
      %v2177 = vpop.f32.mrf.mxu0
      %v2178 = vadd.f32 0.0, %v2177
      %v2179 = vpop.f32.mrf.mxu0
      %v2180 = vpop.f32.mrf.mxu0
      %v2181 = vadd.f32 0.0, %v2180
      %v2182 = vpop.f32.mrf.mxu0
      %2183 = vmatprep.mubr.bf16.mxu0 0
      %2184 = vmatmul.mubr.bf16.gmra.mxu0 %v2008
      %v2185 = vpop.f32.mrf.mxu0
      %v2186 = vadd.f32 0.0, %v2185
      %v2187 = vpop.f32.mrf.mxu0
      %v2188 = vpop.f32.mrf.mxu0
      %v2189 = vadd.f32 0.0, %v2188
      %v2190 = vpop.f32.mrf.mxu0
      %2191 = vmatprep.mubr.bf16.mxu0 0
      %2192 = vmatmul.mubr.bf16.gmra.mxu0 %v2009
      %v2193 = vpop.f32.mrf.mxu0
      %v2194 = vadd.f32 0.0, %v2193
      %v2195 = vpop.f32.mrf.mxu0
      %v2196 = vpop.f32.mrf.mxu0
      %v2197 = vadd.f32 0.0, %v2196
      %v2198 = vpop.f32.mrf.mxu0
      %2199 = vmatprep.mubr.bf16.mxu0 0
      %2200 = vmatmul.mubr.bf16.gmra.mxu0 %v2010
      %v2201 = vpop.f32.mrf.mxu0
      %v2202 = vadd.f32 0.0, %v2201
      %v2203 = vpop.f32.mrf.mxu0
      %v2204 = vpop.f32.mrf.mxu0
      %v2205 = vadd.f32 0.0, %v2204
      %v2206 = vpop.f32.mrf.mxu0
      %2207 = vmatprep.mubr.bf16.mxu0 0
      %2208 = vmatmul.mubr.bf16.gmra.mxu0 %v2011
      %v2209 = vpop.f32.mrf.mxu0
      %v2210 = vadd.f32 0.0, %v2209
      %v2211 = vpop.f32.mrf.mxu0
      %v2212 = vpop.f32.mrf.mxu0
      %v2213 = vadd.f32 0.0, %v2212
      %v2214 = vpop.f32.mrf.mxu0
      %2215 = vmatprep.mubr.bf16.mxu0 0
      %2216 = vmatmul.mubr.bf16.gmra.mxu0 %v2012
      %v2217 = vpop.f32.mrf.mxu0
      %v2218 = vadd.f32 0.0, %v2217
      %v2219 = vpop.f32.mrf.mxu0
      %v2220 = vpop.f32.mrf.mxu0
      %v2221 = vadd.f32 0.0, %v2220
      %v2222 = vpop.f32.mrf.mxu0
      %2223 = vmatprep.mubr.bf16.mxu0 0
      %2224 = vmatmul.mubr.bf16.gmra.mxu0 %v2013
      %v2225 = vpop.f32.mrf.mxu0
      %v2226 = vadd.f32 0.0, %v2225
      %v2227 = vpop.f32.mrf.mxu0
      %v2228 = vpop.f32.mrf.mxu0
      %v2229 = vadd.f32 0.0, %v2228
      %v2230 = vpop.f32.mrf.mxu0
      %2231 = vmatprep.mubr.bf16.mxu0 0
      %2232 = vmatmul.mubr.bf16.gmra.mxu0 %v2014
      %v2233 = vpop.f32.mrf.mxu0
      %v2234 = vadd.f32 0.0, %v2233
      %v2235 = vpop.f32.mrf.mxu0
      %v2236 = vpop.f32.mrf.mxu0
      %v2237 = vadd.f32 0.0, %v2236
      %v2238 = vpop.f32.mrf.mxu0
      %2239 = vdwg.mxu0
      %v2240 = vadd.f32 %v1853, %v2114
      %v2241 = vadd.f32 %v1854, %v2117
      %v2242 = vadd.f32 %v1855, %v2122
      %v2243 = vadd.f32 %v1856, %v2125
      %v2244 = vadd.f32 %v1857, %v2130
      %v2245 = vadd.f32 %v1858, %v2133
      %v2246 = vadd.f32 %v1859, %v2138
      %v2247 = vadd.f32 %v1860, %v2141
      %v2248 = vadd.f32 %v1861, %v2146
      %v2249 = vadd.f32 %v1862, %v2149
      %v2250 = vadd.f32 %v1863, %v2154
      %v2251 = vadd.f32 %v1864, %v2157
      %v2252 = vadd.f32 %v1865, %v2162
      %v2253 = vadd.f32 %v1866, %v2165
      %v2254 = vadd.f32 %v1867, %v2170
      %v2255 = vadd.f32 %v1868, %v2173
      %v2256 = vadd.f32 %v1869, %v2178
      %v2257 = vadd.f32 %v1870, %v2181
      %v2258 = vadd.f32 %v1871, %v2186
      %v2259 = vadd.f32 %v1872, %v2189
      %v2260 = vadd.f32 %v1873, %v2194
      %v2261 = vadd.f32 %v1874, %v2197
      %v2262 = vadd.f32 %v1875, %v2202
      %v2263 = vadd.f32 %v1876, %v2205
      %v2264 = vadd.f32 %v1877, %v2210
      %v2265 = vadd.f32 %v1878, %v2213
      %v2266 = vadd.f32 %v1879, %v2218
      %v2267 = vadd.f32 %v1880, %v2221
      %v2268 = vadd.f32 %v1881, %v2226
      %v2269 = vadd.f32 %v1882, %v2229
      %v2270 = vadd.f32 %v1883, %v2234
      %v2271 = vadd.f32 %v1884, %v2237
      %v2272 = vld [vmem:[%s1885] sm:$0xf]
      %v2273 = vld [vmem:[%s1885 + $0x4] sm:$0xf]
      %v2274 = vld [vmem:[%s1885 + $0x8] sm:$0x1]
      %v2275 = vld [vmem:[%s1885 + $0xc] sm:$0xf]
      %v2276 = vld [vmem:[%s1885 + $0x10] sm:$0xf]
      %v2277 = vld [vmem:[%s1885 + $0x14] sm:$0x1]
      %v2278 = vld [vmem:[%s1885 + $0x18] sm:$0xf]
      %v2279 = vld [vmem:[%s1885 + $0x1c] sm:$0xf]
      %v2280 = vld [vmem:[%s1885 + $0x20] sm:$0x1]
      %v2281 = vld [vmem:[%s1885 + $0x24] sm:$0xf]
      %v2282 = vld [vmem:[%s1885 + $0x28] sm:$0xf]
      %v2283 = vld [vmem:[%s1885 + $0x2c] sm:$0x1]
      %v2284 = vld [vmem:[%s1885 + $0x30] sm:$0xf]
      %v2285 = vld [vmem:[%s1885 + $0x34] sm:$0xf]
      %v2286 = vld [vmem:[%s1885 + $0x38] sm:$0x1]
      %v2287 = vld [vmem:[%s1885 + $0x3c] sm:$0xf]
      %v2288 = vld [vmem:[%s1885 + $0x40] sm:$0xf]
      %v2289 = vld [vmem:[%s1885 + $0x44] sm:$0x1]
      %v2290 = vld [vmem:[%s1885 + $0x48] sm:$0xf]
      %v2291 = vld [vmem:[%s1885 + $0x4c] sm:$0xf]
      %v2292 = vld [vmem:[%s1885 + $0x50] sm:$0x1]
      %v2293 = vld [vmem:[%s1885 + $0x54] sm:$0xf]
      %v2294 = vld [vmem:[%s1885 + $0x58] sm:$0xf]
      %v2295 = vld [vmem:[%s1885 + $0x5c] sm:$0x1]
      %v2296 = vld [vmem:[%s1885 + $0x60] sm:$0xf]
      %v2297 = vld [vmem:[%s1885 + $0x64] sm:$0xf]
      %v2298 = vld [vmem:[%s1885 + $0x68] sm:$0x1]
      %v2299 = vld [vmem:[%s1885 + $0x6c] sm:$0xf]
      %v2300 = vld [vmem:[%s1885 + $0x70] sm:$0xf]
      %v2301 = vld [vmem:[%s1885 + $0x74] sm:$0x1]
      %v2302 = vld [vmem:[%s1885 + $0x78] sm:$0xf]
      %v2303 = vld [vmem:[%s1885 + $0x7c] sm:$0xf]
      %v2304 = vld [vmem:[%s1885 + $0x80] sm:$0x1]
      %v2305 = vld [vmem:[%s1885 + $0x84] sm:$0xf]
      %v2306 = vld [vmem:[%s1885 + $0x88] sm:$0xf]
      %v2307 = vld [vmem:[%s1885 + $0x8c] sm:$0x1]
      %v2308 = vld [vmem:[%s1885 + $0x90] sm:$0xf]
      %v2309 = vld [vmem:[%s1885 + $0x94] sm:$0xf]
      %v2310 = vld [vmem:[%s1885 + $0x98] sm:$0x1]
      %v2311 = vld [vmem:[%s1885 + $0x9c] sm:$0xf]
      %v2312 = vld [vmem:[%s1885 + $0xa0] sm:$0xf]
      %v2313 = vld [vmem:[%s1885 + $0xa4] sm:$0x1]
      %v2314 = vld [vmem:[%s1885 + $0xa8] sm:$0xf]
      %v2315 = vld [vmem:[%s1885 + $0xac] sm:$0xf]
      %v2316 = vld [vmem:[%s1885 + $0xb0] sm:$0x1]
      %v2317 = vld [vmem:[%s1885 + $0xb4] sm:$0xf]
      %v2318 = vld [vmem:[%s1885 + $0xb8] sm:$0xf]
      %v2319 = vld [vmem:[%s1885 + $0xbc] sm:$0x1]
      %v2321 = vshrl.u32 %v2272, 16
      %v2323 = vrot.slane %v2321, 4
      %v2324 = vshll.u32 %v2272, 16
      %v2326 = vrot.slane %v2324, 5
      %v2327 = vor.u32 %v2323, %v2326
      %v2328 = vrot.slane %v2327, 4
      %v2330 = vshll.u32 %v2273, 16
      %v2332 = vrot.slane %v2330, 5
      %v2333 = vsel %vm420, %v2328, %v2332
      %v2334 = vshrl.u32 %v2273, 16
      %v2336 = vrot.slane %v2334, 4
      %v2337 = vor.u32 %v2336, %v2332
      %v2338 = vrot.slane %v2337, 4
      %v2340 = vshll.u32 %v2274, 16
      %v2342 = vrot.slane %v2340, 5
      %v2343 = vsel %vm420, %v2338, %v2342
      %v2345 = vshrl.u32 %v2275, 16
      %v2347 = vrot.slane %v2345, 4
      %v2348 = vshll.u32 %v2275, 16
      %v2350 = vrot.slane %v2348, 5
      %v2351 = vor.u32 %v2347, %v2350
      %v2352 = vrot.slane %v2351, 4
      %v2354 = vshll.u32 %v2276, 16
      %v2356 = vrot.slane %v2354, 5
      %v2357 = vsel %vm420, %v2352, %v2356
      %v2358 = vshrl.u32 %v2276, 16
      %v2360 = vrot.slane %v2358, 4
      %v2361 = vor.u32 %v2360, %v2356
      %v2362 = vrot.slane %v2361, 4
      %v2364 = vshll.u32 %v2277, 16
      %v2366 = vrot.slane %v2364, 5
      %v2367 = vsel %vm420, %v2362, %v2366
      %v2369 = vshrl.u32 %v2278, 16
      %v2371 = vrot.slane %v2369, 4
      %v2372 = vshll.u32 %v2278, 16
      %v2374 = vrot.slane %v2372, 5
      %v2375 = vor.u32 %v2371, %v2374
      %v2376 = vrot.slane %v2375, 4
      %v2378 = vshll.u32 %v2279, 16
      %v2380 = vrot.slane %v2378, 5
      %v2381 = vsel %vm420, %v2376, %v2380
      %v2382 = vshrl.u32 %v2279, 16
      %v2384 = vrot.slane %v2382, 4
      %v2385 = vor.u32 %v2384, %v2380
      %v2386 = vrot.slane %v2385, 4
      %v2388 = vshll.u32 %v2280, 16
      %v2390 = vrot.slane %v2388, 5
      %v2391 = vsel %vm420, %v2386, %v2390
      %v2393 = vshrl.u32 %v2281, 16
      %v2395 = vrot.slane %v2393, 4
      %v2396 = vshll.u32 %v2281, 16
      %v2398 = vrot.slane %v2396, 5
      %v2399 = vor.u32 %v2395, %v2398
      %v2400 = vrot.slane %v2399, 4
      %v2402 = vshll.u32 %v2282, 16
      %v2404 = vrot.slane %v2402, 5
      %v2405 = vsel %vm420, %v2400, %v2404
      %v2406 = vshrl.u32 %v2282, 16
      %v2408 = vrot.slane %v2406, 4
      %v2409 = vor.u32 %v2408, %v2404
      %v2410 = vrot.slane %v2409, 4
      %v2412 = vshll.u32 %v2283, 16
      %v2414 = vrot.slane %v2412, 5
      %v2415 = vsel %vm420, %v2410, %v2414
      %v2417 = vshrl.u32 %v2284, 16
      %v2419 = vrot.slane %v2417, 4
      %v2420 = vshll.u32 %v2284, 16
      %v2422 = vrot.slane %v2420, 5
      %v2423 = vor.u32 %v2419, %v2422
      %v2424 = vrot.slane %v2423, 4
      %v2426 = vshll.u32 %v2285, 16
      %v2428 = vrot.slane %v2426, 5
      %v2429 = vsel %vm420, %v2424, %v2428
      %v2430 = vshrl.u32 %v2285, 16
      %v2432 = vrot.slane %v2430, 4
      %v2433 = vor.u32 %v2432, %v2428
      %v2434 = vrot.slane %v2433, 4
      %v2436 = vshll.u32 %v2286, 16
      %v2438 = vrot.slane %v2436, 5
      %v2439 = vsel %vm420, %v2434, %v2438
      %v2441 = vshrl.u32 %v2287, 16
      %v2443 = vrot.slane %v2441, 4
      %v2444 = vshll.u32 %v2287, 16
      %v2446 = vrot.slane %v2444, 5
      %v2447 = vor.u32 %v2443, %v2446
      %v2448 = vrot.slane %v2447, 4
      %v2450 = vshll.u32 %v2288, 16
      %v2452 = vrot.slane %v2450, 5
      %v2453 = vsel %vm420, %v2448, %v2452
      %v2454 = vshrl.u32 %v2288, 16
      %v2456 = vrot.slane %v2454, 4
      %v2457 = vor.u32 %v2456, %v2452
      %v2458 = vrot.slane %v2457, 4
      %v2460 = vshll.u32 %v2289, 16
      %v2462 = vrot.slane %v2460, 5
      %v2463 = vsel %vm420, %v2458, %v2462
      %v2465 = vshrl.u32 %v2290, 16
      %v2467 = vrot.slane %v2465, 4
      %v2468 = vshll.u32 %v2290, 16
      %v2470 = vrot.slane %v2468, 5
      %v2471 = vor.u32 %v2467, %v2470
      %v2472 = vrot.slane %v2471, 4
      %v2474 = vshll.u32 %v2291, 16
      %v2476 = vrot.slane %v2474, 5
      %v2477 = vsel %vm420, %v2472, %v2476
      %v2478 = vshrl.u32 %v2291, 16
      %v2480 = vrot.slane %v2478, 4
      %v2481 = vor.u32 %v2480, %v2476
      %v2482 = vrot.slane %v2481, 4
      %v2484 = vshll.u32 %v2292, 16
      %v2486 = vrot.slane %v2484, 5
      %v2487 = vsel %vm420, %v2482, %v2486
      %v2489 = vshrl.u32 %v2293, 16
      %v2491 = vrot.slane %v2489, 4
      %v2492 = vshll.u32 %v2293, 16
      %v2494 = vrot.slane %v2492, 5
      %v2495 = vor.u32 %v2491, %v2494
      %v2496 = vrot.slane %v2495, 4
      %v2498 = vshll.u32 %v2294, 16
      %v2500 = vrot.slane %v2498, 5
      %v2501 = vsel %vm420, %v2496, %v2500
      %v2502 = vshrl.u32 %v2294, 16
      %v2504 = vrot.slane %v2502, 4
      %v2505 = vor.u32 %v2504, %v2500
      %v2506 = vrot.slane %v2505, 4
      %v2508 = vshll.u32 %v2295, 16
      %v2510 = vrot.slane %v2508, 5
      %v2511 = vsel %vm420, %v2506, %v2510
      %v2513 = vshrl.u32 %v2296, 16
      %v2515 = vrot.slane %v2513, 4
      %v2516 = vshll.u32 %v2296, 16
      %v2518 = vrot.slane %v2516, 5
      %v2519 = vor.u32 %v2515, %v2518
      %v2520 = vrot.slane %v2519, 4
      %v2522 = vshll.u32 %v2297, 16
      %v2524 = vrot.slane %v2522, 5
      %v2525 = vsel %vm420, %v2520, %v2524
      %v2526 = vshrl.u32 %v2297, 16
      %v2528 = vrot.slane %v2526, 4
      %v2529 = vor.u32 %v2528, %v2524
      %v2530 = vrot.slane %v2529, 4
      %v2532 = vshll.u32 %v2298, 16
      %v2534 = vrot.slane %v2532, 5
      %v2535 = vsel %vm420, %v2530, %v2534
      %v2537 = vshrl.u32 %v2299, 16
      %v2539 = vrot.slane %v2537, 4
      %v2540 = vshll.u32 %v2299, 16
      %v2542 = vrot.slane %v2540, 5
      %v2543 = vor.u32 %v2539, %v2542
      %v2544 = vrot.slane %v2543, 4
      %v2546 = vshll.u32 %v2300, 16
      %v2548 = vrot.slane %v2546, 5
      %v2549 = vsel %vm420, %v2544, %v2548
      %v2550 = vshrl.u32 %v2300, 16
      %v2552 = vrot.slane %v2550, 4
      %v2553 = vor.u32 %v2552, %v2548
      %v2554 = vrot.slane %v2553, 4
      %v2556 = vshll.u32 %v2301, 16
      %v2558 = vrot.slane %v2556, 5
      %v2559 = vsel %vm420, %v2554, %v2558
      %v2561 = vshrl.u32 %v2302, 16
      %v2563 = vrot.slane %v2561, 4
      %v2564 = vshll.u32 %v2302, 16
      %v2566 = vrot.slane %v2564, 5
      %v2567 = vor.u32 %v2563, %v2566
      %v2568 = vrot.slane %v2567, 4
      %v2570 = vshll.u32 %v2303, 16
      %v2572 = vrot.slane %v2570, 5
      %v2573 = vsel %vm420, %v2568, %v2572
      %v2574 = vshrl.u32 %v2303, 16
      %v2576 = vrot.slane %v2574, 4
      %v2577 = vor.u32 %v2576, %v2572
      %v2578 = vrot.slane %v2577, 4
      %v2580 = vshll.u32 %v2304, 16
      %v2582 = vrot.slane %v2580, 5
      %v2583 = vsel %vm420, %v2578, %v2582
      %v2585 = vshrl.u32 %v2305, 16
      %v2587 = vrot.slane %v2585, 4
      %v2588 = vshll.u32 %v2305, 16
      %v2590 = vrot.slane %v2588, 5
      %v2591 = vor.u32 %v2587, %v2590
      %v2592 = vrot.slane %v2591, 4
      %v2594 = vshll.u32 %v2306, 16
      %v2596 = vrot.slane %v2594, 5
      %v2597 = vsel %vm420, %v2592, %v2596
      %v2598 = vshrl.u32 %v2306, 16
      %v2600 = vrot.slane %v2598, 4
      %v2601 = vor.u32 %v2600, %v2596
      %v2602 = vrot.slane %v2601, 4
      %v2604 = vshll.u32 %v2307, 16
      %v2606 = vrot.slane %v2604, 5
      %v2607 = vsel %vm420, %v2602, %v2606
      %v2609 = vshrl.u32 %v2308, 16
      %v2611 = vrot.slane %v2609, 4
      %v2612 = vshll.u32 %v2308, 16
      %v2614 = vrot.slane %v2612, 5
      %v2615 = vor.u32 %v2611, %v2614
      %v2616 = vrot.slane %v2615, 4
      %v2618 = vshll.u32 %v2309, 16
      %v2620 = vrot.slane %v2618, 5
      %v2621 = vsel %vm420, %v2616, %v2620
      %v2622 = vshrl.u32 %v2309, 16
      %v2624 = vrot.slane %v2622, 4
      %v2625 = vor.u32 %v2624, %v2620
      %v2626 = vrot.slane %v2625, 4
      %v2628 = vshll.u32 %v2310, 16
      %v2630 = vrot.slane %v2628, 5
      %v2631 = vsel %vm420, %v2626, %v2630
      %v2633 = vshrl.u32 %v2311, 16
      %v2635 = vrot.slane %v2633, 4
      %v2636 = vshll.u32 %v2311, 16
      %v2638 = vrot.slane %v2636, 5
      %v2639 = vor.u32 %v2635, %v2638
      %v2640 = vrot.slane %v2639, 4
      %v2642 = vshll.u32 %v2312, 16
      %v2644 = vrot.slane %v2642, 5
      %v2645 = vsel %vm420, %v2640, %v2644
      %v2646 = vshrl.u32 %v2312, 16
      %v2648 = vrot.slane %v2646, 4
      %v2649 = vor.u32 %v2648, %v2644
      %v2650 = vrot.slane %v2649, 4
      %v2652 = vshll.u32 %v2313, 16
      %v2654 = vrot.slane %v2652, 5
      %v2655 = vsel %vm420, %v2650, %v2654
      %v2657 = vshrl.u32 %v2314, 16
      %v2659 = vrot.slane %v2657, 4
      %v2660 = vshll.u32 %v2314, 16
      %v2662 = vrot.slane %v2660, 5
      %v2663 = vor.u32 %v2659, %v2662
      %v2664 = vrot.slane %v2663, 4
      %v2666 = vshll.u32 %v2315, 16
      %v2668 = vrot.slane %v2666, 5
      %v2669 = vsel %vm420, %v2664, %v2668
      %v2670 = vshrl.u32 %v2315, 16
      %v2672 = vrot.slane %v2670, 4
      %v2673 = vor.u32 %v2672, %v2668
      %v2674 = vrot.slane %v2673, 4
      %v2676 = vshll.u32 %v2316, 16
      %v2678 = vrot.slane %v2676, 5
      %v2679 = vsel %vm420, %v2674, %v2678
      %v2681 = vshrl.u32 %v2317, 16
      %v2683 = vrot.slane %v2681, 4
      %v2684 = vshll.u32 %v2317, 16
      %v2686 = vrot.slane %v2684, 5
      %v2687 = vor.u32 %v2683, %v2686
      %v2688 = vrot.slane %v2687, 4
      %v2690 = vshll.u32 %v2318, 16
      %v2692 = vrot.slane %v2690, 5
      %v2693 = vsel %vm420, %v2688, %v2692
      %v2694 = vshrl.u32 %v2318, 16
      %v2696 = vrot.slane %v2694, 4
      %v2697 = vor.u32 %v2696, %v2692
      %v2698 = vrot.slane %v2697, 4
      %v2700 = vshll.u32 %v2319, 16
      %v2702 = vrot.slane %v2700, 5
      %v2703 = vsel %vm420, %v2698, %v2702
      %s2704 = scalar_lea.vmem %s2, 256
      %v2705 = vld [vmem:[%s2704] sm:$0xf]
      %v2706 = vld [vmem:[%s2704 + $0x4] sm:$0xf]
      %v2707 = vld [vmem:[%s2704 + $0x8] sm:$0xf]
      %v2708 = vld [vmem:[%s2704 + $0xc] sm:$0xf]
      %v2709 = vld [vmem:[%s2704 + $0x10] sm:$0xf]
      %v2710 = vld [vmem:[%s2704 + $0x14] sm:$0xf]
      %v2711 = vld [vmem:[%s2704 + $0x18] sm:$0xf]
      %v2712 = vld [vmem:[%s2704 + $0x1c] sm:$0xf]
      %v2713 = vld [vmem:[%s2704 + $0x20] sm:$0xf]
      %v2714 = vld [vmem:[%s2704 + $0x24] sm:$0xf]
      %v2715 = vld [vmem:[%s2704 + $0x28] sm:$0xf]
      %v2716 = vld [vmem:[%s2704 + $0x2c] sm:$0xf]
      %v2717 = vld [vmem:[%s2704 + $0x30] sm:$0xf]
      %v2718 = vld [vmem:[%s2704 + $0x34] sm:$0xf]
      %v2719 = vld [vmem:[%s2704 + $0x38] sm:$0xf]
      %v2720 = vld [vmem:[%s2704 + $0x3c] sm:$0xf]
      %v2721 = vunpack.c.l.b16 %v2333
      %v2722 = vunpack.c.l.b16 %v2343
      %v2723 = vunpack.c.l.b16 %v2357
      %v2724 = vunpack.c.l.b16 %v2367
      %v2725 = vunpack.c.l.b16 %v2381
      %v2726 = vunpack.c.l.b16 %v2391
      %v2727 = vunpack.c.l.b16 %v2405
      %v2728 = vunpack.c.l.b16 %v2415
      %v2729 = vunpack.c.l.b16 %v2429
      %v2730 = vunpack.c.l.b16 %v2439
      %v2731 = vunpack.c.l.b16 %v2453
      %v2732 = vunpack.c.l.b16 %v2463
      %v2733 = vunpack.c.l.b16 %v2477
      %v2734 = vunpack.c.l.b16 %v2487
      %v2735 = vunpack.c.l.b16 %v2501
      %v2736 = vunpack.c.l.b16 %v2511
      %v2737 = vunpack.c.l.b16 %v2525
      %v2738 = vunpack.c.l.b16 %v2535
      %v2739 = vunpack.c.l.b16 %v2549
      %v2740 = vunpack.c.l.b16 %v2559
      %v2741 = vunpack.c.l.b16 %v2573
      %v2742 = vunpack.c.l.b16 %v2583
      %v2743 = vunpack.c.l.b16 %v2597
      %v2744 = vunpack.c.l.b16 %v2607
      %v2745 = vunpack.c.l.b16 %v2621
      %v2746 = vunpack.c.l.b16 %v2631
      %v2747 = vunpack.c.l.b16 %v2645
      %v2748 = vunpack.c.l.b16 %v2655
      %v2749 = vunpack.c.l.b16 %v2669
      %v2750 = vunpack.c.l.b16 %v2679
      %v2751 = vunpack.c.l.b16 %v2693
      %v2752 = vunpack.c.l.b16 %v2703
      %v2753 = vpack.c.b16 %v2722, %v2721
      %v2754 = vpack.c.b16 %v2724, %v2723
      %v2755 = vpack.c.b16 %v2726, %v2725
      %v2756 = vpack.c.b16 %v2728, %v2727
      %v2757 = vpack.c.b16 %v2730, %v2729
      %v2758 = vpack.c.b16 %v2732, %v2731
      %v2759 = vpack.c.b16 %v2734, %v2733
      %v2760 = vpack.c.b16 %v2736, %v2735
      %v2761 = vpack.c.b16 %v2738, %v2737
      %v2762 = vpack.c.b16 %v2740, %v2739
      %v2763 = vpack.c.b16 %v2742, %v2741
      %v2764 = vpack.c.b16 %v2744, %v2743
      %v2765 = vpack.c.b16 %v2746, %v2745
      %v2766 = vpack.c.b16 %v2748, %v2747
      %v2767 = vpack.c.b16 %v2750, %v2749
      %v2768 = vpack.c.b16 %v2752, %v2751
      %v2801 = vunpack.c.l.b16 %v2705
      %v2802 = vunpack.c.l.b16 %v2706
      %v2803 = vunpack.c.l.b16 %v2707
      %v2804 = vunpack.c.l.b16 %v2708
      %v2805 = vunpack.c.l.b16 %v2709
      %v2806 = vunpack.c.l.b16 %v2710
      %v2807 = vunpack.c.l.b16 %v2711
      %v2808 = vunpack.c.l.b16 %v2712
      %v2809 = vunpack.c.l.b16 %v2713
      %v2810 = vunpack.c.l.b16 %v2714
      %v2811 = vunpack.c.l.b16 %v2715
      %v2812 = vunpack.c.l.b16 %v2716
      %v2813 = vunpack.c.l.b16 %v2717
      %v2814 = vunpack.c.l.b16 %v2718
      %v2815 = vunpack.c.l.b16 %v2719
      %v2816 = vunpack.c.l.b16 %v2720
      %v2817 = vpack.c.b16 %v2802, %v2801
      %v2818 = vpack.c.b16 %v2804, %v2803
      %v2819 = vpack.c.b16 %v2806, %v2805
      %v2820 = vpack.c.b16 %v2808, %v2807
      %v2821 = vpack.c.b16 %v2810, %v2809
      %v2822 = vpack.c.b16 %v2812, %v2811
      %v2823 = vpack.c.b16 %v2814, %v2813
      %v2824 = vpack.c.b16 %v2816, %v2815
      %2833 = vmatprep.subr.bf16.mxu0 0
      %2834 = vmatpush1.bf16.msra.mxu0 %v2824
      %2835 = vmatprep.subr.bf16.mxu0 0
      %2836 = vmatpush1.bf16.msra.mxu0 %v2823
      %2837 = vmatprep.subr.bf16.mxu0 0
      %2838 = vmatpush1.bf16.msra.mxu0 %v2822
      %2839 = vmatprep.subr.bf16.mxu0 0
      %2840 = vmatpush1.bf16.msra.mxu0 %v2821
      %2841 = vmatprep.subr.bf16.mxu0 0
      %2842 = vmatpush1.bf16.msra.mxu0 %v2820
      %2843 = vmatprep.subr.bf16.mxu0 0
      %2844 = vmatpush1.bf16.msra.mxu0 %v2819
      %2845 = vmatprep.subr.bf16.mxu0 0
      %2846 = vmatpush1.bf16.msra.mxu0 %v2818
      %2847 = vmatprep.subr.bf16.mxu0 0
      %2848 = vmatpush1.bf16.msra.mxu0 %v2817
      %2849 = vmatprep.subr.bf16.mxu0 0
      %2850 = vmatpush2.bf16.msra.mxu0 0
      %2851 = vmatprep.subr.bf16.mxu0 0
      %2852 = vmatpush2.bf16.msra.mxu0 0
      %2853 = vmatprep.subr.bf16.mxu0 0
      %2854 = vmatpush2.bf16.msra.mxu0 0
      %2855 = vmatprep.subr.bf16.mxu0 0
      %2856 = vmatpush2.bf16.msra.mxu0 0
      %2857 = vmatprep.subr.bf16.mxu0 0
      %2858 = vmatpush2.bf16.msra.mxu0 0
      %2859 = vmatprep.subr.bf16.mxu0 0
      %2860 = vmatpush2.bf16.msra.mxu0 0
      %2861 = vmatprep.subr.bf16.mxu0 0
      %2862 = vmatpush2.bf16.msra.mxu0 0
      %2863 = vmatprep.subr.bf16.mxu0 0
      %2864 = vmatpush2.bf16.msra.mxu0 0
      %2865 = vmatprep.mubr.bf16.mxu0 0
      %2866 = vmatmul.mubr.bf16.gmra.mxu0 %v2753
      %v2867 = vpop.f32.mrf.mxu0
      %v2868 = vadd.f32 0.0, %v2867
      %v2869 = vpop.f32.mrf.mxu0
      %v2870 = vpop.f32.mrf.mxu0
      %v2871 = vadd.f32 0.0, %v2870
      %v2872 = vpop.f32.mrf.mxu0
      %2873 = vmatprep.mubr.bf16.mxu0 0
      %2874 = vmatmul.mubr.bf16.gmra.mxu0 %v2754
      %v2875 = vpop.f32.mrf.mxu0
      %v2876 = vadd.f32 0.0, %v2875
      %v2877 = vpop.f32.mrf.mxu0
      %v2878 = vpop.f32.mrf.mxu0
      %v2879 = vadd.f32 0.0, %v2878
      %v2880 = vpop.f32.mrf.mxu0
      %2881 = vmatprep.mubr.bf16.mxu0 0
      %2882 = vmatmul.mubr.bf16.gmra.mxu0 %v2755
      %v2883 = vpop.f32.mrf.mxu0
      %v2884 = vadd.f32 0.0, %v2883
      %v2885 = vpop.f32.mrf.mxu0
      %v2886 = vpop.f32.mrf.mxu0
      %v2887 = vadd.f32 0.0, %v2886
      %v2888 = vpop.f32.mrf.mxu0
      %2889 = vmatprep.mubr.bf16.mxu0 0
      %2890 = vmatmul.mubr.bf16.gmra.mxu0 %v2756
      %v2891 = vpop.f32.mrf.mxu0
      %v2892 = vadd.f32 0.0, %v2891
      %v2893 = vpop.f32.mrf.mxu0
      %v2894 = vpop.f32.mrf.mxu0
      %v2895 = vadd.f32 0.0, %v2894
      %v2896 = vpop.f32.mrf.mxu0
      %2897 = vmatprep.mubr.bf16.mxu0 0
      %2898 = vmatmul.mubr.bf16.gmra.mxu0 %v2757
      %v2899 = vpop.f32.mrf.mxu0
      %v2900 = vadd.f32 0.0, %v2899
      %v2901 = vpop.f32.mrf.mxu0
      %v2902 = vpop.f32.mrf.mxu0
      %v2903 = vadd.f32 0.0, %v2902
      %v2904 = vpop.f32.mrf.mxu0
      %2905 = vmatprep.mubr.bf16.mxu0 0
      %2906 = vmatmul.mubr.bf16.gmra.mxu0 %v2758
      %v2907 = vpop.f32.mrf.mxu0
      %v2908 = vadd.f32 0.0, %v2907
      %v2909 = vpop.f32.mrf.mxu0
      %v2910 = vpop.f32.mrf.mxu0
      %v2911 = vadd.f32 0.0, %v2910
      %v2912 = vpop.f32.mrf.mxu0
      %2913 = vmatprep.mubr.bf16.mxu0 0
      %2914 = vmatmul.mubr.bf16.gmra.mxu0 %v2759
      %v2915 = vpop.f32.mrf.mxu0
      %v2916 = vadd.f32 0.0, %v2915
      %v2917 = vpop.f32.mrf.mxu0
      %v2918 = vpop.f32.mrf.mxu0
      %v2919 = vadd.f32 0.0, %v2918
      %v2920 = vpop.f32.mrf.mxu0
      %2921 = vmatprep.mubr.bf16.mxu0 0
      %2922 = vmatmul.mubr.bf16.gmra.mxu0 %v2760
      %v2923 = vpop.f32.mrf.mxu0
      %v2924 = vadd.f32 0.0, %v2923
      %v2925 = vpop.f32.mrf.mxu0
      %v2926 = vpop.f32.mrf.mxu0
      %v2927 = vadd.f32 0.0, %v2926
      %v2928 = vpop.f32.mrf.mxu0
      %2929 = vmatprep.mubr.bf16.mxu0 0
      %2930 = vmatmul.mubr.bf16.gmra.mxu0 %v2761
      %v2931 = vpop.f32.mrf.mxu0
      %v2932 = vadd.f32 0.0, %v2931
      %v2933 = vpop.f32.mrf.mxu0
      %v2934 = vpop.f32.mrf.mxu0
      %v2935 = vadd.f32 0.0, %v2934
      %v2936 = vpop.f32.mrf.mxu0
      %2937 = vmatprep.mubr.bf16.mxu0 0
      %2938 = vmatmul.mubr.bf16.gmra.mxu0 %v2762
      %v2939 = vpop.f32.mrf.mxu0
      %v2940 = vadd.f32 0.0, %v2939
      %v2941 = vpop.f32.mrf.mxu0
      %v2942 = vpop.f32.mrf.mxu0
      %v2943 = vadd.f32 0.0, %v2942
      %v2944 = vpop.f32.mrf.mxu0
      %2945 = vmatprep.mubr.bf16.mxu0 0
      %2946 = vmatmul.mubr.bf16.gmra.mxu0 %v2763
      %v2947 = vpop.f32.mrf.mxu0
      %v2948 = vadd.f32 0.0, %v2947
      %v2949 = vpop.f32.mrf.mxu0
      %v2950 = vpop.f32.mrf.mxu0
      %v2951 = vadd.f32 0.0, %v2950
      %v2952 = vpop.f32.mrf.mxu0
      %2953 = vmatprep.mubr.bf16.mxu0 0
      %2954 = vmatmul.mubr.bf16.gmra.mxu0 %v2764
      %v2955 = vpop.f32.mrf.mxu0
      %v2956 = vadd.f32 0.0, %v2955
      %v2957 = vpop.f32.mrf.mxu0
      %v2958 = vpop.f32.mrf.mxu0
      %v2959 = vadd.f32 0.0, %v2958
      %v2960 = vpop.f32.mrf.mxu0
      %2961 = vmatprep.mubr.bf16.mxu0 0
      %2962 = vmatmul.mubr.bf16.gmra.mxu0 %v2765
      %v2963 = vpop.f32.mrf.mxu0
      %v2964 = vadd.f32 0.0, %v2963
      %v2965 = vpop.f32.mrf.mxu0
      %v2966 = vpop.f32.mrf.mxu0
      %v2967 = vadd.f32 0.0, %v2966
      %v2968 = vpop.f32.mrf.mxu0
      %2969 = vmatprep.mubr.bf16.mxu0 0
      %2970 = vmatmul.mubr.bf16.gmra.mxu0 %v2766
      %v2971 = vpop.f32.mrf.mxu0
      %v2972 = vadd.f32 0.0, %v2971
      %v2973 = vpop.f32.mrf.mxu0
      %v2974 = vpop.f32.mrf.mxu0
      %v2975 = vadd.f32 0.0, %v2974
      %v2976 = vpop.f32.mrf.mxu0
      %2977 = vmatprep.mubr.bf16.mxu0 0
      %2978 = vmatmul.mubr.bf16.gmra.mxu0 %v2767
      %v2979 = vpop.f32.mrf.mxu0
      %v2980 = vadd.f32 0.0, %v2979
      %v2981 = vpop.f32.mrf.mxu0
      %v2982 = vpop.f32.mrf.mxu0
      %v2983 = vadd.f32 0.0, %v2982
      %v2984 = vpop.f32.mrf.mxu0
      %2985 = vmatprep.mubr.bf16.mxu0 0
      %2986 = vmatmul.mubr.bf16.gmra.mxu0 %v2768
      %v2987 = vpop.f32.mrf.mxu0
      %v2988 = vadd.f32 0.0, %v2987
      %v2989 = vpop.f32.mrf.mxu0
      %v2990 = vpop.f32.mrf.mxu0
      %v2991 = vadd.f32 0.0, %v2990
      %v2992 = vpop.f32.mrf.mxu0
      %2993 = vdwg.mxu0
      %v2994 = vadd.f32 %v2240, %v2868
      %v2995 = vadd.f32 %v2241, %v2871
      %v2996 = vadd.f32 %v2242, %v2876
      %v2997 = vadd.f32 %v2243, %v2879
      %v2998 = vadd.f32 %v2244, %v2884
      %v2999 = vadd.f32 %v2245, %v2887
      %v3000 = vadd.f32 %v2246, %v2892
      %v3001 = vadd.f32 %v2247, %v2895
      %v3002 = vadd.f32 %v2248, %v2900
      %v3003 = vadd.f32 %v2249, %v2903
      %v3004 = vadd.f32 %v2250, %v2908
      %v3005 = vadd.f32 %v2251, %v2911
      %v3006 = vadd.f32 %v2252, %v2916
      %v3007 = vadd.f32 %v2253, %v2919
      %v3008 = vadd.f32 %v2254, %v2924
      %v3009 = vadd.f32 %v2255, %v2927
      %v3010 = vadd.f32 %v2256, %v2932
      %v3011 = vadd.f32 %v2257, %v2935
      %v3012 = vadd.f32 %v2258, %v2940
      %v3013 = vadd.f32 %v2259, %v2943
      %v3014 = vadd.f32 %v2260, %v2948
      %v3015 = vadd.f32 %v2261, %v2951
      %v3016 = vadd.f32 %v2262, %v2956
      %v3017 = vadd.f32 %v2263, %v2959
      %v3018 = vadd.f32 %v2264, %v2964
      %v3019 = vadd.f32 %v2265, %v2967
      %v3020 = vadd.f32 %v2266, %v2972
      %v3021 = vadd.f32 %v2267, %v2975
      %v3022 = vadd.f32 %v2268, %v2980
      %v3023 = vadd.f32 %v2269, %v2983
      %v3024 = vadd.f32 %v2270, %v2988
      %v3025 = vadd.f32 %v2271, %v2991
      %v3026 = vld [vmem:[%s1885] sm:$0xe]
      %v3027 = vld [vmem:[%s1885 + $0xc] sm:$0xe]
      %v3028 = vld [vmem:[%s1885 + $0x18] sm:$0xe]
      %v3029 = vld [vmem:[%s1885 + $0x24] sm:$0xe]
      %v3030 = vld [vmem:[%s1885 + $0x30] sm:$0xe]
      %v3031 = vld [vmem:[%s1885 + $0x3c] sm:$0xe]
      %v3032 = vld [vmem:[%s1885 + $0x48] sm:$0xe]
      %v3033 = vld [vmem:[%s1885 + $0x54] sm:$0xe]
      %v3034 = vld [vmem:[%s1885 + $0x60] sm:$0xe]
      %v3035 = vld [vmem:[%s1885 + $0x6c] sm:$0xe]
      %v3036 = vld [vmem:[%s1885 + $0x78] sm:$0xe]
      %v3037 = vld [vmem:[%s1885 + $0x84] sm:$0xe]
      %v3038 = vld [vmem:[%s1885 + $0x90] sm:$0xe]
      %v3039 = vld [vmem:[%s1885 + $0x9c] sm:$0xe]
      %v3040 = vld [vmem:[%s1885 + $0xa8] sm:$0xe]
      %v3041 = vld [vmem:[%s1885 + $0xb4] sm:$0xe]
      %v3090 = vrot.slane %v3026, 5
      %v3091 = vrot.slane %v3090, 4
      %v3092 = vrot.slane %v2273, 5
      %v3093 = vsel %vm1450, %v3091, %v3092
      %v3094 = vrot.slane %v3092, 4
      %v3095 = vrot.slane %v2274, 5
      %v3096 = vsel %vm1450, %v3094, %v3095
      %v3097 = vrot.slane %v3027, 5
      %v3098 = vrot.slane %v3097, 4
      %v3099 = vrot.slane %v2276, 5
      %v3100 = vsel %vm1450, %v3098, %v3099
      %v3101 = vrot.slane %v3099, 4
      %v3102 = vrot.slane %v2277, 5
      %v3103 = vsel %vm1450, %v3101, %v3102
      %v3104 = vrot.slane %v3028, 5
      %v3105 = vrot.slane %v3104, 4
      %v3106 = vrot.slane %v2279, 5
      %v3107 = vsel %vm1450, %v3105, %v3106
      %v3108 = vrot.slane %v3106, 4
      %v3109 = vrot.slane %v2280, 5
      %v3110 = vsel %vm1450, %v3108, %v3109
      %v3111 = vrot.slane %v3029, 5
      %v3112 = vrot.slane %v3111, 4
      %v3113 = vrot.slane %v2282, 5
      %v3114 = vsel %vm1450, %v3112, %v3113
      %v3115 = vrot.slane %v3113, 4
      %v3116 = vrot.slane %v2283, 5
      %v3117 = vsel %vm1450, %v3115, %v3116
      %v3118 = vrot.slane %v3030, 5
      %v3119 = vrot.slane %v3118, 4
      %v3120 = vrot.slane %v2285, 5
      %v3121 = vsel %vm1450, %v3119, %v3120
      %v3122 = vrot.slane %v3120, 4
      %v3123 = vrot.slane %v2286, 5
      %v3124 = vsel %vm1450, %v3122, %v3123
      %v3125 = vrot.slane %v3031, 5
      %v3126 = vrot.slane %v3125, 4
      %v3127 = vrot.slane %v2288, 5
      %v3128 = vsel %vm1450, %v3126, %v3127
      %v3129 = vrot.slane %v3127, 4
      %v3130 = vrot.slane %v2289, 5
      %v3131 = vsel %vm1450, %v3129, %v3130
      %v3132 = vrot.slane %v3032, 5
      %v3133 = vrot.slane %v3132, 4
      %v3134 = vrot.slane %v2291, 5
      %v3135 = vsel %vm1450, %v3133, %v3134
      %v3136 = vrot.slane %v3134, 4
      %v3137 = vrot.slane %v2292, 5
      %v3138 = vsel %vm1450, %v3136, %v3137
      %v3139 = vrot.slane %v3033, 5
      %v3140 = vrot.slane %v3139, 4
      %v3141 = vrot.slane %v2294, 5
      %v3142 = vsel %vm1450, %v3140, %v3141
      %v3143 = vrot.slane %v3141, 4
      %v3144 = vrot.slane %v2295, 5
      %v3145 = vsel %vm1450, %v3143, %v3144
      %v3146 = vrot.slane %v3034, 5
      %v3147 = vrot.slane %v3146, 4
      %v3148 = vrot.slane %v2297, 5
      %v3149 = vsel %vm1450, %v3147, %v3148
      %v3150 = vrot.slane %v3148, 4
      %v3151 = vrot.slane %v2298, 5
      %v3152 = vsel %vm1450, %v3150, %v3151
      %v3153 = vrot.slane %v3035, 5
      %v3154 = vrot.slane %v3153, 4
      %v3155 = vrot.slane %v2300, 5
      %v3156 = vsel %vm1450, %v3154, %v3155
      %v3157 = vrot.slane %v3155, 4
      %v3158 = vrot.slane %v2301, 5
      %v3159 = vsel %vm1450, %v3157, %v3158
      %v3160 = vrot.slane %v3036, 5
      %v3161 = vrot.slane %v3160, 4
      %v3162 = vrot.slane %v2303, 5
      %v3163 = vsel %vm1450, %v3161, %v3162
      %v3164 = vrot.slane %v3162, 4
      %v3165 = vrot.slane %v2304, 5
      %v3166 = vsel %vm1450, %v3164, %v3165
      %v3167 = vrot.slane %v3037, 5
      %v3168 = vrot.slane %v3167, 4
      %v3169 = vrot.slane %v2306, 5
      %v3170 = vsel %vm1450, %v3168, %v3169
      %v3171 = vrot.slane %v3169, 4
      %v3172 = vrot.slane %v2307, 5
      %v3173 = vsel %vm1450, %v3171, %v3172
      %v3174 = vrot.slane %v3038, 5
      %v3175 = vrot.slane %v3174, 4
      %v3176 = vrot.slane %v2309, 5
      %v3177 = vsel %vm1450, %v3175, %v3176
      %v3178 = vrot.slane %v3176, 4
      %v3179 = vrot.slane %v2310, 5
      %v3180 = vsel %vm1450, %v3178, %v3179
      %v3181 = vrot.slane %v3039, 5
      %v3182 = vrot.slane %v3181, 4
      %v3183 = vrot.slane %v2312, 5
      %v3184 = vsel %vm1450, %v3182, %v3183
      %v3185 = vrot.slane %v3183, 4
      %v3186 = vrot.slane %v2313, 5
      %v3187 = vsel %vm1450, %v3185, %v3186
      %v3188 = vrot.slane %v3040, 5
      %v3189 = vrot.slane %v3188, 4
      %v3190 = vrot.slane %v2315, 5
      %v3191 = vsel %vm1450, %v3189, %v3190
      %v3192 = vrot.slane %v3190, 4
      %v3193 = vrot.slane %v2316, 5
      %v3194 = vsel %vm1450, %v3192, %v3193
      %v3195 = vrot.slane %v3041, 5
      %v3196 = vrot.slane %v3195, 4
      %v3197 = vrot.slane %v2318, 5
      %v3198 = vsel %vm1450, %v3196, %v3197
      %v3199 = vrot.slane %v3197, 4
      %v3200 = vrot.slane %v2319, 5
      %v3201 = vsel %vm1450, %v3199, %v3200
      %s3202 = scalar_lea.vmem %s2, 320
      %v3203 = vld [vmem:[%s3202] sm:$0xf]
      %v3204 = vld [vmem:[%s3202 + $0x4] sm:$0xf]
      %v3205 = vld [vmem:[%s3202 + $0x8] sm:$0xf]
      %v3206 = vld [vmem:[%s3202 + $0xc] sm:$0xf]
      %v3207 = vld [vmem:[%s3202 + $0x10] sm:$0xf]
      %v3208 = vld [vmem:[%s3202 + $0x14] sm:$0xf]
      %v3209 = vld [vmem:[%s3202 + $0x18] sm:$0xf]
      %v3210 = vld [vmem:[%s3202 + $0x1c] sm:$0xf]
      %v3211 = vld [vmem:[%s3202 + $0x20] sm:$0xf]
      %v3212 = vld [vmem:[%s3202 + $0x24] sm:$0xf]
      %v3213 = vld [vmem:[%s3202 + $0x28] sm:$0xf]
      %v3214 = vld [vmem:[%s3202 + $0x2c] sm:$0xf]
      %v3215 = vld [vmem:[%s3202 + $0x30] sm:$0xf]
      %v3216 = vld [vmem:[%s3202 + $0x34] sm:$0xf]
      %v3217 = vld [vmem:[%s3202 + $0x38] sm:$0xf]
      %v3218 = vld [vmem:[%s3202 + $0x3c] sm:$0xf]
      %v3219 = vunpack.c.l.b16 %v3093
      %v3220 = vunpack.c.l.b16 %v3096
      %v3221 = vunpack.c.l.b16 %v3100
      %v3222 = vunpack.c.l.b16 %v3103
      %v3223 = vunpack.c.l.b16 %v3107
      %v3224 = vunpack.c.l.b16 %v3110
      %v3225 = vunpack.c.l.b16 %v3114
      %v3226 = vunpack.c.l.b16 %v3117
      %v3227 = vunpack.c.l.b16 %v3121
      %v3228 = vunpack.c.l.b16 %v3124
      %v3229 = vunpack.c.l.b16 %v3128
      %v3230 = vunpack.c.l.b16 %v3131
      %v3231 = vunpack.c.l.b16 %v3135
      %v3232 = vunpack.c.l.b16 %v3138
      %v3233 = vunpack.c.l.b16 %v3142
      %v3234 = vunpack.c.l.b16 %v3145
      %v3235 = vunpack.c.l.b16 %v3149
      %v3236 = vunpack.c.l.b16 %v3152
      %v3237 = vunpack.c.l.b16 %v3156
      %v3238 = vunpack.c.l.b16 %v3159
      %v3239 = vunpack.c.l.b16 %v3163
      %v3240 = vunpack.c.l.b16 %v3166
      %v3241 = vunpack.c.l.b16 %v3170
      %v3242 = vunpack.c.l.b16 %v3173
      %v3243 = vunpack.c.l.b16 %v3177
      %v3244 = vunpack.c.l.b16 %v3180
      %v3245 = vunpack.c.l.b16 %v3184
      %v3246 = vunpack.c.l.b16 %v3187
      %v3247 = vunpack.c.l.b16 %v3191
      %v3248 = vunpack.c.l.b16 %v3194
      %v3249 = vunpack.c.l.b16 %v3198
      %v3250 = vunpack.c.l.b16 %v3201
      %v3251 = vpack.c.b16 %v3220, %v3219
      %v3252 = vpack.c.b16 %v3222, %v3221
      %v3253 = vpack.c.b16 %v3224, %v3223
      %v3254 = vpack.c.b16 %v3226, %v3225
      %v3255 = vpack.c.b16 %v3228, %v3227
      %v3256 = vpack.c.b16 %v3230, %v3229
      %v3257 = vpack.c.b16 %v3232, %v3231
      %v3258 = vpack.c.b16 %v3234, %v3233
      %v3259 = vpack.c.b16 %v3236, %v3235
      %v3260 = vpack.c.b16 %v3238, %v3237
      %v3261 = vpack.c.b16 %v3240, %v3239
      %v3262 = vpack.c.b16 %v3242, %v3241
      %v3263 = vpack.c.b16 %v3244, %v3243
      %v3264 = vpack.c.b16 %v3246, %v3245
      %v3265 = vpack.c.b16 %v3248, %v3247
      %v3266 = vpack.c.b16 %v3250, %v3249
      %v3299 = vunpack.c.l.b16 %v3203
      %v3300 = vunpack.c.l.b16 %v3204
      %v3301 = vunpack.c.l.b16 %v3205
      %v3302 = vunpack.c.l.b16 %v3206
      %v3303 = vunpack.c.l.b16 %v3207
      %v3304 = vunpack.c.l.b16 %v3208
      %v3305 = vunpack.c.l.b16 %v3209
      %v3306 = vunpack.c.l.b16 %v3210
      %v3307 = vunpack.c.l.b16 %v3211
      %v3308 = vunpack.c.l.b16 %v3212
      %v3309 = vunpack.c.l.b16 %v3213
      %v3310 = vunpack.c.l.b16 %v3214
      %v3311 = vunpack.c.l.b16 %v3215
      %v3312 = vunpack.c.l.b16 %v3216
      %v3313 = vunpack.c.l.b16 %v3217
      %v3314 = vunpack.c.l.b16 %v3218
      %v3315 = vpack.c.b16 %v3300, %v3299
      %v3316 = vpack.c.b16 %v3302, %v3301
      %v3317 = vpack.c.b16 %v3304, %v3303
      %v3318 = vpack.c.b16 %v3306, %v3305
      %v3319 = vpack.c.b16 %v3308, %v3307
      %v3320 = vpack.c.b16 %v3310, %v3309
      %v3321 = vpack.c.b16 %v3312, %v3311
      %v3322 = vpack.c.b16 %v3314, %v3313
      %3331 = vmatprep.subr.bf16.mxu0 0
      %3332 = vmatpush1.bf16.msra.mxu0 %v3322
      %3333 = vmatprep.subr.bf16.mxu0 0
      %3334 = vmatpush1.bf16.msra.mxu0 %v3321
      %3335 = vmatprep.subr.bf16.mxu0 0
      %3336 = vmatpush1.bf16.msra.mxu0 %v3320
      %3337 = vmatprep.subr.bf16.mxu0 0
      %3338 = vmatpush1.bf16.msra.mxu0 %v3319
      %3339 = vmatprep.subr.bf16.mxu0 0
      %3340 = vmatpush1.bf16.msra.mxu0 %v3318
      %3341 = vmatprep.subr.bf16.mxu0 0
      %3342 = vmatpush1.bf16.msra.mxu0 %v3317
      %3343 = vmatprep.subr.bf16.mxu0 0
      %3344 = vmatpush1.bf16.msra.mxu0 %v3316
      %3345 = vmatprep.subr.bf16.mxu0 0
      %3346 = vmatpush1.bf16.msra.mxu0 %v3315
      %3347 = vmatprep.subr.bf16.mxu0 0
      %3348 = vmatpush2.bf16.msra.mxu0 0
      %3349 = vmatprep.subr.bf16.mxu0 0
      %3350 = vmatpush2.bf16.msra.mxu0 0
      %3351 = vmatprep.subr.bf16.mxu0 0
      %3352 = vmatpush2.bf16.msra.mxu0 0
      %3353 = vmatprep.subr.bf16.mxu0 0
      %3354 = vmatpush2.bf16.msra.mxu0 0
      %3355 = vmatprep.subr.bf16.mxu0 0
      %3356 = vmatpush2.bf16.msra.mxu0 0
      %3357 = vmatprep.subr.bf16.mxu0 0
      %3358 = vmatpush2.bf16.msra.mxu0 0
      %3359 = vmatprep.subr.bf16.mxu0 0
      %3360 = vmatpush2.bf16.msra.mxu0 0
      %3361 = vmatprep.subr.bf16.mxu0 0
      %3362 = vmatpush2.bf16.msra.mxu0 0
      %3363 = vmatprep.mubr.bf16.mxu0 0
      %3364 = vmatmul.mubr.bf16.gmra.mxu0 %v3251
      %v3365 = vpop.f32.mrf.mxu0
      %v3366 = vadd.f32 0.0, %v3365
      %v3367 = vpop.f32.mrf.mxu0
      %v3368 = vpop.f32.mrf.mxu0
      %v3369 = vadd.f32 0.0, %v3368
      %v3370 = vpop.f32.mrf.mxu0
      %3371 = vmatprep.mubr.bf16.mxu0 0
      %3372 = vmatmul.mubr.bf16.gmra.mxu0 %v3252
      %v3373 = vpop.f32.mrf.mxu0
      %v3374 = vadd.f32 0.0, %v3373
      %v3375 = vpop.f32.mrf.mxu0
      %v3376 = vpop.f32.mrf.mxu0
      %v3377 = vadd.f32 0.0, %v3376
      %v3378 = vpop.f32.mrf.mxu0
      %3379 = vmatprep.mubr.bf16.mxu0 0
      %3380 = vmatmul.mubr.bf16.gmra.mxu0 %v3253
      %v3381 = vpop.f32.mrf.mxu0
      %v3382 = vadd.f32 0.0, %v3381
      %v3383 = vpop.f32.mrf.mxu0
      %v3384 = vpop.f32.mrf.mxu0
      %v3385 = vadd.f32 0.0, %v3384
      %v3386 = vpop.f32.mrf.mxu0
      %3387 = vmatprep.mubr.bf16.mxu0 0
      %3388 = vmatmul.mubr.bf16.gmra.mxu0 %v3254
      %v3389 = vpop.f32.mrf.mxu0
      %v3390 = vadd.f32 0.0, %v3389
      %v3391 = vpop.f32.mrf.mxu0
      %v3392 = vpop.f32.mrf.mxu0
      %v3393 = vadd.f32 0.0, %v3392
      %v3394 = vpop.f32.mrf.mxu0
      %3395 = vmatprep.mubr.bf16.mxu0 0
      %3396 = vmatmul.mubr.bf16.gmra.mxu0 %v3255
      %v3397 = vpop.f32.mrf.mxu0
      %v3398 = vadd.f32 0.0, %v3397
      %v3399 = vpop.f32.mrf.mxu0
      %v3400 = vpop.f32.mrf.mxu0
      %v3401 = vadd.f32 0.0, %v3400
      %v3402 = vpop.f32.mrf.mxu0
      %3403 = vmatprep.mubr.bf16.mxu0 0
      %3404 = vmatmul.mubr.bf16.gmra.mxu0 %v3256
      %v3405 = vpop.f32.mrf.mxu0
      %v3406 = vadd.f32 0.0, %v3405
      %v3407 = vpop.f32.mrf.mxu0
      %v3408 = vpop.f32.mrf.mxu0
      %v3409 = vadd.f32 0.0, %v3408
      %v3410 = vpop.f32.mrf.mxu0
      %3411 = vmatprep.mubr.bf16.mxu0 0
      %3412 = vmatmul.mubr.bf16.gmra.mxu0 %v3257
      %v3413 = vpop.f32.mrf.mxu0
      %v3414 = vadd.f32 0.0, %v3413
      %v3415 = vpop.f32.mrf.mxu0
      %v3416 = vpop.f32.mrf.mxu0
      %v3417 = vadd.f32 0.0, %v3416
      %v3418 = vpop.f32.mrf.mxu0
      %3419 = vmatprep.mubr.bf16.mxu0 0
      %3420 = vmatmul.mubr.bf16.gmra.mxu0 %v3258
      %v3421 = vpop.f32.mrf.mxu0
      %v3422 = vadd.f32 0.0, %v3421
      %v3423 = vpop.f32.mrf.mxu0
      %v3424 = vpop.f32.mrf.mxu0
      %v3425 = vadd.f32 0.0, %v3424
      %v3426 = vpop.f32.mrf.mxu0
      %3427 = vmatprep.mubr.bf16.mxu0 0
      %3428 = vmatmul.mubr.bf16.gmra.mxu0 %v3259
      %v3429 = vpop.f32.mrf.mxu0
      %v3430 = vadd.f32 0.0, %v3429
      %v3431 = vpop.f32.mrf.mxu0
      %v3432 = vpop.f32.mrf.mxu0
      %v3433 = vadd.f32 0.0, %v3432
      %v3434 = vpop.f32.mrf.mxu0
      %3435 = vmatprep.mubr.bf16.mxu0 0
      %3436 = vmatmul.mubr.bf16.gmra.mxu0 %v3260
      %v3437 = vpop.f32.mrf.mxu0
      %v3438 = vadd.f32 0.0, %v3437
      %v3439 = vpop.f32.mrf.mxu0
      %v3440 = vpop.f32.mrf.mxu0
      %v3441 = vadd.f32 0.0, %v3440
      %v3442 = vpop.f32.mrf.mxu0
      %3443 = vmatprep.mubr.bf16.mxu0 0
      %3444 = vmatmul.mubr.bf16.gmra.mxu0 %v3261
      %v3445 = vpop.f32.mrf.mxu0
      %v3446 = vadd.f32 0.0, %v3445
      %v3447 = vpop.f32.mrf.mxu0
      %v3448 = vpop.f32.mrf.mxu0
      %v3449 = vadd.f32 0.0, %v3448
      %v3450 = vpop.f32.mrf.mxu0
      %3451 = vmatprep.mubr.bf16.mxu0 0
      %3452 = vmatmul.mubr.bf16.gmra.mxu0 %v3262
      %v3453 = vpop.f32.mrf.mxu0
      %v3454 = vadd.f32 0.0, %v3453
      %v3455 = vpop.f32.mrf.mxu0
      %v3456 = vpop.f32.mrf.mxu0
      %v3457 = vadd.f32 0.0, %v3456
      %v3458 = vpop.f32.mrf.mxu0
      %3459 = vmatprep.mubr.bf16.mxu0 0
      %3460 = vmatmul.mubr.bf16.gmra.mxu0 %v3263
      %v3461 = vpop.f32.mrf.mxu0
      %v3462 = vadd.f32 0.0, %v3461
      %v3463 = vpop.f32.mrf.mxu0
      %v3464 = vpop.f32.mrf.mxu0
      %v3465 = vadd.f32 0.0, %v3464
      %v3466 = vpop.f32.mrf.mxu0
      %3467 = vmatprep.mubr.bf16.mxu0 0
      %3468 = vmatmul.mubr.bf16.gmra.mxu0 %v3264
      %v3469 = vpop.f32.mrf.mxu0
      %v3470 = vadd.f32 0.0, %v3469
      %v3471 = vpop.f32.mrf.mxu0
      %v3472 = vpop.f32.mrf.mxu0
      %v3473 = vadd.f32 0.0, %v3472
      %v3474 = vpop.f32.mrf.mxu0
      %3475 = vmatprep.mubr.bf16.mxu0 0
      %3476 = vmatmul.mubr.bf16.gmra.mxu0 %v3265
      %v3477 = vpop.f32.mrf.mxu0
      %v3478 = vadd.f32 0.0, %v3477
      %v3479 = vpop.f32.mrf.mxu0
      %v3480 = vpop.f32.mrf.mxu0
      %v3481 = vadd.f32 0.0, %v3480
      %v3482 = vpop.f32.mrf.mxu0
      %3483 = vmatprep.mubr.bf16.mxu0 0
      %3484 = vmatmul.mubr.bf16.gmra.mxu0 %v3266
      %v3485 = vpop.f32.mrf.mxu0
      %v3486 = vadd.f32 0.0, %v3485
      %v3487 = vpop.f32.mrf.mxu0
      %v3488 = vpop.f32.mrf.mxu0
      %v3489 = vadd.f32 0.0, %v3488
      %v3490 = vpop.f32.mrf.mxu0
      %3491 = vdwg.mxu0
      %v3492 = vadd.f32 %v2994, %v3366
      %v3493 = vadd.f32 %v2995, %v3369
      %v3494 = vadd.f32 %v2996, %v3374
      %v3495 = vadd.f32 %v2997, %v3377
      %v3496 = vadd.f32 %v2998, %v3382
      %v3497 = vadd.f32 %v2999, %v3385
      %v3498 = vadd.f32 %v3000, %v3390
      %v3499 = vadd.f32 %v3001, %v3393
      %v3500 = vadd.f32 %v3002, %v3398
      %v3501 = vadd.f32 %v3003, %v3401
      %v3502 = vadd.f32 %v3004, %v3406
      %v3503 = vadd.f32 %v3005, %v3409
      %v3504 = vadd.f32 %v3006, %v3414
      %v3505 = vadd.f32 %v3007, %v3417
      %v3506 = vadd.f32 %v3008, %v3422
      %v3507 = vadd.f32 %v3009, %v3425
      %v3508 = vadd.f32 %v3010, %v3430
      %v3509 = vadd.f32 %v3011, %v3433
      %v3510 = vadd.f32 %v3012, %v3438
      %v3511 = vadd.f32 %v3013, %v3441
      %v3512 = vadd.f32 %v3014, %v3446
      %v3513 = vadd.f32 %v3015, %v3449
      %v3514 = vadd.f32 %v3016, %v3454
      %v3515 = vadd.f32 %v3017, %v3457
      %v3516 = vadd.f32 %v3018, %v3462
      %v3517 = vadd.f32 %v3019, %v3465
      %v3518 = vadd.f32 %v3020, %v3470
      %v3519 = vadd.f32 %v3021, %v3473
      %v3520 = vadd.f32 %v3022, %v3478
      %v3521 = vadd.f32 %v3023, %v3481
      %v3522 = vadd.f32 %v3024, %v3486
      %v3523 = vadd.f32 %v3025, %v3489
      %s3524 = scalar_lea.vmem %s342, 24
      %v3525 = vld [vmem:[%s3524] sm:$0xf]
      %v3526 = vld [vmem:[%s3524 + $0x4] sm:$0xf]
      %v3527 = vld [vmem:[%s3524 + $0xc] sm:$0xf]
      %v3528 = vld [vmem:[%s3524 + $0x10] sm:$0xf]
      %v3529 = vld [vmem:[%s3524 + $0x18] sm:$0xf]
      %v3530 = vld [vmem:[%s3524 + $0x1c] sm:$0xf]
      %v3531 = vld [vmem:[%s3524 + $0x24] sm:$0xf]
      %v3532 = vld [vmem:[%s3524 + $0x28] sm:$0xf]
      %v3533 = vld [vmem:[%s3524 + $0x30] sm:$0xf]
      %v3534 = vld [vmem:[%s3524 + $0x34] sm:$0xf]
      %v3535 = vld [vmem:[%s3524 + $0x3c] sm:$0xf]
      %v3536 = vld [vmem:[%s3524 + $0x40] sm:$0xf]
      %v3537 = vld [vmem:[%s3524 + $0x48] sm:$0xf]
      %v3538 = vld [vmem:[%s3524 + $0x4c] sm:$0xf]
      %v3539 = vld [vmem:[%s3524 + $0x54] sm:$0xf]
      %v3540 = vld [vmem:[%s3524 + $0x58] sm:$0xf]
      %v3541 = vld [vmem:[%s3524 + $0x60] sm:$0xf]
      %v3542 = vld [vmem:[%s3524 + $0x64] sm:$0xf]
      %v3543 = vld [vmem:[%s3524 + $0x6c] sm:$0xf]
      %v3544 = vld [vmem:[%s3524 + $0x70] sm:$0xf]
      %v3545 = vld [vmem:[%s3524 + $0x78] sm:$0xf]
      %v3546 = vld [vmem:[%s3524 + $0x7c] sm:$0xf]
      %v3547 = vld [vmem:[%s3524 + $0x84] sm:$0xf]
      %v3548 = vld [vmem:[%s3524 + $0x88] sm:$0xf]
      %v3549 = vld [vmem:[%s3524 + $0x90] sm:$0xf]
      %v3550 = vld [vmem:[%s3524 + $0x94] sm:$0xf]
      %v3551 = vld [vmem:[%s3524 + $0x9c] sm:$0xf]
      %v3552 = vld [vmem:[%s3524 + $0xa0] sm:$0xf]
      %v3553 = vld [vmem:[%s3524 + $0xa8] sm:$0xf]
      %v3554 = vld [vmem:[%s3524 + $0xac] sm:$0xf]
      %v3555 = vld [vmem:[%s3524 + $0xb4] sm:$0xf]
      %v3556 = vld [vmem:[%s3524 + $0xb8] sm:$0xf]
      %s3557 = scalar_lea.vmem %s2, 384
      %v3558 = vld [vmem:[%s3557] sm:$0xf]
      %v3559 = vld [vmem:[%s3557 + $0x4] sm:$0xf]
      %v3560 = vld [vmem:[%s3557 + $0x8] sm:$0xf]
      %v3561 = vld [vmem:[%s3557 + $0xc] sm:$0xf]
      %v3562 = vld [vmem:[%s3557 + $0x10] sm:$0xf]
      %v3563 = vld [vmem:[%s3557 + $0x14] sm:$0xf]
      %v3564 = vld [vmem:[%s3557 + $0x18] sm:$0xf]
      %v3565 = vld [vmem:[%s3557 + $0x1c] sm:$0xf]
      %v3566 = vld [vmem:[%s3557 + $0x20] sm:$0xf]
      %v3567 = vld [vmem:[%s3557 + $0x24] sm:$0xf]
      %v3568 = vld [vmem:[%s3557 + $0x28] sm:$0xf]
      %v3569 = vld [vmem:[%s3557 + $0x2c] sm:$0xf]
      %v3570 = vld [vmem:[%s3557 + $0x30] sm:$0xf]
      %v3571 = vld [vmem:[%s3557 + $0x34] sm:$0xf]
      %v3572 = vld [vmem:[%s3557 + $0x38] sm:$0xf]
      %v3573 = vld [vmem:[%s3557 + $0x3c] sm:$0xf]
      %v3606 = vunpack.c.l.b16 %v3525
      %v3607 = vunpack.c.l.b16 %v3526
      %v3608 = vunpack.c.l.b16 %v3527
      %v3609 = vunpack.c.l.b16 %v3528
      %v3610 = vunpack.c.l.b16 %v3529
      %v3611 = vunpack.c.l.b16 %v3530
      %v3612 = vunpack.c.l.b16 %v3531
      %v3613 = vunpack.c.l.b16 %v3532
      %v3614 = vunpack.c.l.b16 %v3533
      %v3615 = vunpack.c.l.b16 %v3534
      %v3616 = vunpack.c.l.b16 %v3535
      %v3617 = vunpack.c.l.b16 %v3536
      %v3618 = vunpack.c.l.b16 %v3537
      %v3619 = vunpack.c.l.b16 %v3538
      %v3620 = vunpack.c.l.b16 %v3539
      %v3621 = vunpack.c.l.b16 %v3540
      %v3622 = vunpack.c.l.b16 %v3541
      %v3623 = vunpack.c.l.b16 %v3542
      %v3624 = vunpack.c.l.b16 %v3543
      %v3625 = vunpack.c.l.b16 %v3544
      %v3626 = vunpack.c.l.b16 %v3545
      %v3627 = vunpack.c.l.b16 %v3546
      %v3628 = vunpack.c.l.b16 %v3547
      %v3629 = vunpack.c.l.b16 %v3548
      %v3630 = vunpack.c.l.b16 %v3549
      %v3631 = vunpack.c.l.b16 %v3550
      %v3632 = vunpack.c.l.b16 %v3551
      %v3633 = vunpack.c.l.b16 %v3552
      %v3634 = vunpack.c.l.b16 %v3553
      %v3635 = vunpack.c.l.b16 %v3554
      %v3636 = vunpack.c.l.b16 %v3555
      %v3637 = vunpack.c.l.b16 %v3556
      %v3638 = vpack.c.b16 %v3607, %v3606
      %v3639 = vpack.c.b16 %v3609, %v3608
      %v3640 = vpack.c.b16 %v3611, %v3610
      %v3641 = vpack.c.b16 %v3613, %v3612
      %v3642 = vpack.c.b16 %v3615, %v3614
      %v3643 = vpack.c.b16 %v3617, %v3616
      %v3644 = vpack.c.b16 %v3619, %v3618
      %v3645 = vpack.c.b16 %v3621, %v3620
      %v3646 = vpack.c.b16 %v3623, %v3622
      %v3647 = vpack.c.b16 %v3625, %v3624
      %v3648 = vpack.c.b16 %v3627, %v3626
      %v3649 = vpack.c.b16 %v3629, %v3628
      %v3650 = vpack.c.b16 %v3631, %v3630
      %v3651 = vpack.c.b16 %v3633, %v3632
      %v3652 = vpack.c.b16 %v3635, %v3634
      %v3653 = vpack.c.b16 %v3637, %v3636
      %v3686 = vunpack.c.l.b16 %v3558
      %v3687 = vunpack.c.l.b16 %v3559
      %v3688 = vunpack.c.l.b16 %v3560
      %v3689 = vunpack.c.l.b16 %v3561
      %v3690 = vunpack.c.l.b16 %v3562
      %v3691 = vunpack.c.l.b16 %v3563
      %v3692 = vunpack.c.l.b16 %v3564
      %v3693 = vunpack.c.l.b16 %v3565
      %v3694 = vunpack.c.l.b16 %v3566
      %v3695 = vunpack.c.l.b16 %v3567
      %v3696 = vunpack.c.l.b16 %v3568
      %v3697 = vunpack.c.l.b16 %v3569
      %v3698 = vunpack.c.l.b16 %v3570
      %v3699 = vunpack.c.l.b16 %v3571
      %v3700 = vunpack.c.l.b16 %v3572
      %v3701 = vunpack.c.l.b16 %v3573
      %v3702 = vpack.c.b16 %v3687, %v3686
      %v3703 = vpack.c.b16 %v3689, %v3688
      %v3704 = vpack.c.b16 %v3691, %v3690
      %v3705 = vpack.c.b16 %v3693, %v3692
      %v3706 = vpack.c.b16 %v3695, %v3694
      %v3707 = vpack.c.b16 %v3697, %v3696
      %v3708 = vpack.c.b16 %v3699, %v3698
      %v3709 = vpack.c.b16 %v3701, %v3700
      %3718 = vmatprep.subr.bf16.mxu0 0
      %3719 = vmatpush1.bf16.msra.mxu0 %v3709
      %3720 = vmatprep.subr.bf16.mxu0 0
      %3721 = vmatpush1.bf16.msra.mxu0 %v3708
      %3722 = vmatprep.subr.bf16.mxu0 0
      %3723 = vmatpush1.bf16.msra.mxu0 %v3707
      %3724 = vmatprep.subr.bf16.mxu0 0
      %3725 = vmatpush1.bf16.msra.mxu0 %v3706
      %3726 = vmatprep.subr.bf16.mxu0 0
      %3727 = vmatpush1.bf16.msra.mxu0 %v3705
      %3728 = vmatprep.subr.bf16.mxu0 0
      %3729 = vmatpush1.bf16.msra.mxu0 %v3704
      %3730 = vmatprep.subr.bf16.mxu0 0
      %3731 = vmatpush1.bf16.msra.mxu0 %v3703
      %3732 = vmatprep.subr.bf16.mxu0 0
      %3733 = vmatpush1.bf16.msra.mxu0 %v3702
      %3734 = vmatprep.subr.bf16.mxu0 0
      %3735 = vmatpush2.bf16.msra.mxu0 0
      %3736 = vmatprep.subr.bf16.mxu0 0
      %3737 = vmatpush2.bf16.msra.mxu0 0
      %3738 = vmatprep.subr.bf16.mxu0 0
      %3739 = vmatpush2.bf16.msra.mxu0 0
      %3740 = vmatprep.subr.bf16.mxu0 0
      %3741 = vmatpush2.bf16.msra.mxu0 0
      %3742 = vmatprep.subr.bf16.mxu0 0
      %3743 = vmatpush2.bf16.msra.mxu0 0
      %3744 = vmatprep.subr.bf16.mxu0 0
      %3745 = vmatpush2.bf16.msra.mxu0 0
      %3746 = vmatprep.subr.bf16.mxu0 0
      %3747 = vmatpush2.bf16.msra.mxu0 0
      %3748 = vmatprep.subr.bf16.mxu0 0
      %3749 = vmatpush2.bf16.msra.mxu0 0
      %3750 = vmatprep.mubr.bf16.mxu0 0
      %3751 = vmatmul.mubr.bf16.gmra.mxu0 %v3638
      %v3752 = vpop.f32.mrf.mxu0
      %v3753 = vadd.f32 0.0, %v3752
      %v3754 = vpop.f32.mrf.mxu0
      %v3755 = vpop.f32.mrf.mxu0
      %v3756 = vadd.f32 0.0, %v3755
      %v3757 = vpop.f32.mrf.mxu0
      %3758 = vmatprep.mubr.bf16.mxu0 0
      %3759 = vmatmul.mubr.bf16.gmra.mxu0 %v3639
      %v3760 = vpop.f32.mrf.mxu0
      %v3761 = vadd.f32 0.0, %v3760
      %v3762 = vpop.f32.mrf.mxu0
      %v3763 = vpop.f32.mrf.mxu0
      %v3764 = vadd.f32 0.0, %v3763
      %v3765 = vpop.f32.mrf.mxu0
      %3766 = vmatprep.mubr.bf16.mxu0 0
      %3767 = vmatmul.mubr.bf16.gmra.mxu0 %v3640
      %v3768 = vpop.f32.mrf.mxu0
      %v3769 = vadd.f32 0.0, %v3768
      %v3770 = vpop.f32.mrf.mxu0
      %v3771 = vpop.f32.mrf.mxu0
      %v3772 = vadd.f32 0.0, %v3771
      %v3773 = vpop.f32.mrf.mxu0
      %3774 = vmatprep.mubr.bf16.mxu0 0
      %3775 = vmatmul.mubr.bf16.gmra.mxu0 %v3641
      %v3776 = vpop.f32.mrf.mxu0
      %v3777 = vadd.f32 0.0, %v3776
      %v3778 = vpop.f32.mrf.mxu0
      %v3779 = vpop.f32.mrf.mxu0
      %v3780 = vadd.f32 0.0, %v3779
      %v3781 = vpop.f32.mrf.mxu0
      %3782 = vmatprep.mubr.bf16.mxu0 0
      %3783 = vmatmul.mubr.bf16.gmra.mxu0 %v3642
      %v3784 = vpop.f32.mrf.mxu0
      %v3785 = vadd.f32 0.0, %v3784
      %v3786 = vpop.f32.mrf.mxu0
      %v3787 = vpop.f32.mrf.mxu0
      %v3788 = vadd.f32 0.0, %v3787
      %v3789 = vpop.f32.mrf.mxu0
      %3790 = vmatprep.mubr.bf16.mxu0 0
      %3791 = vmatmul.mubr.bf16.gmra.mxu0 %v3643
      %v3792 = vpop.f32.mrf.mxu0
      %v3793 = vadd.f32 0.0, %v3792
      %v3794 = vpop.f32.mrf.mxu0
      %v3795 = vpop.f32.mrf.mxu0
      %v3796 = vadd.f32 0.0, %v3795
      %v3797 = vpop.f32.mrf.mxu0
      %3798 = vmatprep.mubr.bf16.mxu0 0
      %3799 = vmatmul.mubr.bf16.gmra.mxu0 %v3644
      %v3800 = vpop.f32.mrf.mxu0
      %v3801 = vadd.f32 0.0, %v3800
      %v3802 = vpop.f32.mrf.mxu0
      %v3803 = vpop.f32.mrf.mxu0
      %v3804 = vadd.f32 0.0, %v3803
      %v3805 = vpop.f32.mrf.mxu0
      %3806 = vmatprep.mubr.bf16.mxu0 0
      %3807 = vmatmul.mubr.bf16.gmra.mxu0 %v3645
      %v3808 = vpop.f32.mrf.mxu0
      %v3809 = vadd.f32 0.0, %v3808
      %v3810 = vpop.f32.mrf.mxu0
      %v3811 = vpop.f32.mrf.mxu0
      %v3812 = vadd.f32 0.0, %v3811
      %v3813 = vpop.f32.mrf.mxu0
      %3814 = vmatprep.mubr.bf16.mxu0 0
      %3815 = vmatmul.mubr.bf16.gmra.mxu0 %v3646
      %v3816 = vpop.f32.mrf.mxu0
      %v3817 = vadd.f32 0.0, %v3816
      %v3818 = vpop.f32.mrf.mxu0
      %v3819 = vpop.f32.mrf.mxu0
      %v3820 = vadd.f32 0.0, %v3819
      %v3821 = vpop.f32.mrf.mxu0
      %3822 = vmatprep.mubr.bf16.mxu0 0
      %3823 = vmatmul.mubr.bf16.gmra.mxu0 %v3647
      %v3824 = vpop.f32.mrf.mxu0
      %v3825 = vadd.f32 0.0, %v3824
      %v3826 = vpop.f32.mrf.mxu0
      %v3827 = vpop.f32.mrf.mxu0
      %v3828 = vadd.f32 0.0, %v3827
      %v3829 = vpop.f32.mrf.mxu0
      %3830 = vmatprep.mubr.bf16.mxu0 0
      %3831 = vmatmul.mubr.bf16.gmra.mxu0 %v3648
      %v3832 = vpop.f32.mrf.mxu0
      %v3833 = vadd.f32 0.0, %v3832
      %v3834 = vpop.f32.mrf.mxu0
      %v3835 = vpop.f32.mrf.mxu0
      %v3836 = vadd.f32 0.0, %v3835
      %v3837 = vpop.f32.mrf.mxu0
      %3838 = vmatprep.mubr.bf16.mxu0 0
      %3839 = vmatmul.mubr.bf16.gmra.mxu0 %v3649
      %v3840 = vpop.f32.mrf.mxu0
      %v3841 = vadd.f32 0.0, %v3840
      %v3842 = vpop.f32.mrf.mxu0
      %v3843 = vpop.f32.mrf.mxu0
      %v3844 = vadd.f32 0.0, %v3843
      %v3845 = vpop.f32.mrf.mxu0
      %3846 = vmatprep.mubr.bf16.mxu0 0
      %3847 = vmatmul.mubr.bf16.gmra.mxu0 %v3650
      %v3848 = vpop.f32.mrf.mxu0
      %v3849 = vadd.f32 0.0, %v3848
      %v3850 = vpop.f32.mrf.mxu0
      %v3851 = vpop.f32.mrf.mxu0
      %v3852 = vadd.f32 0.0, %v3851
      %v3853 = vpop.f32.mrf.mxu0
      %3854 = vmatprep.mubr.bf16.mxu0 0
      %3855 = vmatmul.mubr.bf16.gmra.mxu0 %v3651
      %v3856 = vpop.f32.mrf.mxu0
      %v3857 = vadd.f32 0.0, %v3856
      %v3858 = vpop.f32.mrf.mxu0
      %v3859 = vpop.f32.mrf.mxu0
      %v3860 = vadd.f32 0.0, %v3859
      %v3861 = vpop.f32.mrf.mxu0
      %3862 = vmatprep.mubr.bf16.mxu0 0
      %3863 = vmatmul.mubr.bf16.gmra.mxu0 %v3652
      %v3864 = vpop.f32.mrf.mxu0
      %v3865 = vadd.f32 0.0, %v3864
      %v3866 = vpop.f32.mrf.mxu0
      %v3867 = vpop.f32.mrf.mxu0
      %v3868 = vadd.f32 0.0, %v3867
      %v3869 = vpop.f32.mrf.mxu0
      %3870 = vmatprep.mubr.bf16.mxu0 0
      %3871 = vmatmul.mubr.bf16.gmra.mxu0 %v3653
      %v3872 = vpop.f32.mrf.mxu0
      %v3873 = vadd.f32 0.0, %v3872
      %v3874 = vpop.f32.mrf.mxu0
      %v3875 = vpop.f32.mrf.mxu0
      %v3876 = vadd.f32 0.0, %v3875
      %v3877 = vpop.f32.mrf.mxu0
      %3878 = vdwg.mxu0
      %v3879 = vadd.f32 %v3492, %v3753
      %v3880 = vadd.f32 %v3493, %v3756
      %v3881 = vadd.f32 %v3494, %v3761
      %v3882 = vadd.f32 %v3495, %v3764
      %v3883 = vadd.f32 %v3496, %v3769
      %v3884 = vadd.f32 %v3497, %v3772
      %v3885 = vadd.f32 %v3498, %v3777
      %v3886 = vadd.f32 %v3499, %v3780
      %v3887 = vadd.f32 %v3500, %v3785
      %v3888 = vadd.f32 %v3501, %v3788
      %v3889 = vadd.f32 %v3502, %v3793
      %v3890 = vadd.f32 %v3503, %v3796
      %v3891 = vadd.f32 %v3504, %v3801
      %v3892 = vadd.f32 %v3505, %v3804
      %v3893 = vadd.f32 %v3506, %v3809
      %v3894 = vadd.f32 %v3507, %v3812
      %v3895 = vadd.f32 %v3508, %v3817
      %v3896 = vadd.f32 %v3509, %v3820
      %v3897 = vadd.f32 %v3510, %v3825
      %v3898 = vadd.f32 %v3511, %v3828
      %v3899 = vadd.f32 %v3512, %v3833
      %v3900 = vadd.f32 %v3513, %v3836
      %v3901 = vadd.f32 %v3514, %v3841
      %v3902 = vadd.f32 %v3515, %v3844
      %v3903 = vadd.f32 %v3516, %v3849
      %v3904 = vadd.f32 %v3517, %v3852
      %v3905 = vadd.f32 %v3518, %v3857
      %v3906 = vadd.f32 %v3519, %v3860
      %v3907 = vadd.f32 %v3520, %v3865
      %v3908 = vadd.f32 %v3521, %v3868
      %v3909 = vadd.f32 %v3522, %v3873
      %v3910 = vadd.f32 %v3523, %v3876
      %v3911 = vld [vmem:[%s3524] sm:$0xf]
      %v3912 = vld [vmem:[%s3524 + $0x4] sm:$0xf]
      %v3913 = vld [vmem:[%s3524 + $0x8] sm:$0x1]
      %v3914 = vld [vmem:[%s3524 + $0xc] sm:$0xf]
      %v3915 = vld [vmem:[%s3524 + $0x10] sm:$0xf]
      %v3916 = vld [vmem:[%s3524 + $0x14] sm:$0x1]
      %v3917 = vld [vmem:[%s3524 + $0x18] sm:$0xf]
      %v3918 = vld [vmem:[%s3524 + $0x1c] sm:$0xf]
      %v3919 = vld [vmem:[%s3524 + $0x20] sm:$0x1]
      %v3920 = vld [vmem:[%s3524 + $0x24] sm:$0xf]
      %v3921 = vld [vmem:[%s3524 + $0x28] sm:$0xf]
      %v3922 = vld [vmem:[%s3524 + $0x2c] sm:$0x1]
      %v3923 = vld [vmem:[%s3524 + $0x30] sm:$0xf]
      %v3924 = vld [vmem:[%s3524 + $0x34] sm:$0xf]
      %v3925 = vld [vmem:[%s3524 + $0x38] sm:$0x1]
      %v3926 = vld [vmem:[%s3524 + $0x3c] sm:$0xf]
      %v3927 = vld [vmem:[%s3524 + $0x40] sm:$0xf]
      %v3928 = vld [vmem:[%s3524 + $0x44] sm:$0x1]
      %v3929 = vld [vmem:[%s3524 + $0x48] sm:$0xf]
      %v3930 = vld [vmem:[%s3524 + $0x4c] sm:$0xf]
      %v3931 = vld [vmem:[%s3524 + $0x50] sm:$0x1]
      %v3932 = vld [vmem:[%s3524 + $0x54] sm:$0xf]
      %v3933 = vld [vmem:[%s3524 + $0x58] sm:$0xf]
      %v3934 = vld [vmem:[%s3524 + $0x5c] sm:$0x1]
      %v3935 = vld [vmem:[%s3524 + $0x60] sm:$0xf]
      %v3936 = vld [vmem:[%s3524 + $0x64] sm:$0xf]
      %v3937 = vld [vmem:[%s3524 + $0x68] sm:$0x1]
      %v3938 = vld [vmem:[%s3524 + $0x6c] sm:$0xf]
      %v3939 = vld [vmem:[%s3524 + $0x70] sm:$0xf]
      %v3940 = vld [vmem:[%s3524 + $0x74] sm:$0x1]
      %v3941 = vld [vmem:[%s3524 + $0x78] sm:$0xf]
      %v3942 = vld [vmem:[%s3524 + $0x7c] sm:$0xf]
      %v3943 = vld [vmem:[%s3524 + $0x80] sm:$0x1]
      %v3944 = vld [vmem:[%s3524 + $0x84] sm:$0xf]
      %v3945 = vld [vmem:[%s3524 + $0x88] sm:$0xf]
      %v3946 = vld [vmem:[%s3524 + $0x8c] sm:$0x1]
      %v3947 = vld [vmem:[%s3524 + $0x90] sm:$0xf]
      %v3948 = vld [vmem:[%s3524 + $0x94] sm:$0xf]
      %v3949 = vld [vmem:[%s3524 + $0x98] sm:$0x1]
      %v3950 = vld [vmem:[%s3524 + $0x9c] sm:$0xf]
      %v3951 = vld [vmem:[%s3524 + $0xa0] sm:$0xf]
      %v3952 = vld [vmem:[%s3524 + $0xa4] sm:$0x1]
      %v3953 = vld [vmem:[%s3524 + $0xa8] sm:$0xf]
      %v3954 = vld [vmem:[%s3524 + $0xac] sm:$0xf]
      %v3955 = vld [vmem:[%s3524 + $0xb0] sm:$0x1]
      %v3956 = vld [vmem:[%s3524 + $0xb4] sm:$0xf]
      %v3957 = vld [vmem:[%s3524 + $0xb8] sm:$0xf]
      %v3958 = vld [vmem:[%s3524 + $0xbc] sm:$0x1]
      %v3960 = vshrl.u32 %v3911, 16
      %v3962 = vrot.slane %v3960, 4
      %v3963 = vshll.u32 %v3911, 16
      %v3965 = vrot.slane %v3963, 5
      %v3966 = vor.u32 %v3962, %v3965
      %v3967 = vrot.slane %v3966, 4
      %v3969 = vshll.u32 %v3912, 16
      %v3971 = vrot.slane %v3969, 5
      %v3972 = vsel %vm420, %v3967, %v3971
      %v3973 = vshrl.u32 %v3912, 16
      %v3975 = vrot.slane %v3973, 4
      %v3976 = vor.u32 %v3975, %v3971
      %v3977 = vrot.slane %v3976, 4
      %v3979 = vshll.u32 %v3913, 16
      %v3981 = vrot.slane %v3979, 5
      %v3982 = vsel %vm420, %v3977, %v3981
      %v3984 = vshrl.u32 %v3914, 16
      %v3986 = vrot.slane %v3984, 4
      %v3987 = vshll.u32 %v3914, 16
      %v3989 = vrot.slane %v3987, 5
      %v3990 = vor.u32 %v3986, %v3989
      %v3991 = vrot.slane %v3990, 4
      %v3993 = vshll.u32 %v3915, 16
      %v3995 = vrot.slane %v3993, 5
      %v3996 = vsel %vm420, %v3991, %v3995
      %v3997 = vshrl.u32 %v3915, 16
      %v3999 = vrot.slane %v3997, 4
      %v4000 = vor.u32 %v3999, %v3995
      %v4001 = vrot.slane %v4000, 4
      %v4003 = vshll.u32 %v3916, 16
      %v4005 = vrot.slane %v4003, 5
      %v4006 = vsel %vm420, %v4001, %v4005
      %v4008 = vshrl.u32 %v3917, 16
      %v4010 = vrot.slane %v4008, 4
      %v4011 = vshll.u32 %v3917, 16
      %v4013 = vrot.slane %v4011, 5
      %v4014 = vor.u32 %v4010, %v4013
      %v4015 = vrot.slane %v4014, 4
      %v4017 = vshll.u32 %v3918, 16
      %v4019 = vrot.slane %v4017, 5
      %v4020 = vsel %vm420, %v4015, %v4019
      %v4021 = vshrl.u32 %v3918, 16
      %v4023 = vrot.slane %v4021, 4
      %v4024 = vor.u32 %v4023, %v4019
      %v4025 = vrot.slane %v4024, 4
      %v4027 = vshll.u32 %v3919, 16
      %v4029 = vrot.slane %v4027, 5
      %v4030 = vsel %vm420, %v4025, %v4029
      %v4032 = vshrl.u32 %v3920, 16
      %v4034 = vrot.slane %v4032, 4
      %v4035 = vshll.u32 %v3920, 16
      %v4037 = vrot.slane %v4035, 5
      %v4038 = vor.u32 %v4034, %v4037
      %v4039 = vrot.slane %v4038, 4
      %v4041 = vshll.u32 %v3921, 16
      %v4043 = vrot.slane %v4041, 5
      %v4044 = vsel %vm420, %v4039, %v4043
      %v4045 = vshrl.u32 %v3921, 16
      %v4047 = vrot.slane %v4045, 4
      %v4048 = vor.u32 %v4047, %v4043
      %v4049 = vrot.slane %v4048, 4
      %v4051 = vshll.u32 %v3922, 16
      %v4053 = vrot.slane %v4051, 5
      %v4054 = vsel %vm420, %v4049, %v4053
      %v4056 = vshrl.u32 %v3923, 16
      %v4058 = vrot.slane %v4056, 4
      %v4059 = vshll.u32 %v3923, 16
      %v4061 = vrot.slane %v4059, 5
      %v4062 = vor.u32 %v4058, %v4061
      %v4063 = vrot.slane %v4062, 4
      %v4065 = vshll.u32 %v3924, 16
      %v4067 = vrot.slane %v4065, 5
      %v4068 = vsel %vm420, %v4063, %v4067
      %v4069 = vshrl.u32 %v3924, 16
      %v4071 = vrot.slane %v4069, 4
      %v4072 = vor.u32 %v4071, %v4067
      %v4073 = vrot.slane %v4072, 4
      %v4075 = vshll.u32 %v3925, 16
      %v4077 = vrot.slane %v4075, 5
      %v4078 = vsel %vm420, %v4073, %v4077
      %v4080 = vshrl.u32 %v3926, 16
      %v4082 = vrot.slane %v4080, 4
      %v4083 = vshll.u32 %v3926, 16
      %v4085 = vrot.slane %v4083, 5
      %v4086 = vor.u32 %v4082, %v4085
      %v4087 = vrot.slane %v4086, 4
      %v4089 = vshll.u32 %v3927, 16
      %v4091 = vrot.slane %v4089, 5
      %v4092 = vsel %vm420, %v4087, %v4091
      %v4093 = vshrl.u32 %v3927, 16
      %v4095 = vrot.slane %v4093, 4
      %v4096 = vor.u32 %v4095, %v4091
      %v4097 = vrot.slane %v4096, 4
      %v4099 = vshll.u32 %v3928, 16
      %v4101 = vrot.slane %v4099, 5
      %v4102 = vsel %vm420, %v4097, %v4101
      %v4104 = vshrl.u32 %v3929, 16
      %v4106 = vrot.slane %v4104, 4
      %v4107 = vshll.u32 %v3929, 16
      %v4109 = vrot.slane %v4107, 5
      %v4110 = vor.u32 %v4106, %v4109
      %v4111 = vrot.slane %v4110, 4
      %v4113 = vshll.u32 %v3930, 16
      %v4115 = vrot.slane %v4113, 5
      %v4116 = vsel %vm420, %v4111, %v4115
      %v4117 = vshrl.u32 %v3930, 16
      %v4119 = vrot.slane %v4117, 4
      %v4120 = vor.u32 %v4119, %v4115
      %v4121 = vrot.slane %v4120, 4
      %v4123 = vshll.u32 %v3931, 16
      %v4125 = vrot.slane %v4123, 5
      %v4126 = vsel %vm420, %v4121, %v4125
      %v4128 = vshrl.u32 %v3932, 16
      %v4130 = vrot.slane %v4128, 4
      %v4131 = vshll.u32 %v3932, 16
      %v4133 = vrot.slane %v4131, 5
      %v4134 = vor.u32 %v4130, %v4133
      %v4135 = vrot.slane %v4134, 4
      %v4137 = vshll.u32 %v3933, 16
      %v4139 = vrot.slane %v4137, 5
      %v4140 = vsel %vm420, %v4135, %v4139
      %v4141 = vshrl.u32 %v3933, 16
      %v4143 = vrot.slane %v4141, 4
      %v4144 = vor.u32 %v4143, %v4139
      %v4145 = vrot.slane %v4144, 4
      %v4147 = vshll.u32 %v3934, 16
      %v4149 = vrot.slane %v4147, 5
      %v4150 = vsel %vm420, %v4145, %v4149
      %v4152 = vshrl.u32 %v3935, 16
      %v4154 = vrot.slane %v4152, 4
      %v4155 = vshll.u32 %v3935, 16
      %v4157 = vrot.slane %v4155, 5
      %v4158 = vor.u32 %v4154, %v4157
      %v4159 = vrot.slane %v4158, 4
      %v4161 = vshll.u32 %v3936, 16
      %v4163 = vrot.slane %v4161, 5
      %v4164 = vsel %vm420, %v4159, %v4163
      %v4165 = vshrl.u32 %v3936, 16
      %v4167 = vrot.slane %v4165, 4
      %v4168 = vor.u32 %v4167, %v4163
      %v4169 = vrot.slane %v4168, 4
      %v4171 = vshll.u32 %v3937, 16
      %v4173 = vrot.slane %v4171, 5
      %v4174 = vsel %vm420, %v4169, %v4173
      %v4176 = vshrl.u32 %v3938, 16
      %v4178 = vrot.slane %v4176, 4
      %v4179 = vshll.u32 %v3938, 16
      %v4181 = vrot.slane %v4179, 5
      %v4182 = vor.u32 %v4178, %v4181
      %v4183 = vrot.slane %v4182, 4
      %v4185 = vshll.u32 %v3939, 16
      %v4187 = vrot.slane %v4185, 5
      %v4188 = vsel %vm420, %v4183, %v4187
      %v4189 = vshrl.u32 %v3939, 16
      %v4191 = vrot.slane %v4189, 4
      %v4192 = vor.u32 %v4191, %v4187
      %v4193 = vrot.slane %v4192, 4
      %v4195 = vshll.u32 %v3940, 16
      %v4197 = vrot.slane %v4195, 5
      %v4198 = vsel %vm420, %v4193, %v4197
      %v4200 = vshrl.u32 %v3941, 16
      %v4202 = vrot.slane %v4200, 4
      %v4203 = vshll.u32 %v3941, 16
      %v4205 = vrot.slane %v4203, 5
      %v4206 = vor.u32 %v4202, %v4205
      %v4207 = vrot.slane %v4206, 4
      %v4209 = vshll.u32 %v3942, 16
      %v4211 = vrot.slane %v4209, 5
      %v4212 = vsel %vm420, %v4207, %v4211
      %v4213 = vshrl.u32 %v3942, 16
      %v4215 = vrot.slane %v4213, 4
      %v4216 = vor.u32 %v4215, %v4211
      %v4217 = vrot.slane %v4216, 4
      %v4219 = vshll.u32 %v3943, 16
      %v4221 = vrot.slane %v4219, 5
      %v4222 = vsel %vm420, %v4217, %v4221
      %v4224 = vshrl.u32 %v3944, 16
      %v4226 = vrot.slane %v4224, 4
      %v4227 = vshll.u32 %v3944, 16
      %v4229 = vrot.slane %v4227, 5
      %v4230 = vor.u32 %v4226, %v4229
      %v4231 = vrot.slane %v4230, 4
      %v4233 = vshll.u32 %v3945, 16
      %v4235 = vrot.slane %v4233, 5
      %v4236 = vsel %vm420, %v4231, %v4235
      %v4237 = vshrl.u32 %v3945, 16
      %v4239 = vrot.slane %v4237, 4
      %v4240 = vor.u32 %v4239, %v4235
      %v4241 = vrot.slane %v4240, 4
      %v4243 = vshll.u32 %v3946, 16
      %v4245 = vrot.slane %v4243, 5
      %v4246 = vsel %vm420, %v4241, %v4245
      %v4248 = vshrl.u32 %v3947, 16
      %v4250 = vrot.slane %v4248, 4
      %v4251 = vshll.u32 %v3947, 16
      %v4253 = vrot.slane %v4251, 5
      %v4254 = vor.u32 %v4250, %v4253
      %v4255 = vrot.slane %v4254, 4
      %v4257 = vshll.u32 %v3948, 16
      %v4259 = vrot.slane %v4257, 5
      %v4260 = vsel %vm420, %v4255, %v4259
      %v4261 = vshrl.u32 %v3948, 16
      %v4263 = vrot.slane %v4261, 4
      %v4264 = vor.u32 %v4263, %v4259
      %v4265 = vrot.slane %v4264, 4
      %v4267 = vshll.u32 %v3949, 16
      %v4269 = vrot.slane %v4267, 5
      %v4270 = vsel %vm420, %v4265, %v4269
      %v4272 = vshrl.u32 %v3950, 16
      %v4274 = vrot.slane %v4272, 4
      %v4275 = vshll.u32 %v3950, 16
      %v4277 = vrot.slane %v4275, 5
      %v4278 = vor.u32 %v4274, %v4277
      %v4279 = vrot.slane %v4278, 4
      %v4281 = vshll.u32 %v3951, 16
      %v4283 = vrot.slane %v4281, 5
      %v4284 = vsel %vm420, %v4279, %v4283
      %v4285 = vshrl.u32 %v3951, 16
      %v4287 = vrot.slane %v4285, 4
      %v4288 = vor.u32 %v4287, %v4283
      %v4289 = vrot.slane %v4288, 4
      %v4291 = vshll.u32 %v3952, 16
      %v4293 = vrot.slane %v4291, 5
      %v4294 = vsel %vm420, %v4289, %v4293
      %v4296 = vshrl.u32 %v3953, 16
      %v4298 = vrot.slane %v4296, 4
      %v4299 = vshll.u32 %v3953, 16
      %v4301 = vrot.slane %v4299, 5
      %v4302 = vor.u32 %v4298, %v4301
      %v4303 = vrot.slane %v4302, 4
      %v4305 = vshll.u32 %v3954, 16
      %v4307 = vrot.slane %v4305, 5
      %v4308 = vsel %vm420, %v4303, %v4307
      %v4309 = vshrl.u32 %v3954, 16
      %v4311 = vrot.slane %v4309, 4
      %v4312 = vor.u32 %v4311, %v4307
      %v4313 = vrot.slane %v4312, 4
      %v4315 = vshll.u32 %v3955, 16
      %v4317 = vrot.slane %v4315, 5
      %v4318 = vsel %vm420, %v4313, %v4317
      %v4320 = vshrl.u32 %v3956, 16
      %v4322 = vrot.slane %v4320, 4
      %v4323 = vshll.u32 %v3956, 16
      %v4325 = vrot.slane %v4323, 5
      %v4326 = vor.u32 %v4322, %v4325
      %v4327 = vrot.slane %v4326, 4
      %v4329 = vshll.u32 %v3957, 16
      %v4331 = vrot.slane %v4329, 5
      %v4332 = vsel %vm420, %v4327, %v4331
      %v4333 = vshrl.u32 %v3957, 16
      %v4335 = vrot.slane %v4333, 4
      %v4336 = vor.u32 %v4335, %v4331
      %v4337 = vrot.slane %v4336, 4
      %v4339 = vshll.u32 %v3958, 16
      %v4341 = vrot.slane %v4339, 5
      %v4342 = vsel %vm420, %v4337, %v4341
      %s4343 = scalar_lea.vmem %s2, 448
      %v4344 = vld [vmem:[%s4343] sm:$0xf]
      %v4345 = vld [vmem:[%s4343 + $0x4] sm:$0xf]
      %v4346 = vld [vmem:[%s4343 + $0x8] sm:$0xf]
      %v4347 = vld [vmem:[%s4343 + $0xc] sm:$0xf]
      %v4348 = vld [vmem:[%s4343 + $0x10] sm:$0xf]
      %v4349 = vld [vmem:[%s4343 + $0x14] sm:$0xf]
      %v4350 = vld [vmem:[%s4343 + $0x18] sm:$0xf]
      %v4351 = vld [vmem:[%s4343 + $0x1c] sm:$0xf]
      %v4352 = vld [vmem:[%s4343 + $0x20] sm:$0xf]
      %v4353 = vld [vmem:[%s4343 + $0x24] sm:$0xf]
      %v4354 = vld [vmem:[%s4343 + $0x28] sm:$0xf]
      %v4355 = vld [vmem:[%s4343 + $0x2c] sm:$0xf]
      %v4356 = vld [vmem:[%s4343 + $0x30] sm:$0xf]
      %v4357 = vld [vmem:[%s4343 + $0x34] sm:$0xf]
      %v4358 = vld [vmem:[%s4343 + $0x38] sm:$0xf]
      %v4359 = vld [vmem:[%s4343 + $0x3c] sm:$0xf]
      %v4360 = vunpack.c.l.b16 %v3972
      %v4361 = vunpack.c.l.b16 %v3982
      %v4362 = vunpack.c.l.b16 %v3996
      %v4363 = vunpack.c.l.b16 %v4006
      %v4364 = vunpack.c.l.b16 %v4020
      %v4365 = vunpack.c.l.b16 %v4030
      %v4366 = vunpack.c.l.b16 %v4044
      %v4367 = vunpack.c.l.b16 %v4054
      %v4368 = vunpack.c.l.b16 %v4068
      %v4369 = vunpack.c.l.b16 %v4078
      %v4370 = vunpack.c.l.b16 %v4092
      %v4371 = vunpack.c.l.b16 %v4102
      %v4372 = vunpack.c.l.b16 %v4116
      %v4373 = vunpack.c.l.b16 %v4126
      %v4374 = vunpack.c.l.b16 %v4140
      %v4375 = vunpack.c.l.b16 %v4150
      %v4376 = vunpack.c.l.b16 %v4164
      %v4377 = vunpack.c.l.b16 %v4174
      %v4378 = vunpack.c.l.b16 %v4188
      %v4379 = vunpack.c.l.b16 %v4198
      %v4380 = vunpack.c.l.b16 %v4212
      %v4381 = vunpack.c.l.b16 %v4222
      %v4382 = vunpack.c.l.b16 %v4236
      %v4383 = vunpack.c.l.b16 %v4246
      %v4384 = vunpack.c.l.b16 %v4260
      %v4385 = vunpack.c.l.b16 %v4270
      %v4386 = vunpack.c.l.b16 %v4284
      %v4387 = vunpack.c.l.b16 %v4294
      %v4388 = vunpack.c.l.b16 %v4308
      %v4389 = vunpack.c.l.b16 %v4318
      %v4390 = vunpack.c.l.b16 %v4332
      %v4391 = vunpack.c.l.b16 %v4342
      %v4392 = vpack.c.b16 %v4361, %v4360
      %v4393 = vpack.c.b16 %v4363, %v4362
      %v4394 = vpack.c.b16 %v4365, %v4364
      %v4395 = vpack.c.b16 %v4367, %v4366
      %v4396 = vpack.c.b16 %v4369, %v4368
      %v4397 = vpack.c.b16 %v4371, %v4370
      %v4398 = vpack.c.b16 %v4373, %v4372
      %v4399 = vpack.c.b16 %v4375, %v4374
      %v4400 = vpack.c.b16 %v4377, %v4376
      %v4401 = vpack.c.b16 %v4379, %v4378
      %v4402 = vpack.c.b16 %v4381, %v4380
      %v4403 = vpack.c.b16 %v4383, %v4382
      %v4404 = vpack.c.b16 %v4385, %v4384
      %v4405 = vpack.c.b16 %v4387, %v4386
      %v4406 = vpack.c.b16 %v4389, %v4388
      %v4407 = vpack.c.b16 %v4391, %v4390
      %v4440 = vunpack.c.l.b16 %v4344
      %v4441 = vunpack.c.l.b16 %v4345
      %v4442 = vunpack.c.l.b16 %v4346
      %v4443 = vunpack.c.l.b16 %v4347
      %v4444 = vunpack.c.l.b16 %v4348
      %v4445 = vunpack.c.l.b16 %v4349
      %v4446 = vunpack.c.l.b16 %v4350
      %v4447 = vunpack.c.l.b16 %v4351
      %v4448 = vunpack.c.l.b16 %v4352
      %v4449 = vunpack.c.l.b16 %v4353
      %v4450 = vunpack.c.l.b16 %v4354
      %v4451 = vunpack.c.l.b16 %v4355
      %v4452 = vunpack.c.l.b16 %v4356
      %v4453 = vunpack.c.l.b16 %v4357
      %v4454 = vunpack.c.l.b16 %v4358
      %v4455 = vunpack.c.l.b16 %v4359
      %v4456 = vpack.c.b16 %v4441, %v4440
      %v4457 = vpack.c.b16 %v4443, %v4442
      %v4458 = vpack.c.b16 %v4445, %v4444
      %v4459 = vpack.c.b16 %v4447, %v4446
      %v4460 = vpack.c.b16 %v4449, %v4448
      %v4461 = vpack.c.b16 %v4451, %v4450
      %v4462 = vpack.c.b16 %v4453, %v4452
      %v4463 = vpack.c.b16 %v4455, %v4454
      %4472 = vmatprep.subr.bf16.mxu0 0
      %4473 = vmatpush1.bf16.msra.mxu0 %v4463
      %4474 = vmatprep.subr.bf16.mxu0 0
      %4475 = vmatpush1.bf16.msra.mxu0 %v4462
      %4476 = vmatprep.subr.bf16.mxu0 0
      %4477 = vmatpush1.bf16.msra.mxu0 %v4461
      %4478 = vmatprep.subr.bf16.mxu0 0
      %4479 = vmatpush1.bf16.msra.mxu0 %v4460
      %4480 = vmatprep.subr.bf16.mxu0 0
      %4481 = vmatpush1.bf16.msra.mxu0 %v4459
      %4482 = vmatprep.subr.bf16.mxu0 0
      %4483 = vmatpush1.bf16.msra.mxu0 %v4458
      %4484 = vmatprep.subr.bf16.mxu0 0
      %4485 = vmatpush1.bf16.msra.mxu0 %v4457
      %4486 = vmatprep.subr.bf16.mxu0 0
      %4487 = vmatpush1.bf16.msra.mxu0 %v4456
      %4488 = vmatprep.subr.bf16.mxu0 0
      %4489 = vmatpush2.bf16.msra.mxu0 0
      %4490 = vmatprep.subr.bf16.mxu0 0
      %4491 = vmatpush2.bf16.msra.mxu0 0
      %4492 = vmatprep.subr.bf16.mxu0 0
      %4493 = vmatpush2.bf16.msra.mxu0 0
      %4494 = vmatprep.subr.bf16.mxu0 0
      %4495 = vmatpush2.bf16.msra.mxu0 0
      %4496 = vmatprep.subr.bf16.mxu0 0
      %4497 = vmatpush2.bf16.msra.mxu0 0
      %4498 = vmatprep.subr.bf16.mxu0 0
      %4499 = vmatpush2.bf16.msra.mxu0 0
      %4500 = vmatprep.subr.bf16.mxu0 0
      %4501 = vmatpush2.bf16.msra.mxu0 0
      %4502 = vmatprep.subr.bf16.mxu0 0
      %4503 = vmatpush2.bf16.msra.mxu0 0
      %4504 = vmatprep.mubr.bf16.mxu0 0
      %4505 = vmatmul.mubr.bf16.gmra.mxu0 %v4392
      %v4506 = vpop.f32.mrf.mxu0
      %v4507 = vadd.f32 0.0, %v4506
      %v4508 = vpop.f32.mrf.mxu0
      %v4509 = vpop.f32.mrf.mxu0
      %v4510 = vadd.f32 0.0, %v4509
      %v4511 = vpop.f32.mrf.mxu0
      %4512 = vmatprep.mubr.bf16.mxu0 0
      %4513 = vmatmul.mubr.bf16.gmra.mxu0 %v4393
      %v4514 = vpop.f32.mrf.mxu0
      %v4515 = vadd.f32 0.0, %v4514
      %v4516 = vpop.f32.mrf.mxu0
      %v4517 = vpop.f32.mrf.mxu0
      %v4518 = vadd.f32 0.0, %v4517
      %v4519 = vpop.f32.mrf.mxu0
      %4520 = vmatprep.mubr.bf16.mxu0 0
      %4521 = vmatmul.mubr.bf16.gmra.mxu0 %v4394
      %v4522 = vpop.f32.mrf.mxu0
      %v4523 = vadd.f32 0.0, %v4522
      %v4524 = vpop.f32.mrf.mxu0
      %v4525 = vpop.f32.mrf.mxu0
      %v4526 = vadd.f32 0.0, %v4525
      %v4527 = vpop.f32.mrf.mxu0
      %4528 = vmatprep.mubr.bf16.mxu0 0
      %4529 = vmatmul.mubr.bf16.gmra.mxu0 %v4395
      %v4530 = vpop.f32.mrf.mxu0
      %v4531 = vadd.f32 0.0, %v4530
      %v4532 = vpop.f32.mrf.mxu0
      %v4533 = vpop.f32.mrf.mxu0
      %v4534 = vadd.f32 0.0, %v4533
      %v4535 = vpop.f32.mrf.mxu0
      %4536 = vmatprep.mubr.bf16.mxu0 0
      %4537 = vmatmul.mubr.bf16.gmra.mxu0 %v4396
      %v4538 = vpop.f32.mrf.mxu0
      %v4539 = vadd.f32 0.0, %v4538
      %v4540 = vpop.f32.mrf.mxu0
      %v4541 = vpop.f32.mrf.mxu0
      %v4542 = vadd.f32 0.0, %v4541
      %v4543 = vpop.f32.mrf.mxu0
      %4544 = vmatprep.mubr.bf16.mxu0 0
      %4545 = vmatmul.mubr.bf16.gmra.mxu0 %v4397
      %v4546 = vpop.f32.mrf.mxu0
      %v4547 = vadd.f32 0.0, %v4546
      %v4548 = vpop.f32.mrf.mxu0
      %v4549 = vpop.f32.mrf.mxu0
      %v4550 = vadd.f32 0.0, %v4549
      %v4551 = vpop.f32.mrf.mxu0
      %4552 = vmatprep.mubr.bf16.mxu0 0
      %4553 = vmatmul.mubr.bf16.gmra.mxu0 %v4398
      %v4554 = vpop.f32.mrf.mxu0
      %v4555 = vadd.f32 0.0, %v4554
      %v4556 = vpop.f32.mrf.mxu0
      %v4557 = vpop.f32.mrf.mxu0
      %v4558 = vadd.f32 0.0, %v4557
      %v4559 = vpop.f32.mrf.mxu0
      %4560 = vmatprep.mubr.bf16.mxu0 0
      %4561 = vmatmul.mubr.bf16.gmra.mxu0 %v4399
      %v4562 = vpop.f32.mrf.mxu0
      %v4563 = vadd.f32 0.0, %v4562
      %v4564 = vpop.f32.mrf.mxu0
      %v4565 = vpop.f32.mrf.mxu0
      %v4566 = vadd.f32 0.0, %v4565
      %v4567 = vpop.f32.mrf.mxu0
      %4568 = vmatprep.mubr.bf16.mxu0 0
      %4569 = vmatmul.mubr.bf16.gmra.mxu0 %v4400
      %v4570 = vpop.f32.mrf.mxu0
      %v4571 = vadd.f32 0.0, %v4570
      %v4572 = vpop.f32.mrf.mxu0
      %v4573 = vpop.f32.mrf.mxu0
      %v4574 = vadd.f32 0.0, %v4573
      %v4575 = vpop.f32.mrf.mxu0
      %4576 = vmatprep.mubr.bf16.mxu0 0
      %4577 = vmatmul.mubr.bf16.gmra.mxu0 %v4401
      %v4578 = vpop.f32.mrf.mxu0
      %v4579 = vadd.f32 0.0, %v4578
      %v4580 = vpop.f32.mrf.mxu0
      %v4581 = vpop.f32.mrf.mxu0
      %v4582 = vadd.f32 0.0, %v4581
      %v4583 = vpop.f32.mrf.mxu0
      %4584 = vmatprep.mubr.bf16.mxu0 0
      %4585 = vmatmul.mubr.bf16.gmra.mxu0 %v4402
      %v4586 = vpop.f32.mrf.mxu0
      %v4587 = vadd.f32 0.0, %v4586
      %v4588 = vpop.f32.mrf.mxu0
      %v4589 = vpop.f32.mrf.mxu0
      %v4590 = vadd.f32 0.0, %v4589
      %v4591 = vpop.f32.mrf.mxu0
      %4592 = vmatprep.mubr.bf16.mxu0 0
      %4593 = vmatmul.mubr.bf16.gmra.mxu0 %v4403
      %v4594 = vpop.f32.mrf.mxu0
      %v4595 = vadd.f32 0.0, %v4594
      %v4596 = vpop.f32.mrf.mxu0
      %v4597 = vpop.f32.mrf.mxu0
      %v4598 = vadd.f32 0.0, %v4597
      %v4599 = vpop.f32.mrf.mxu0
      %4600 = vmatprep.mubr.bf16.mxu0 0
      %4601 = vmatmul.mubr.bf16.gmra.mxu0 %v4404
      %v4602 = vpop.f32.mrf.mxu0
      %v4603 = vadd.f32 0.0, %v4602
      %v4604 = vpop.f32.mrf.mxu0
      %v4605 = vpop.f32.mrf.mxu0
      %v4606 = vadd.f32 0.0, %v4605
      %v4607 = vpop.f32.mrf.mxu0
      %4608 = vmatprep.mubr.bf16.mxu0 0
      %4609 = vmatmul.mubr.bf16.gmra.mxu0 %v4405
      %v4610 = vpop.f32.mrf.mxu0
      %v4611 = vadd.f32 0.0, %v4610
      %v4612 = vpop.f32.mrf.mxu0
      %v4613 = vpop.f32.mrf.mxu0
      %v4614 = vadd.f32 0.0, %v4613
      %v4615 = vpop.f32.mrf.mxu0
      %4616 = vmatprep.mubr.bf16.mxu0 0
      %4617 = vmatmul.mubr.bf16.gmra.mxu0 %v4406
      %v4618 = vpop.f32.mrf.mxu0
      %v4619 = vadd.f32 0.0, %v4618
      %v4620 = vpop.f32.mrf.mxu0
      %v4621 = vpop.f32.mrf.mxu0
      %v4622 = vadd.f32 0.0, %v4621
      %v4623 = vpop.f32.mrf.mxu0
      %4624 = vmatprep.mubr.bf16.mxu0 0
      %4625 = vmatmul.mubr.bf16.gmra.mxu0 %v4407
      %v4626 = vpop.f32.mrf.mxu0
      %v4627 = vadd.f32 0.0, %v4626
      %v4628 = vpop.f32.mrf.mxu0
      %v4629 = vpop.f32.mrf.mxu0
      %v4630 = vadd.f32 0.0, %v4629
      %v4631 = vpop.f32.mrf.mxu0
      %4632 = vdwg.mxu0
      %v4633 = vadd.f32 %v3879, %v4507
      %v4634 = vadd.f32 %v3880, %v4510
      %v4635 = vadd.f32 %v3881, %v4515
      %v4636 = vadd.f32 %v3882, %v4518
      %v4637 = vadd.f32 %v3883, %v4523
      %v4638 = vadd.f32 %v3884, %v4526
      %v4639 = vadd.f32 %v3885, %v4531
      %v4640 = vadd.f32 %v3886, %v4534
      %v4641 = vadd.f32 %v3887, %v4539
      %v4642 = vadd.f32 %v3888, %v4542
      %v4643 = vadd.f32 %v3889, %v4547
      %v4644 = vadd.f32 %v3890, %v4550
      %v4645 = vadd.f32 %v3891, %v4555
      %v4646 = vadd.f32 %v3892, %v4558
      %v4647 = vadd.f32 %v3893, %v4563
      %v4648 = vadd.f32 %v3894, %v4566
      %v4649 = vadd.f32 %v3895, %v4571
      %v4650 = vadd.f32 %v3896, %v4574
      %v4651 = vadd.f32 %v3897, %v4579
      %v4652 = vadd.f32 %v3898, %v4582
      %v4653 = vadd.f32 %v3899, %v4587
      %v4654 = vadd.f32 %v3900, %v4590
      %v4655 = vadd.f32 %v3901, %v4595
      %v4656 = vadd.f32 %v3902, %v4598
      %v4657 = vadd.f32 %v3903, %v4603
      %v4658 = vadd.f32 %v3904, %v4606
      %v4659 = vadd.f32 %v3905, %v4611
      %v4660 = vadd.f32 %v3906, %v4614
      %v4661 = vadd.f32 %v3907, %v4619
      %v4662 = vadd.f32 %v3908, %v4622
      %v4663 = vadd.f32 %v3909, %v4627
      %v4664 = vadd.f32 %v3910, %v4630
      %v4665 = vld [vmem:[%s3524] sm:$0xe]
      %v4666 = vld [vmem:[%s3524 + $0xc] sm:$0xe]
      %v4667 = vld [vmem:[%s3524 + $0x18] sm:$0xe]
      %v4668 = vld [vmem:[%s3524 + $0x24] sm:$0xe]
      %v4669 = vld [vmem:[%s3524 + $0x30] sm:$0xe]
      %v4670 = vld [vmem:[%s3524 + $0x3c] sm:$0xe]
      %v4671 = vld [vmem:[%s3524 + $0x48] sm:$0xe]
      %v4672 = vld [vmem:[%s3524 + $0x54] sm:$0xe]
      %v4673 = vld [vmem:[%s3524 + $0x60] sm:$0xe]
      %v4674 = vld [vmem:[%s3524 + $0x6c] sm:$0xe]
      %v4675 = vld [vmem:[%s3524 + $0x78] sm:$0xe]
      %v4676 = vld [vmem:[%s3524 + $0x84] sm:$0xe]
      %v4677 = vld [vmem:[%s3524 + $0x90] sm:$0xe]
      %v4678 = vld [vmem:[%s3524 + $0x9c] sm:$0xe]
      %v4679 = vld [vmem:[%s3524 + $0xa8] sm:$0xe]
      %v4680 = vld [vmem:[%s3524 + $0xb4] sm:$0xe]
      %v4729 = vrot.slane %v4665, 5
      %v4730 = vrot.slane %v4729, 4
      %v4731 = vrot.slane %v3912, 5
      %v4732 = vsel %vm1450, %v4730, %v4731
      %v4733 = vrot.slane %v4731, 4
      %v4734 = vrot.slane %v3913, 5
      %v4735 = vsel %vm1450, %v4733, %v4734
      %v4736 = vrot.slane %v4666, 5
      %v4737 = vrot.slane %v4736, 4
      %v4738 = vrot.slane %v3915, 5
      %v4739 = vsel %vm1450, %v4737, %v4738
      %v4740 = vrot.slane %v4738, 4
      %v4741 = vrot.slane %v3916, 5
      %v4742 = vsel %vm1450, %v4740, %v4741
      %v4743 = vrot.slane %v4667, 5
      %v4744 = vrot.slane %v4743, 4
      %v4745 = vrot.slane %v3918, 5
      %v4746 = vsel %vm1450, %v4744, %v4745
      %v4747 = vrot.slane %v4745, 4
      %v4748 = vrot.slane %v3919, 5
      %v4749 = vsel %vm1450, %v4747, %v4748
      %v4750 = vrot.slane %v4668, 5
      %v4751 = vrot.slane %v4750, 4
      %v4752 = vrot.slane %v3921, 5
      %v4753 = vsel %vm1450, %v4751, %v4752
      %v4754 = vrot.slane %v4752, 4
      %v4755 = vrot.slane %v3922, 5
      %v4756 = vsel %vm1450, %v4754, %v4755
      %v4757 = vrot.slane %v4669, 5
      %v4758 = vrot.slane %v4757, 4
      %v4759 = vrot.slane %v3924, 5
      %v4760 = vsel %vm1450, %v4758, %v4759
      %v4761 = vrot.slane %v4759, 4
      %v4762 = vrot.slane %v3925, 5
      %v4763 = vsel %vm1450, %v4761, %v4762
      %v4764 = vrot.slane %v4670, 5
      %v4765 = vrot.slane %v4764, 4
      %v4766 = vrot.slane %v3927, 5
      %v4767 = vsel %vm1450, %v4765, %v4766
      %v4768 = vrot.slane %v4766, 4
      %v4769 = vrot.slane %v3928, 5
      %v4770 = vsel %vm1450, %v4768, %v4769
      %v4771 = vrot.slane %v4671, 5
      %v4772 = vrot.slane %v4771, 4
      %v4773 = vrot.slane %v3930, 5
      %v4774 = vsel %vm1450, %v4772, %v4773
      %v4775 = vrot.slane %v4773, 4
      %v4776 = vrot.slane %v3931, 5
      %v4777 = vsel %vm1450, %v4775, %v4776
      %v4778 = vrot.slane %v4672, 5
      %v4779 = vrot.slane %v4778, 4
      %v4780 = vrot.slane %v3933, 5
      %v4781 = vsel %vm1450, %v4779, %v4780
      %v4782 = vrot.slane %v4780, 4
      %v4783 = vrot.slane %v3934, 5
      %v4784 = vsel %vm1450, %v4782, %v4783
      %v4785 = vrot.slane %v4673, 5
      %v4786 = vrot.slane %v4785, 4
      %v4787 = vrot.slane %v3936, 5
      %v4788 = vsel %vm1450, %v4786, %v4787
      %v4789 = vrot.slane %v4787, 4
      %v4790 = vrot.slane %v3937, 5
      %v4791 = vsel %vm1450, %v4789, %v4790
      %v4792 = vrot.slane %v4674, 5
      %v4793 = vrot.slane %v4792, 4
      %v4794 = vrot.slane %v3939, 5
      %v4795 = vsel %vm1450, %v4793, %v4794
      %v4796 = vrot.slane %v4794, 4
      %v4797 = vrot.slane %v3940, 5
      %v4798 = vsel %vm1450, %v4796, %v4797
      %v4799 = vrot.slane %v4675, 5
      %v4800 = vrot.slane %v4799, 4
      %v4801 = vrot.slane %v3942, 5
      %v4802 = vsel %vm1450, %v4800, %v4801
      %v4803 = vrot.slane %v4801, 4
      %v4804 = vrot.slane %v3943, 5
      %v4805 = vsel %vm1450, %v4803, %v4804
      %v4806 = vrot.slane %v4676, 5
      %v4807 = vrot.slane %v4806, 4
      %v4808 = vrot.slane %v3945, 5
      %v4809 = vsel %vm1450, %v4807, %v4808
      %v4810 = vrot.slane %v4808, 4
      %v4811 = vrot.slane %v3946, 5
      %v4812 = vsel %vm1450, %v4810, %v4811
      %v4813 = vrot.slane %v4677, 5
      %v4814 = vrot.slane %v4813, 4
      %v4815 = vrot.slane %v3948, 5
      %v4816 = vsel %vm1450, %v4814, %v4815
      %v4817 = vrot.slane %v4815, 4
      %v4818 = vrot.slane %v3949, 5
      %v4819 = vsel %vm1450, %v4817, %v4818
      %v4820 = vrot.slane %v4678, 5
      %v4821 = vrot.slane %v4820, 4
      %v4822 = vrot.slane %v3951, 5
      %v4823 = vsel %vm1450, %v4821, %v4822
      %v4824 = vrot.slane %v4822, 4
      %v4825 = vrot.slane %v3952, 5
      %v4826 = vsel %vm1450, %v4824, %v4825
      %v4827 = vrot.slane %v4679, 5
      %v4828 = vrot.slane %v4827, 4
      %v4829 = vrot.slane %v3954, 5
      %v4830 = vsel %vm1450, %v4828, %v4829
      %v4831 = vrot.slane %v4829, 4
      %v4832 = vrot.slane %v3955, 5
      %v4833 = vsel %vm1450, %v4831, %v4832
      %v4834 = vrot.slane %v4680, 5
      %v4835 = vrot.slane %v4834, 4
      %v4836 = vrot.slane %v3957, 5
      %v4837 = vsel %vm1450, %v4835, %v4836
      %v4838 = vrot.slane %v4836, 4
      %v4839 = vrot.slane %v3958, 5
      %v4840 = vsel %vm1450, %v4838, %v4839
      %s4841 = scalar_lea.vmem %s2, 512
      %v4842 = vld [vmem:[%s4841] sm:$0xf]
      %v4843 = vld [vmem:[%s4841 + $0x4] sm:$0xf]
      %v4844 = vld [vmem:[%s4841 + $0x8] sm:$0xf]
      %v4845 = vld [vmem:[%s4841 + $0xc] sm:$0xf]
      %v4846 = vld [vmem:[%s4841 + $0x10] sm:$0xf]
      %v4847 = vld [vmem:[%s4841 + $0x14] sm:$0xf]
      %v4848 = vld [vmem:[%s4841 + $0x18] sm:$0xf]
      %v4849 = vld [vmem:[%s4841 + $0x1c] sm:$0xf]
      %v4850 = vld [vmem:[%s4841 + $0x20] sm:$0xf]
      %v4851 = vld [vmem:[%s4841 + $0x24] sm:$0xf]
      %v4852 = vld [vmem:[%s4841 + $0x28] sm:$0xf]
      %v4853 = vld [vmem:[%s4841 + $0x2c] sm:$0xf]
      %v4854 = vld [vmem:[%s4841 + $0x30] sm:$0xf]
      %v4855 = vld [vmem:[%s4841 + $0x34] sm:$0xf]
      %v4856 = vld [vmem:[%s4841 + $0x38] sm:$0xf]
      %v4857 = vld [vmem:[%s4841 + $0x3c] sm:$0xf]
      %v4858 = vunpack.c.l.b16 %v4732
      %v4859 = vunpack.c.l.b16 %v4735
      %v4860 = vunpack.c.l.b16 %v4739
      %v4861 = vunpack.c.l.b16 %v4742
      %v4862 = vunpack.c.l.b16 %v4746
      %v4863 = vunpack.c.l.b16 %v4749
      %v4864 = vunpack.c.l.b16 %v4753
      %v4865 = vunpack.c.l.b16 %v4756
      %v4866 = vunpack.c.l.b16 %v4760
      %v4867 = vunpack.c.l.b16 %v4763
      %v4868 = vunpack.c.l.b16 %v4767
      %v4869 = vunpack.c.l.b16 %v4770
      %v4870 = vunpack.c.l.b16 %v4774
      %v4871 = vunpack.c.l.b16 %v4777
      %v4872 = vunpack.c.l.b16 %v4781
      %v4873 = vunpack.c.l.b16 %v4784
      %v4874 = vunpack.c.l.b16 %v4788
      %v4875 = vunpack.c.l.b16 %v4791
      %v4876 = vunpack.c.l.b16 %v4795
      %v4877 = vunpack.c.l.b16 %v4798
      %v4878 = vunpack.c.l.b16 %v4802
      %v4879 = vunpack.c.l.b16 %v4805
      %v4880 = vunpack.c.l.b16 %v4809
      %v4881 = vunpack.c.l.b16 %v4812
      %v4882 = vunpack.c.l.b16 %v4816
      %v4883 = vunpack.c.l.b16 %v4819
      %v4884 = vunpack.c.l.b16 %v4823
      %v4885 = vunpack.c.l.b16 %v4826
      %v4886 = vunpack.c.l.b16 %v4830
      %v4887 = vunpack.c.l.b16 %v4833
      %v4888 = vunpack.c.l.b16 %v4837
      %v4889 = vunpack.c.l.b16 %v4840
      %v4890 = vpack.c.b16 %v4859, %v4858
      %v4891 = vpack.c.b16 %v4861, %v4860
      %v4892 = vpack.c.b16 %v4863, %v4862
      %v4893 = vpack.c.b16 %v4865, %v4864
      %v4894 = vpack.c.b16 %v4867, %v4866
      %v4895 = vpack.c.b16 %v4869, %v4868
      %v4896 = vpack.c.b16 %v4871, %v4870
      %v4897 = vpack.c.b16 %v4873, %v4872
      %v4898 = vpack.c.b16 %v4875, %v4874
      %v4899 = vpack.c.b16 %v4877, %v4876
      %v4900 = vpack.c.b16 %v4879, %v4878
      %v4901 = vpack.c.b16 %v4881, %v4880
      %v4902 = vpack.c.b16 %v4883, %v4882
      %v4903 = vpack.c.b16 %v4885, %v4884
      %v4904 = vpack.c.b16 %v4887, %v4886
      %v4905 = vpack.c.b16 %v4889, %v4888
      %v4938 = vunpack.c.l.b16 %v4842
      %v4939 = vunpack.c.l.b16 %v4843
      %v4940 = vunpack.c.l.b16 %v4844
      %v4941 = vunpack.c.l.b16 %v4845
      %v4942 = vunpack.c.l.b16 %v4846
      %v4943 = vunpack.c.l.b16 %v4847
      %v4944 = vunpack.c.l.b16 %v4848
      %v4945 = vunpack.c.l.b16 %v4849
      %v4946 = vunpack.c.l.b16 %v4850
      %v4947 = vunpack.c.l.b16 %v4851
      %v4948 = vunpack.c.l.b16 %v4852
      %v4949 = vunpack.c.l.b16 %v4853
      %v4950 = vunpack.c.l.b16 %v4854
      %v4951 = vunpack.c.l.b16 %v4855
      %v4952 = vunpack.c.l.b16 %v4856
      %v4953 = vunpack.c.l.b16 %v4857
      %v4954 = vpack.c.b16 %v4939, %v4938
      %v4955 = vpack.c.b16 %v4941, %v4940
      %v4956 = vpack.c.b16 %v4943, %v4942
      %v4957 = vpack.c.b16 %v4945, %v4944
      %v4958 = vpack.c.b16 %v4947, %v4946
      %v4959 = vpack.c.b16 %v4949, %v4948
      %v4960 = vpack.c.b16 %v4951, %v4950
      %v4961 = vpack.c.b16 %v4953, %v4952
      %4970 = vmatprep.subr.bf16.mxu0 0
      %4971 = vmatpush1.bf16.msra.mxu0 %v4961
      %4972 = vmatprep.subr.bf16.mxu0 0
      %4973 = vmatpush1.bf16.msra.mxu0 %v4960
      %4974 = vmatprep.subr.bf16.mxu0 0
      %4975 = vmatpush1.bf16.msra.mxu0 %v4959
      %4976 = vmatprep.subr.bf16.mxu0 0
      %4977 = vmatpush1.bf16.msra.mxu0 %v4958
      %4978 = vmatprep.subr.bf16.mxu0 0
      %4979 = vmatpush1.bf16.msra.mxu0 %v4957
      %4980 = vmatprep.subr.bf16.mxu0 0
      %4981 = vmatpush1.bf16.msra.mxu0 %v4956
      %4982 = vmatprep.subr.bf16.mxu0 0
      %4983 = vmatpush1.bf16.msra.mxu0 %v4955
      %4984 = vmatprep.subr.bf16.mxu0 0
      %4985 = vmatpush1.bf16.msra.mxu0 %v4954
      %4986 = vmatprep.subr.bf16.mxu0 0
      %4987 = vmatpush2.bf16.msra.mxu0 0
      %4988 = vmatprep.subr.bf16.mxu0 0
      %4989 = vmatpush2.bf16.msra.mxu0 0
      %4990 = vmatprep.subr.bf16.mxu0 0
      %4991 = vmatpush2.bf16.msra.mxu0 0
      %4992 = vmatprep.subr.bf16.mxu0 0
      %4993 = vmatpush2.bf16.msra.mxu0 0
      %4994 = vmatprep.subr.bf16.mxu0 0
      %4995 = vmatpush2.bf16.msra.mxu0 0
      %4996 = vmatprep.subr.bf16.mxu0 0
      %4997 = vmatpush2.bf16.msra.mxu0 0
      %4998 = vmatprep.subr.bf16.mxu0 0
      %4999 = vmatpush2.bf16.msra.mxu0 0
      %5000 = vmatprep.subr.bf16.mxu0 0
      %5001 = vmatpush2.bf16.msra.mxu0 0
      %5002 = vmatprep.mubr.bf16.mxu0 0
      %5003 = vmatmul.mubr.bf16.gmra.mxu0 %v4890
      %v5004 = vpop.f32.mrf.mxu0
      %v5005 = vadd.f32 0.0, %v5004
      %v5006 = vpop.f32.mrf.mxu0
      %v5007 = vpop.f32.mrf.mxu0
      %v5008 = vadd.f32 0.0, %v5007
      %v5009 = vpop.f32.mrf.mxu0
      %5010 = vmatprep.mubr.bf16.mxu0 0
      %5011 = vmatmul.mubr.bf16.gmra.mxu0 %v4891
      %v5012 = vpop.f32.mrf.mxu0
      %v5013 = vadd.f32 0.0, %v5012
      %v5014 = vpop.f32.mrf.mxu0
      %v5015 = vpop.f32.mrf.mxu0
      %v5016 = vadd.f32 0.0, %v5015
      %v5017 = vpop.f32.mrf.mxu0
      %5018 = vmatprep.mubr.bf16.mxu0 0
      %5019 = vmatmul.mubr.bf16.gmra.mxu0 %v4892
      %v5020 = vpop.f32.mrf.mxu0
      %v5021 = vadd.f32 0.0, %v5020
      %v5022 = vpop.f32.mrf.mxu0
      %v5023 = vpop.f32.mrf.mxu0
      %v5024 = vadd.f32 0.0, %v5023
      %v5025 = vpop.f32.mrf.mxu0
      %5026 = vmatprep.mubr.bf16.mxu0 0
      %5027 = vmatmul.mubr.bf16.gmra.mxu0 %v4893
      %v5028 = vpop.f32.mrf.mxu0
      %v5029 = vadd.f32 0.0, %v5028
      %v5030 = vpop.f32.mrf.mxu0
      %v5031 = vpop.f32.mrf.mxu0
      %v5032 = vadd.f32 0.0, %v5031
      %v5033 = vpop.f32.mrf.mxu0
      %5034 = vmatprep.mubr.bf16.mxu0 0
      %5035 = vmatmul.mubr.bf16.gmra.mxu0 %v4894
      %v5036 = vpop.f32.mrf.mxu0
      %v5037 = vadd.f32 0.0, %v5036
      %v5038 = vpop.f32.mrf.mxu0
      %v5039 = vpop.f32.mrf.mxu0
      %v5040 = vadd.f32 0.0, %v5039
      %v5041 = vpop.f32.mrf.mxu0
      %5042 = vmatprep.mubr.bf16.mxu0 0
      %5043 = vmatmul.mubr.bf16.gmra.mxu0 %v4895
      %v5044 = vpop.f32.mrf.mxu0
      %v5045 = vadd.f32 0.0, %v5044
      %v5046 = vpop.f32.mrf.mxu0
      %v5047 = vpop.f32.mrf.mxu0
      %v5048 = vadd.f32 0.0, %v5047
      %v5049 = vpop.f32.mrf.mxu0
      %5050 = vmatprep.mubr.bf16.mxu0 0
      %5051 = vmatmul.mubr.bf16.gmra.mxu0 %v4896
      %v5052 = vpop.f32.mrf.mxu0
      %v5053 = vadd.f32 0.0, %v5052
      %v5054 = vpop.f32.mrf.mxu0
      %v5055 = vpop.f32.mrf.mxu0
      %v5056 = vadd.f32 0.0, %v5055
      %v5057 = vpop.f32.mrf.mxu0
      %5058 = vmatprep.mubr.bf16.mxu0 0
      %5059 = vmatmul.mubr.bf16.gmra.mxu0 %v4897
      %v5060 = vpop.f32.mrf.mxu0
      %v5061 = vadd.f32 0.0, %v5060
      %v5062 = vpop.f32.mrf.mxu0
      %v5063 = vpop.f32.mrf.mxu0
      %v5064 = vadd.f32 0.0, %v5063
      %v5065 = vpop.f32.mrf.mxu0
      %5066 = vmatprep.mubr.bf16.mxu0 0
      %5067 = vmatmul.mubr.bf16.gmra.mxu0 %v4898
      %v5068 = vpop.f32.mrf.mxu0
      %v5069 = vadd.f32 0.0, %v5068
      %v5070 = vpop.f32.mrf.mxu0
      %v5071 = vpop.f32.mrf.mxu0
      %v5072 = vadd.f32 0.0, %v5071
      %v5073 = vpop.f32.mrf.mxu0
      %5074 = vmatprep.mubr.bf16.mxu0 0
      %5075 = vmatmul.mubr.bf16.gmra.mxu0 %v4899
      %v5076 = vpop.f32.mrf.mxu0
      %v5077 = vadd.f32 0.0, %v5076
      %v5078 = vpop.f32.mrf.mxu0
      %v5079 = vpop.f32.mrf.mxu0
      %v5080 = vadd.f32 0.0, %v5079
      %v5081 = vpop.f32.mrf.mxu0
      %5082 = vmatprep.mubr.bf16.mxu0 0
      %5083 = vmatmul.mubr.bf16.gmra.mxu0 %v4900
      %v5084 = vpop.f32.mrf.mxu0
      %v5085 = vadd.f32 0.0, %v5084
      %v5086 = vpop.f32.mrf.mxu0
      %v5087 = vpop.f32.mrf.mxu0
      %v5088 = vadd.f32 0.0, %v5087
      %v5089 = vpop.f32.mrf.mxu0
      %5090 = vmatprep.mubr.bf16.mxu0 0
      %5091 = vmatmul.mubr.bf16.gmra.mxu0 %v4901
      %v5092 = vpop.f32.mrf.mxu0
      %v5093 = vadd.f32 0.0, %v5092
      %v5094 = vpop.f32.mrf.mxu0
      %v5095 = vpop.f32.mrf.mxu0
      %v5096 = vadd.f32 0.0, %v5095
      %v5097 = vpop.f32.mrf.mxu0
      %5098 = vmatprep.mubr.bf16.mxu0 0
      %5099 = vmatmul.mubr.bf16.gmra.mxu0 %v4902
      %v5100 = vpop.f32.mrf.mxu0
      %v5101 = vadd.f32 0.0, %v5100
      %v5102 = vpop.f32.mrf.mxu0
      %v5103 = vpop.f32.mrf.mxu0
      %v5104 = vadd.f32 0.0, %v5103
      %v5105 = vpop.f32.mrf.mxu0
      %5106 = vmatprep.mubr.bf16.mxu0 0
      %5107 = vmatmul.mubr.bf16.gmra.mxu0 %v4903
      %v5108 = vpop.f32.mrf.mxu0
      %v5109 = vadd.f32 0.0, %v5108
      %v5110 = vpop.f32.mrf.mxu0
      %v5111 = vpop.f32.mrf.mxu0
      %v5112 = vadd.f32 0.0, %v5111
      %v5113 = vpop.f32.mrf.mxu0
      %5114 = vmatprep.mubr.bf16.mxu0 0
      %5115 = vmatmul.mubr.bf16.gmra.mxu0 %v4904
      %v5116 = vpop.f32.mrf.mxu0
      %v5117 = vadd.f32 0.0, %v5116
      %v5118 = vpop.f32.mrf.mxu0
      %v5119 = vpop.f32.mrf.mxu0
      %v5120 = vadd.f32 0.0, %v5119
      %v5121 = vpop.f32.mrf.mxu0
      %5122 = vmatprep.mubr.bf16.mxu0 0
      %5123 = vmatmul.mubr.bf16.gmra.mxu0 %v4905
      %v5124 = vpop.f32.mrf.mxu0
      %v5125 = vadd.f32 0.0, %v5124
      %v5126 = vpop.f32.mrf.mxu0
      %v5127 = vpop.f32.mrf.mxu0
      %v5128 = vadd.f32 0.0, %v5127
      %v5129 = vpop.f32.mrf.mxu0
      %5130 = vdwg.mxu0
      %v5131 = vadd.f32 %v4633, %v5005
      %v5132 = vadd.f32 %v4634, %v5008
      %v5133 = vadd.f32 %v4635, %v5013
      %v5134 = vadd.f32 %v4636, %v5016
      %v5135 = vadd.f32 %v4637, %v5021
      %v5136 = vadd.f32 %v4638, %v5024
      %v5137 = vadd.f32 %v4639, %v5029
      %v5138 = vadd.f32 %v4640, %v5032
      %v5139 = vadd.f32 %v4641, %v5037
      %v5140 = vadd.f32 %v4642, %v5040
      %v5141 = vadd.f32 %v4643, %v5045
      %v5142 = vadd.f32 %v4644, %v5048
      %v5143 = vadd.f32 %v4645, %v5053
      %v5144 = vadd.f32 %v4646, %v5056
      %v5145 = vadd.f32 %v4647, %v5061
      %v5146 = vadd.f32 %v4648, %v5064
      %v5147 = vadd.f32 %v4649, %v5069
      %v5148 = vadd.f32 %v4650, %v5072
      %v5149 = vadd.f32 %v4651, %v5077
      %v5150 = vadd.f32 %v4652, %v5080
      %v5151 = vadd.f32 %v4653, %v5085
      %v5152 = vadd.f32 %v4654, %v5088
      %v5153 = vadd.f32 %v4655, %v5093
      %v5154 = vadd.f32 %v4656, %v5096
      %v5155 = vadd.f32 %v4657, %v5101
      %v5156 = vadd.f32 %v4658, %v5104
      %v5157 = vadd.f32 %v4659, %v5109
      %v5158 = vadd.f32 %v4660, %v5112
      %v5159 = vadd.f32 %v4661, %v5117
      %v5160 = vadd.f32 %v4662, %v5120
      %v5161 = vadd.f32 %v4663, %v5125
      %v5162 = vadd.f32 %v4664, %v5128
      %v5163 = vld [vmem:[%s4] sm:$0x1]
      %v5165 = vlaneseq
      %v5166 = vshrl.u32 %v5165, 7
      %v5167 = vsub.s32 0, %v5166
      %v5168 = vrot.slane %v5163, %v5167
      %v5170 = vadd.f32 %v5131, %v5168
      %v5171 = vadd.f32 %v5132, %v5168
      %v5172 = vadd.f32 %v5133, %v5168
      %v5173 = vadd.f32 %v5134, %v5168
      %v5174 = vadd.f32 %v5135, %v5168
      %v5175 = vadd.f32 %v5136, %v5168
      %v5176 = vadd.f32 %v5137, %v5168
      %v5177 = vadd.f32 %v5138, %v5168
      %v5178 = vadd.f32 %v5139, %v5168
      %v5179 = vadd.f32 %v5140, %v5168
      %v5180 = vadd.f32 %v5141, %v5168
      %v5181 = vadd.f32 %v5142, %v5168
      %v5182 = vadd.f32 %v5143, %v5168
      %v5183 = vadd.f32 %v5144, %v5168
      %v5184 = vadd.f32 %v5145, %v5168
      %v5185 = vadd.f32 %v5146, %v5168
      %v5186 = vadd.f32 %v5147, %v5168
      %v5187 = vadd.f32 %v5148, %v5168
      %v5188 = vadd.f32 %v5149, %v5168
      %v5189 = vadd.f32 %v5150, %v5168
      %v5190 = vadd.f32 %v5151, %v5168
      %v5191 = vadd.f32 %v5152, %v5168
      %v5192 = vadd.f32 %v5153, %v5168
      %v5193 = vadd.f32 %v5154, %v5168
      %v5194 = vadd.f32 %v5155, %v5168
      %v5195 = vadd.f32 %v5156, %v5168
      %v5196 = vadd.f32 %v5157, %v5168
      %v5197 = vadd.f32 %v5158, %v5168
      %v5198 = vadd.f32 %v5159, %v5168
      %v5199 = vadd.f32 %v5160, %v5168
      %v5200 = vadd.f32 %v5161, %v5168
      %v5201 = vadd.f32 %v5162, %v5168
      %v5202 = vmax.f32 %v5170, 0.0
      %v5203 = vmax.f32 %v5171, 0.0
      %v5204 = vmax.f32 %v5172, 0.0
      %v5205 = vmax.f32 %v5173, 0.0
      %v5206 = vmax.f32 %v5174, 0.0
      %v5207 = vmax.f32 %v5175, 0.0
      %v5208 = vmax.f32 %v5176, 0.0
      %v5209 = vmax.f32 %v5177, 0.0
      %v5210 = vmax.f32 %v5178, 0.0
      %v5211 = vmax.f32 %v5179, 0.0
      %v5212 = vmax.f32 %v5180, 0.0
      %v5213 = vmax.f32 %v5181, 0.0
      %v5214 = vmax.f32 %v5182, 0.0
      %v5215 = vmax.f32 %v5183, 0.0
      %v5216 = vmax.f32 %v5184, 0.0
      %v5217 = vmax.f32 %v5185, 0.0
      %v5218 = vmax.f32 %v5186, 0.0
      %v5219 = vmax.f32 %v5187, 0.0
      %v5220 = vmax.f32 %v5188, 0.0
      %v5221 = vmax.f32 %v5189, 0.0
      %v5222 = vmax.f32 %v5190, 0.0
      %v5223 = vmax.f32 %v5191, 0.0
      %v5224 = vmax.f32 %v5192, 0.0
      %v5225 = vmax.f32 %v5193, 0.0
      %v5226 = vmax.f32 %v5194, 0.0
      %v5227 = vmax.f32 %v5195, 0.0
      %v5228 = vmax.f32 %v5196, 0.0
      %v5229 = vmax.f32 %v5197, 0.0
      %v5230 = vmax.f32 %v5198, 0.0
      %v5231 = vmax.f32 %v5199, 0.0
      %v5232 = vmax.f32 %v5200, 0.0
      %v5233 = vmax.f32 %v5201, 0.0
      %v5234 = vpack.c.bf16 %v5203, %v5202
      %v5235 = vpack.c.bf16 %v5205, %v5204
      %v5236 = vpack.c.bf16 %v5207, %v5206
      %v5237 = vpack.c.bf16 %v5209, %v5208
      %v5238 = vpack.c.bf16 %v5211, %v5210
      %v5239 = vpack.c.bf16 %v5213, %v5212
      %v5240 = vpack.c.bf16 %v5215, %v5214
      %v5241 = vpack.c.bf16 %v5217, %v5216
      %v5242 = vpack.c.bf16 %v5219, %v5218
      %v5243 = vpack.c.bf16 %v5221, %v5220
      %v5244 = vpack.c.bf16 %v5223, %v5222
      %v5245 = vpack.c.bf16 %v5225, %v5224
      %v5246 = vpack.c.bf16 %v5227, %v5226
      %v5247 = vpack.c.bf16 %v5229, %v5228
      %v5248 = vpack.c.bf16 %v5231, %v5230
      %v5249 = vpack.c.bf16 %v5233, %v5232
      %v5250 = vld [vmem:[%s3] sm:$0xf]
      %v5251 = vld [vmem:[%s3 + $0x4] sm:$0xf]
      %v5252 = vld [vmem:[%s3 + $0x8] sm:$0xf]
      %v5253 = vld [vmem:[%s3 + $0xc] sm:$0xf]
      %v5254 = vld [vmem:[%s3 + $0x10] sm:$0xf]
      %v5255 = vld [vmem:[%s3 + $0x14] sm:$0xf]
      %v5256 = vld [vmem:[%s3 + $0x18] sm:$0xf]
      %v5257 = vld [vmem:[%s3 + $0x1c] sm:$0xf]
      %v5258 = vld [vmem:[%s3 + $0x20] sm:$0xf]
      %v5259 = vld [vmem:[%s3 + $0x24] sm:$0xf]
      %v5260 = vld [vmem:[%s3 + $0x28] sm:$0xf]
      %v5261 = vld [vmem:[%s3 + $0x2c] sm:$0xf]
      %v5262 = vld [vmem:[%s3 + $0x30] sm:$0xf]
      %v5263 = vld [vmem:[%s3 + $0x34] sm:$0xf]
      %v5264 = vld [vmem:[%s3 + $0x38] sm:$0xf]
      %v5265 = vld [vmem:[%s3 + $0x3c] sm:$0xf]
      %v5266 = vld [vmem:[%s5] sm:$0x1]
      %v5268 = vlaneseq
      %v5269 = vshrl.u32 %v5268, 7
      %v5270 = vsub.s32 0, %v5269
      %v5271 = vrot.slane %v5266, %v5270
      %v5289 = vunpack.c.l.b16 %v5250
      %v5290 = vunpack.c.l.b16 %v5251
      %v5291 = vunpack.c.l.b16 %v5252
      %v5292 = vunpack.c.l.b16 %v5253
      %v5293 = vunpack.c.l.b16 %v5254
      %v5294 = vunpack.c.l.b16 %v5255
      %v5295 = vunpack.c.l.b16 %v5256
      %v5296 = vunpack.c.l.b16 %v5257
      %v5297 = vunpack.c.l.b16 %v5258
      %v5298 = vunpack.c.l.b16 %v5259
      %v5299 = vunpack.c.l.b16 %v5260
      %v5300 = vunpack.c.l.b16 %v5261
      %v5301 = vunpack.c.l.b16 %v5262
      %v5302 = vunpack.c.l.b16 %v5263
      %v5303 = vunpack.c.l.b16 %v5264
      %v5304 = vunpack.c.l.b16 %v5265
      %v5305 = vpack.c.b16 %v5290, %v5289
      %v5306 = vpack.c.b16 %v5292, %v5291
      %v5307 = vpack.c.b16 %v5294, %v5293
      %v5308 = vpack.c.b16 %v5296, %v5295
      %v5309 = vpack.c.b16 %v5298, %v5297
      %v5310 = vpack.c.b16 %v5300, %v5299
      %v5311 = vpack.c.b16 %v5302, %v5301
      %v5312 = vpack.c.b16 %v5304, %v5303
      %5321 = vmatprep.subr.bf16.mxu0 0
      %5322 = vmatpush1.bf16.msra.mxu0 %v5312
      %5323 = vmatprep.subr.bf16.mxu0 0
      %5324 = vmatpush1.bf16.msra.mxu0 %v5311
      %5325 = vmatprep.subr.bf16.mxu0 0
      %5326 = vmatpush1.bf16.msra.mxu0 %v5310
      %5327 = vmatprep.subr.bf16.mxu0 0
      %5328 = vmatpush1.bf16.msra.mxu0 %v5309
      %5329 = vmatprep.subr.bf16.mxu0 0
      %5330 = vmatpush1.bf16.msra.mxu0 %v5308
      %5331 = vmatprep.subr.bf16.mxu0 0
      %5332 = vmatpush1.bf16.msra.mxu0 %v5307
      %5333 = vmatprep.subr.bf16.mxu0 0
      %5334 = vmatpush1.bf16.msra.mxu0 %v5306
      %5335 = vmatprep.subr.bf16.mxu0 0
      %5336 = vmatpush1.bf16.msra.mxu0 %v5305
      %5337 = vmatprep.subr.bf16.mxu0 0
      %5338 = vmatpush2.bf16.msra.mxu0 0
      %5339 = vmatprep.subr.bf16.mxu0 0
      %5340 = vmatpush2.bf16.msra.mxu0 0
      %5341 = vmatprep.subr.bf16.mxu0 0
      %5342 = vmatpush2.bf16.msra.mxu0 0
      %5343 = vmatprep.subr.bf16.mxu0 0
      %5344 = vmatpush2.bf16.msra.mxu0 0
      %5345 = vmatprep.subr.bf16.mxu0 0
      %5346 = vmatpush2.bf16.msra.mxu0 0
      %5347 = vmatprep.subr.bf16.mxu0 0
      %5348 = vmatpush2.bf16.msra.mxu0 0
      %5349 = vmatprep.subr.bf16.mxu0 0
      %5350 = vmatpush2.bf16.msra.mxu0 0
      %5351 = vmatprep.subr.bf16.mxu0 0
      %5352 = vmatpush2.bf16.msra.mxu0 0
      %5353 = vmatprep.mubr.bf16.mxu0 0
      %5354 = vmatmul.mubr.bf16.gmra.mxu0 %v5234
      %v5355 = vpop.f32.mrf.mxu0
      %v5356 = vadd.f32 %v5271, %v5355
      %v5357 = vpop.f32.mrf.mxu0
      %v5358 = vpop.f32.mrf.mxu0
      %v5359 = vadd.f32 %v5271, %v5358
      %v5360 = vpop.f32.mrf.mxu0
      %5361 = vmatprep.mubr.bf16.mxu0 0
      %5362 = vmatmul.mubr.bf16.gmra.mxu0 %v5235
      %v5363 = vpop.f32.mrf.mxu0
      %v5364 = vadd.f32 %v5271, %v5363
      %v5365 = vpop.f32.mrf.mxu0
      %v5366 = vpop.f32.mrf.mxu0
      %v5367 = vadd.f32 %v5271, %v5366
      %v5368 = vpop.f32.mrf.mxu0
      %5369 = vmatprep.mubr.bf16.mxu0 0
      %5370 = vmatmul.mubr.bf16.gmra.mxu0 %v5236
      %v5371 = vpop.f32.mrf.mxu0
      %v5372 = vadd.f32 %v5271, %v5371
      %v5373 = vpop.f32.mrf.mxu0
      %v5374 = vpop.f32.mrf.mxu0
      %v5375 = vadd.f32 %v5271, %v5374
      %v5376 = vpop.f32.mrf.mxu0
      %5377 = vmatprep.mubr.bf16.mxu0 0
      %5378 = vmatmul.mubr.bf16.gmra.mxu0 %v5237
      %v5379 = vpop.f32.mrf.mxu0
      %v5380 = vadd.f32 %v5271, %v5379
      %v5381 = vpop.f32.mrf.mxu0
      %v5382 = vpop.f32.mrf.mxu0
      %v5383 = vadd.f32 %v5271, %v5382
      %v5384 = vpop.f32.mrf.mxu0
      %5385 = vmatprep.mubr.bf16.mxu0 0
      %5386 = vmatmul.mubr.bf16.gmra.mxu0 %v5238
      %v5387 = vpop.f32.mrf.mxu0
      %v5388 = vadd.f32 %v5271, %v5387
      %v5389 = vpop.f32.mrf.mxu0
      %v5390 = vpop.f32.mrf.mxu0
      %v5391 = vadd.f32 %v5271, %v5390
      %v5392 = vpop.f32.mrf.mxu0
      %5393 = vmatprep.mubr.bf16.mxu0 0
      %5394 = vmatmul.mubr.bf16.gmra.mxu0 %v5239
      %v5395 = vpop.f32.mrf.mxu0
      %v5396 = vadd.f32 %v5271, %v5395
      %v5397 = vpop.f32.mrf.mxu0
      %v5398 = vpop.f32.mrf.mxu0
      %v5399 = vadd.f32 %v5271, %v5398
      %v5400 = vpop.f32.mrf.mxu0
      %5401 = vmatprep.mubr.bf16.mxu0 0
      %5402 = vmatmul.mubr.bf16.gmra.mxu0 %v5240
      %v5403 = vpop.f32.mrf.mxu0
      %v5404 = vadd.f32 %v5271, %v5403
      %v5405 = vpop.f32.mrf.mxu0
      %v5406 = vpop.f32.mrf.mxu0
      %v5407 = vadd.f32 %v5271, %v5406
      %v5408 = vpop.f32.mrf.mxu0
      %5409 = vmatprep.mubr.bf16.mxu0 0
      %5410 = vmatmul.mubr.bf16.gmra.mxu0 %v5241
      %v5411 = vpop.f32.mrf.mxu0
      %v5412 = vadd.f32 %v5271, %v5411
      %v5413 = vpop.f32.mrf.mxu0
      %v5414 = vpop.f32.mrf.mxu0
      %v5415 = vadd.f32 %v5271, %v5414
      %v5416 = vpop.f32.mrf.mxu0
      %5417 = vmatprep.mubr.bf16.mxu0 0
      %5418 = vmatmul.mubr.bf16.gmra.mxu0 %v5242
      %v5419 = vpop.f32.mrf.mxu0
      %v5420 = vadd.f32 %v5271, %v5419
      %v5421 = vpop.f32.mrf.mxu0
      %v5422 = vpop.f32.mrf.mxu0
      %v5423 = vadd.f32 %v5271, %v5422
      %v5424 = vpop.f32.mrf.mxu0
      %5425 = vmatprep.mubr.bf16.mxu0 0
      %5426 = vmatmul.mubr.bf16.gmra.mxu0 %v5243
      %v5427 = vpop.f32.mrf.mxu0
      %v5428 = vadd.f32 %v5271, %v5427
      %v5429 = vpop.f32.mrf.mxu0
      %v5430 = vpop.f32.mrf.mxu0
      %v5431 = vadd.f32 %v5271, %v5430
      %v5432 = vpop.f32.mrf.mxu0
      %5433 = vmatprep.mubr.bf16.mxu0 0
      %5434 = vmatmul.mubr.bf16.gmra.mxu0 %v5244
      %v5435 = vpop.f32.mrf.mxu0
      %v5436 = vadd.f32 %v5271, %v5435
      %v5437 = vpop.f32.mrf.mxu0
      %v5438 = vpop.f32.mrf.mxu0
      %v5439 = vadd.f32 %v5271, %v5438
      %v5440 = vpop.f32.mrf.mxu0
      %5441 = vmatprep.mubr.bf16.mxu0 0
      %5442 = vmatmul.mubr.bf16.gmra.mxu0 %v5245
      %v5443 = vpop.f32.mrf.mxu0
      %v5444 = vadd.f32 %v5271, %v5443
      %v5445 = vpop.f32.mrf.mxu0
      %v5446 = vpop.f32.mrf.mxu0
      %v5447 = vadd.f32 %v5271, %v5446
      %v5448 = vpop.f32.mrf.mxu0
      %5449 = vmatprep.mubr.bf16.mxu0 0
      %5450 = vmatmul.mubr.bf16.gmra.mxu0 %v5246
      %v5451 = vpop.f32.mrf.mxu0
      %v5452 = vadd.f32 %v5271, %v5451
      %v5453 = vpop.f32.mrf.mxu0
      %v5454 = vpop.f32.mrf.mxu0
      %v5455 = vadd.f32 %v5271, %v5454
      %v5456 = vpop.f32.mrf.mxu0
      %5457 = vmatprep.mubr.bf16.mxu0 0
      %5458 = vmatmul.mubr.bf16.gmra.mxu0 %v5247
      %v5459 = vpop.f32.mrf.mxu0
      %v5460 = vadd.f32 %v5271, %v5459
      %v5461 = vpop.f32.mrf.mxu0
      %v5462 = vpop.f32.mrf.mxu0
      %v5463 = vadd.f32 %v5271, %v5462
      %v5464 = vpop.f32.mrf.mxu0
      %5465 = vmatprep.mubr.bf16.mxu0 0
      %5466 = vmatmul.mubr.bf16.gmra.mxu0 %v5248
      %v5467 = vpop.f32.mrf.mxu0
      %v5468 = vadd.f32 %v5271, %v5467
      %v5469 = vpop.f32.mrf.mxu0
      %v5470 = vpop.f32.mrf.mxu0
      %v5471 = vadd.f32 %v5271, %v5470
      %v5472 = vpop.f32.mrf.mxu0
      %5473 = vmatprep.mubr.bf16.mxu0 0
      %5474 = vmatmul.mubr.bf16.gmra.mxu0 %v5249
      %v5475 = vpop.f32.mrf.mxu0
      %v5476 = vadd.f32 %v5271, %v5475
      %v5477 = vpop.f32.mrf.mxu0
      %v5478 = vpop.f32.mrf.mxu0
      %v5479 = vadd.f32 %v5271, %v5478
      %v5480 = vpop.f32.mrf.mxu0
      %5481 = vdwg.mxu0
      %v5482 = vld [vmem:[%s347] sm:$0xf]
      %v5483 = vld [vmem:[%s347 + $0x4] sm:$0xf]
      %v5484 = vld [vmem:[%s347 + $0x8] sm:$0xf]
      %v5485 = vld [vmem:[%s347 + $0xc] sm:$0xf]
      %v5486 = vld [vmem:[%s347 + $0x10] sm:$0xf]
      %v5487 = vld [vmem:[%s347 + $0x14] sm:$0xf]
      %v5488 = vld [vmem:[%s347 + $0x18] sm:$0xf]
      %v5489 = vld [vmem:[%s347 + $0x1c] sm:$0xf]
      %v5490 = vld [vmem:[%s347 + $0x20] sm:$0xf]
      %v5491 = vld [vmem:[%s347 + $0x24] sm:$0xf]
      %v5492 = vld [vmem:[%s347 + $0x28] sm:$0xf]
      %v5493 = vld [vmem:[%s347 + $0x2c] sm:$0xf]
      %v5494 = vld [vmem:[%s347 + $0x30] sm:$0xf]
      %v5495 = vld [vmem:[%s347 + $0x34] sm:$0xf]
      %v5496 = vld [vmem:[%s347 + $0x38] sm:$0xf]
      %v5497 = vld [vmem:[%s347 + $0x3c] sm:$0xf]
      %v5498 = vld [vmem:[%s347 + $0x40] sm:$0xf]
      %v5499 = vld [vmem:[%s347 + $0x44] sm:$0xf]
      %v5500 = vld [vmem:[%s347 + $0x48] sm:$0xf]
      %v5501 = vld [vmem:[%s347 + $0x4c] sm:$0xf]
      %v5502 = vld [vmem:[%s347 + $0x50] sm:$0xf]
      %v5503 = vld [vmem:[%s347 + $0x54] sm:$0xf]
      %v5504 = vld [vmem:[%s347 + $0x58] sm:$0xf]
      %v5505 = vld [vmem:[%s347 + $0x5c] sm:$0xf]
      %v5506 = vld [vmem:[%s347 + $0x60] sm:$0xf]
      %v5507 = vld [vmem:[%s347 + $0x64] sm:$0xf]
      %v5508 = vld [vmem:[%s347 + $0x68] sm:$0xf]
      %v5509 = vld [vmem:[%s347 + $0x6c] sm:$0xf]
      %v5510 = vld [vmem:[%s347 + $0x70] sm:$0xf]
      %v5511 = vld [vmem:[%s347 + $0x74] sm:$0xf]
      %v5512 = vld [vmem:[%s347 + $0x78] sm:$0xf]
      %v5513 = vld [vmem:[%s347 + $0x7c] sm:$0xf]
      %v5514 = vld [vmem:[%s6] sm:$0xf]
      %v5515 = vld [vmem:[%s6 + $0x4] sm:$0xf]
      %v5516 = vld [vmem:[%s6 + $0x8] sm:$0xf]
      %v5517 = vld [vmem:[%s6 + $0xc] sm:$0xf]
      %v5518 = vld [vmem:[%s6 + $0x10] sm:$0xf]
      %v5519 = vld [vmem:[%s6 + $0x14] sm:$0xf]
      %v5520 = vld [vmem:[%s6 + $0x18] sm:$0xf]
      %v5521 = vld [vmem:[%s6 + $0x1c] sm:$0xf]
      %v5522 = vld [vmem:[%s6 + $0x20] sm:$0xf]
      %v5523 = vld [vmem:[%s6 + $0x24] sm:$0xf]
      %v5524 = vld [vmem:[%s6 + $0x28] sm:$0xf]
      %v5525 = vld [vmem:[%s6 + $0x2c] sm:$0xf]
      %v5526 = vld [vmem:[%s6 + $0x30] sm:$0xf]
      %v5527 = vld [vmem:[%s6 + $0x34] sm:$0xf]
      %v5528 = vld [vmem:[%s6 + $0x38] sm:$0xf]
      %v5529 = vld [vmem:[%s6 + $0x3c] sm:$0xf]
      %v5562 = vunpack.c.l.b16 %v5482
      %v5563 = vunpack.c.l.b16 %v5483
      %v5564 = vunpack.c.l.b16 %v5484
      %v5565 = vunpack.c.l.b16 %v5485
      %v5566 = vunpack.c.l.b16 %v5486
      %v5567 = vunpack.c.l.b16 %v5487
      %v5568 = vunpack.c.l.b16 %v5488
      %v5569 = vunpack.c.l.b16 %v5489
      %v5570 = vunpack.c.l.b16 %v5490
      %v5571 = vunpack.c.l.b16 %v5491
      %v5572 = vunpack.c.l.b16 %v5492
      %v5573 = vunpack.c.l.b16 %v5493
      %v5574 = vunpack.c.l.b16 %v5494
      %v5575 = vunpack.c.l.b16 %v5495
      %v5576 = vunpack.c.l.b16 %v5496
      %v5577 = vunpack.c.l.b16 %v5497
      %v5578 = vunpack.c.l.b16 %v5498
      %v5579 = vunpack.c.l.b16 %v5499
      %v5580 = vunpack.c.l.b16 %v5500
      %v5581 = vunpack.c.l.b16 %v5501
      %v5582 = vunpack.c.l.b16 %v5502
      %v5583 = vunpack.c.l.b16 %v5503
      %v5584 = vunpack.c.l.b16 %v5504
      %v5585 = vunpack.c.l.b16 %v5505
      %v5586 = vunpack.c.l.b16 %v5506
      %v5587 = vunpack.c.l.b16 %v5507
      %v5588 = vunpack.c.l.b16 %v5508
      %v5589 = vunpack.c.l.b16 %v5509
      %v5590 = vunpack.c.l.b16 %v5510
      %v5591 = vunpack.c.l.b16 %v5511
      %v5592 = vunpack.c.l.b16 %v5512
      %v5593 = vunpack.c.l.b16 %v5513
      %v5594 = vpack.c.b16 %v5563, %v5562
      %v5595 = vpack.c.b16 %v5565, %v5564
      %v5596 = vpack.c.b16 %v5567, %v5566
      %v5597 = vpack.c.b16 %v5569, %v5568
      %v5598 = vpack.c.b16 %v5571, %v5570
      %v5599 = vpack.c.b16 %v5573, %v5572
      %v5600 = vpack.c.b16 %v5575, %v5574
      %v5601 = vpack.c.b16 %v5577, %v5576
      %v5602 = vpack.c.b16 %v5579, %v5578
      %v5603 = vpack.c.b16 %v5581, %v5580
      %v5604 = vpack.c.b16 %v5583, %v5582
      %v5605 = vpack.c.b16 %v5585, %v5584
      %v5606 = vpack.c.b16 %v5587, %v5586
      %v5607 = vpack.c.b16 %v5589, %v5588
      %v5608 = vpack.c.b16 %v5591, %v5590
      %v5609 = vpack.c.b16 %v5593, %v5592
      %v5642 = vunpack.c.l.b16 %v5514
      %v5643 = vunpack.c.l.b16 %v5515
      %v5644 = vunpack.c.l.b16 %v5516
      %v5645 = vunpack.c.l.b16 %v5517
      %v5646 = vunpack.c.l.b16 %v5518
      %v5647 = vunpack.c.l.b16 %v5519
      %v5648 = vunpack.c.l.b16 %v5520
      %v5649 = vunpack.c.l.b16 %v5521
      %v5650 = vunpack.c.l.b16 %v5522
      %v5651 = vunpack.c.l.b16 %v5523
      %v5652 = vunpack.c.l.b16 %v5524
      %v5653 = vunpack.c.l.b16 %v5525
      %v5654 = vunpack.c.l.b16 %v5526
      %v5655 = vunpack.c.l.b16 %v5527
      %v5656 = vunpack.c.l.b16 %v5528
      %v5657 = vunpack.c.l.b16 %v5529
      %v5658 = vpack.c.b16 %v5643, %v5642
      %v5659 = vpack.c.b16 %v5645, %v5644
      %v5660 = vpack.c.b16 %v5647, %v5646
      %v5661 = vpack.c.b16 %v5649, %v5648
      %v5662 = vpack.c.b16 %v5651, %v5650
      %v5663 = vpack.c.b16 %v5653, %v5652
      %v5664 = vpack.c.b16 %v5655, %v5654
      %v5665 = vpack.c.b16 %v5657, %v5656
      %5674 = vmatprep.subr.bf16.mxu0 0
      %5675 = vmatpush1.bf16.msra.mxu0 %v5665
      %5676 = vmatprep.subr.bf16.mxu0 0
      %5677 = vmatpush1.bf16.msra.mxu0 %v5664
      %5678 = vmatprep.subr.bf16.mxu0 0
      %5679 = vmatpush1.bf16.msra.mxu0 %v5663
      %5680 = vmatprep.subr.bf16.mxu0 0
      %5681 = vmatpush1.bf16.msra.mxu0 %v5662
      %5682 = vmatprep.subr.bf16.mxu0 0
      %5683 = vmatpush1.bf16.msra.mxu0 %v5661
      %5684 = vmatprep.subr.bf16.mxu0 0
      %5685 = vmatpush1.bf16.msra.mxu0 %v5660
      %5686 = vmatprep.subr.bf16.mxu0 0
      %5687 = vmatpush1.bf16.msra.mxu0 %v5659
      %5688 = vmatprep.subr.bf16.mxu0 0
      %5689 = vmatpush1.bf16.msra.mxu0 %v5658
      %5690 = vmatprep.subr.bf16.mxu0 0
      %5691 = vmatpush2.bf16.msra.mxu0 0
      %5692 = vmatprep.subr.bf16.mxu0 0
      %5693 = vmatpush2.bf16.msra.mxu0 0
      %5694 = vmatprep.subr.bf16.mxu0 0
      %5695 = vmatpush2.bf16.msra.mxu0 0
      %5696 = vmatprep.subr.bf16.mxu0 0
      %5697 = vmatpush2.bf16.msra.mxu0 0
      %5698 = vmatprep.subr.bf16.mxu0 0
      %5699 = vmatpush2.bf16.msra.mxu0 0
      %5700 = vmatprep.subr.bf16.mxu0 0
      %5701 = vmatpush2.bf16.msra.mxu0 0
      %5702 = vmatprep.subr.bf16.mxu0 0
      %5703 = vmatpush2.bf16.msra.mxu0 0
      %5704 = vmatprep.subr.bf16.mxu0 0
      %5705 = vmatpush2.bf16.msra.mxu0 0
      %5706 = vmatprep.mubr.bf16.mxu0 0
      %5707 = vmatmul.mubr.bf16.gmra.mxu0 %v5594
      %v5708 = vpop.f32.mrf.mxu0
      %v5709 = vadd.f32 0.0, %v5708
      %v5710 = vpop.f32.mrf.mxu0
      %v5711 = vpop.f32.mrf.mxu0
      %v5712 = vadd.f32 0.0, %v5711
      %v5713 = vpop.f32.mrf.mxu0
      %5714 = vmatprep.mubr.bf16.mxu0 0
      %5715 = vmatmul.mubr.bf16.gmra.mxu0 %v5595
      %v5716 = vpop.f32.mrf.mxu0
      %v5717 = vadd.f32 0.0, %v5716
      %v5718 = vpop.f32.mrf.mxu0
      %v5719 = vpop.f32.mrf.mxu0
      %v5720 = vadd.f32 0.0, %v5719
      %v5721 = vpop.f32.mrf.mxu0
      %5722 = vmatprep.mubr.bf16.mxu0 0
      %5723 = vmatmul.mubr.bf16.gmra.mxu0 %v5596
      %v5724 = vpop.f32.mrf.mxu0
      %v5725 = vadd.f32 0.0, %v5724
      %v5726 = vpop.f32.mrf.mxu0
      %v5727 = vpop.f32.mrf.mxu0
      %v5728 = vadd.f32 0.0, %v5727
      %v5729 = vpop.f32.mrf.mxu0
      %5730 = vmatprep.mubr.bf16.mxu0 0
      %5731 = vmatmul.mubr.bf16.gmra.mxu0 %v5597
      %v5732 = vpop.f32.mrf.mxu0
      %v5733 = vadd.f32 0.0, %v5732
      %v5734 = vpop.f32.mrf.mxu0
      %v5735 = vpop.f32.mrf.mxu0
      %v5736 = vadd.f32 0.0, %v5735
      %v5737 = vpop.f32.mrf.mxu0
      %5738 = vmatprep.mubr.bf16.mxu0 0
      %5739 = vmatmul.mubr.bf16.gmra.mxu0 %v5598
      %v5740 = vpop.f32.mrf.mxu0
      %v5741 = vadd.f32 0.0, %v5740
      %v5742 = vpop.f32.mrf.mxu0
      %v5743 = vpop.f32.mrf.mxu0
      %v5744 = vadd.f32 0.0, %v5743
      %v5745 = vpop.f32.mrf.mxu0
      %5746 = vmatprep.mubr.bf16.mxu0 0
      %5747 = vmatmul.mubr.bf16.gmra.mxu0 %v5599
      %v5748 = vpop.f32.mrf.mxu0
      %v5749 = vadd.f32 0.0, %v5748
      %v5750 = vpop.f32.mrf.mxu0
      %v5751 = vpop.f32.mrf.mxu0
      %v5752 = vadd.f32 0.0, %v5751
      %v5753 = vpop.f32.mrf.mxu0
      %5754 = vmatprep.mubr.bf16.mxu0 0
      %5755 = vmatmul.mubr.bf16.gmra.mxu0 %v5600
      %v5756 = vpop.f32.mrf.mxu0
      %v5757 = vadd.f32 0.0, %v5756
      %v5758 = vpop.f32.mrf.mxu0
      %v5759 = vpop.f32.mrf.mxu0
      %v5760 = vadd.f32 0.0, %v5759
      %v5761 = vpop.f32.mrf.mxu0
      %5762 = vmatprep.mubr.bf16.mxu0 0
      %5763 = vmatmul.mubr.bf16.gmra.mxu0 %v5601
      %v5764 = vpop.f32.mrf.mxu0
      %v5765 = vadd.f32 0.0, %v5764
      %v5766 = vpop.f32.mrf.mxu0
      %v5767 = vpop.f32.mrf.mxu0
      %v5768 = vadd.f32 0.0, %v5767
      %v5769 = vpop.f32.mrf.mxu0
      %5770 = vmatprep.mubr.bf16.mxu0 0
      %5771 = vmatmul.mubr.bf16.gmra.mxu0 %v5602
      %v5772 = vpop.f32.mrf.mxu0
      %v5773 = vadd.f32 0.0, %v5772
      %v5774 = vpop.f32.mrf.mxu0
      %v5775 = vpop.f32.mrf.mxu0
      %v5776 = vadd.f32 0.0, %v5775
      %v5777 = vpop.f32.mrf.mxu0
      %5778 = vmatprep.mubr.bf16.mxu0 0
      %5779 = vmatmul.mubr.bf16.gmra.mxu0 %v5603
      %v5780 = vpop.f32.mrf.mxu0
      %v5781 = vadd.f32 0.0, %v5780
      %v5782 = vpop.f32.mrf.mxu0
      %v5783 = vpop.f32.mrf.mxu0
      %v5784 = vadd.f32 0.0, %v5783
      %v5785 = vpop.f32.mrf.mxu0
      %5786 = vmatprep.mubr.bf16.mxu0 0
      %5787 = vmatmul.mubr.bf16.gmra.mxu0 %v5604
      %v5788 = vpop.f32.mrf.mxu0
      %v5789 = vadd.f32 0.0, %v5788
      %v5790 = vpop.f32.mrf.mxu0
      %v5791 = vpop.f32.mrf.mxu0
      %v5792 = vadd.f32 0.0, %v5791
      %v5793 = vpop.f32.mrf.mxu0
      %5794 = vmatprep.mubr.bf16.mxu0 0
      %5795 = vmatmul.mubr.bf16.gmra.mxu0 %v5605
      %v5796 = vpop.f32.mrf.mxu0
      %v5797 = vadd.f32 0.0, %v5796
      %v5798 = vpop.f32.mrf.mxu0
      %v5799 = vpop.f32.mrf.mxu0
      %v5800 = vadd.f32 0.0, %v5799
      %v5801 = vpop.f32.mrf.mxu0
      %5802 = vmatprep.mubr.bf16.mxu0 0
      %5803 = vmatmul.mubr.bf16.gmra.mxu0 %v5606
      %v5804 = vpop.f32.mrf.mxu0
      %v5805 = vadd.f32 0.0, %v5804
      %v5806 = vpop.f32.mrf.mxu0
      %v5807 = vpop.f32.mrf.mxu0
      %v5808 = vadd.f32 0.0, %v5807
      %v5809 = vpop.f32.mrf.mxu0
      %5810 = vmatprep.mubr.bf16.mxu0 0
      %5811 = vmatmul.mubr.bf16.gmra.mxu0 %v5607
      %v5812 = vpop.f32.mrf.mxu0
      %v5813 = vadd.f32 0.0, %v5812
      %v5814 = vpop.f32.mrf.mxu0
      %v5815 = vpop.f32.mrf.mxu0
      %v5816 = vadd.f32 0.0, %v5815
      %v5817 = vpop.f32.mrf.mxu0
      %5818 = vmatprep.mubr.bf16.mxu0 0
      %5819 = vmatmul.mubr.bf16.gmra.mxu0 %v5608
      %v5820 = vpop.f32.mrf.mxu0
      %v5821 = vadd.f32 0.0, %v5820
      %v5822 = vpop.f32.mrf.mxu0
      %v5823 = vpop.f32.mrf.mxu0
      %v5824 = vadd.f32 0.0, %v5823
      %v5825 = vpop.f32.mrf.mxu0
      %5826 = vmatprep.mubr.bf16.mxu0 0
      %5827 = vmatmul.mubr.bf16.gmra.mxu0 %v5609
      %v5828 = vpop.f32.mrf.mxu0
      %v5829 = vadd.f32 0.0, %v5828
      %v5830 = vpop.f32.mrf.mxu0
      %v5831 = vpop.f32.mrf.mxu0
      %v5832 = vadd.f32 0.0, %v5831
      %v5833 = vpop.f32.mrf.mxu0
      %5834 = vdwg.mxu0
      %v5835 = vadd.f32 %v5356, %v5709
      %v5836 = vadd.f32 %v5359, %v5712
      %v5837 = vadd.f32 %v5364, %v5717
      %v5838 = vadd.f32 %v5367, %v5720
      %v5839 = vadd.f32 %v5372, %v5725
      %v5840 = vadd.f32 %v5375, %v5728
      %v5841 = vadd.f32 %v5380, %v5733
      %v5842 = vadd.f32 %v5383, %v5736
      %v5843 = vadd.f32 %v5388, %v5741
      %v5844 = vadd.f32 %v5391, %v5744
      %v5845 = vadd.f32 %v5396, %v5749
      %v5846 = vadd.f32 %v5399, %v5752
      %v5847 = vadd.f32 %v5404, %v5757
      %v5848 = vadd.f32 %v5407, %v5760
      %v5849 = vadd.f32 %v5412, %v5765
      %v5850 = vadd.f32 %v5415, %v5768
      %v5851 = vadd.f32 %v5420, %v5773
      %v5852 = vadd.f32 %v5423, %v5776
      %v5853 = vadd.f32 %v5428, %v5781
      %v5854 = vadd.f32 %v5431, %v5784
      %v5855 = vadd.f32 %v5436, %v5789
      %v5856 = vadd.f32 %v5439, %v5792
      %v5857 = vadd.f32 %v5444, %v5797
      %v5858 = vadd.f32 %v5447, %v5800
      %v5859 = vadd.f32 %v5452, %v5805
      %v5860 = vadd.f32 %v5455, %v5808
      %v5861 = vadd.f32 %v5460, %v5813
      %v5862 = vadd.f32 %v5463, %v5816
      %v5863 = vadd.f32 %v5468, %v5821
      %v5864 = vadd.f32 %v5471, %v5824
      %v5865 = vadd.f32 %v5476, %v5829
      %v5866 = vadd.f32 %v5479, %v5832
      %v5867 = vld [vmem:[%s7] sm:$0x1]
      %v5869 = vlaneseq
      %v5870 = vshrl.u32 %v5869, 7
      %v5871 = vsub.s32 0, %v5870
      %v5872 = vrot.slane %v5867, %v5871
      %v5874 = vadd.f32 %v5835, %v5872
      %v5875 = vadd.f32 %v5836, %v5872
      %v5876 = vadd.f32 %v5837, %v5872
      %v5877 = vadd.f32 %v5838, %v5872
      %v5878 = vadd.f32 %v5839, %v5872
      %v5879 = vadd.f32 %v5840, %v5872
      %v5880 = vadd.f32 %v5841, %v5872
      %v5881 = vadd.f32 %v5842, %v5872
      %v5882 = vadd.f32 %v5843, %v5872
      %v5883 = vadd.f32 %v5844, %v5872
      %v5884 = vadd.f32 %v5845, %v5872
      %v5885 = vadd.f32 %v5846, %v5872
      %v5886 = vadd.f32 %v5847, %v5872
      %v5887 = vadd.f32 %v5848, %v5872
      %v5888 = vadd.f32 %v5849, %v5872
      %v5889 = vadd.f32 %v5850, %v5872
      %v5890 = vadd.f32 %v5851, %v5872
      %v5891 = vadd.f32 %v5852, %v5872
      %v5892 = vadd.f32 %v5853, %v5872
      %v5893 = vadd.f32 %v5854, %v5872
      %v5894 = vadd.f32 %v5855, %v5872
      %v5895 = vadd.f32 %v5856, %v5872
      %v5896 = vadd.f32 %v5857, %v5872
      %v5897 = vadd.f32 %v5858, %v5872
      %v5898 = vadd.f32 %v5859, %v5872
      %v5899 = vadd.f32 %v5860, %v5872
      %v5900 = vadd.f32 %v5861, %v5872
      %v5901 = vadd.f32 %v5862, %v5872
      %v5902 = vadd.f32 %v5863, %v5872
      %v5903 = vadd.f32 %v5864, %v5872
      %v5904 = vadd.f32 %v5865, %v5872
      %v5905 = vadd.f32 %v5866, %v5872
      %v5906 = vmax.f32 %v5874, 0.0
      %v5907 = vmax.f32 %v5875, 0.0
      %v5908 = vmax.f32 %v5876, 0.0
      %v5909 = vmax.f32 %v5877, 0.0
      %v5910 = vmax.f32 %v5878, 0.0
      %v5911 = vmax.f32 %v5879, 0.0
      %v5912 = vmax.f32 %v5880, 0.0
      %v5913 = vmax.f32 %v5881, 0.0
      %v5914 = vmax.f32 %v5882, 0.0
      %v5915 = vmax.f32 %v5883, 0.0
      %v5916 = vmax.f32 %v5884, 0.0
      %v5917 = vmax.f32 %v5885, 0.0
      %v5918 = vmax.f32 %v5886, 0.0
      %v5919 = vmax.f32 %v5887, 0.0
      %v5920 = vmax.f32 %v5888, 0.0
      %v5921 = vmax.f32 %v5889, 0.0
      %v5922 = vmax.f32 %v5890, 0.0
      %v5923 = vmax.f32 %v5891, 0.0
      %v5924 = vmax.f32 %v5892, 0.0
      %v5925 = vmax.f32 %v5893, 0.0
      %v5926 = vmax.f32 %v5894, 0.0
      %v5927 = vmax.f32 %v5895, 0.0
      %v5928 = vmax.f32 %v5896, 0.0
      %v5929 = vmax.f32 %v5897, 0.0
      %v5930 = vmax.f32 %v5898, 0.0
      %v5931 = vmax.f32 %v5899, 0.0
      %v5932 = vmax.f32 %v5900, 0.0
      %v5933 = vmax.f32 %v5901, 0.0
      %v5934 = vmax.f32 %v5902, 0.0
      %v5935 = vmax.f32 %v5903, 0.0
      %v5936 = vmax.f32 %v5904, 0.0
      %v5937 = vmax.f32 %v5905, 0.0
      %v5938 = vld [vmem:[%s8] sm:$0xff]
      %v5939 = vld [vmem:[%s8 + $0x8] sm:$0xff]
      %v5940 = vld [vmem:[%s8 + $0x10] sm:$0xff]
      %v5941 = vld [vmem:[%s8 + $0x18] sm:$0xff]
      %v5942 = vld [vmem:[%s8 + $0x20] sm:$0xff]
      %v5943 = vld [vmem:[%s8 + $0x28] sm:$0xff]
      %v5944 = vld [vmem:[%s8 + $0x30] sm:$0xff]
      %v5945 = vld [vmem:[%s8 + $0x38] sm:$0xff]
      %v5946 = vld [vmem:[%s8 + $0x40] sm:$0xff]
      %v5947 = vld [vmem:[%s8 + $0x48] sm:$0xff]
      %v5948 = vld [vmem:[%s8 + $0x50] sm:$0xff]
      %v5949 = vld [vmem:[%s8 + $0x58] sm:$0xff]
      %v5950 = vld [vmem:[%s8 + $0x60] sm:$0xff]
      %v5951 = vld [vmem:[%s8 + $0x68] sm:$0xff]
      %v5952 = vld [vmem:[%s8 + $0x70] sm:$0xff]
      %v5953 = vld [vmem:[%s8 + $0x78] sm:$0xff]
      %5954 = vmatprep.subr.mxu0 0.0
      %5955 = vmatpush1.msra.mxu0 %v5921
      %5956 = vmatprep.subr.mxu0 0.0
      %5957 = vmatpush1.msra.mxu0 %v5920
      %5958 = vmatprep.subr.mxu0 0.0
      %5959 = vmatpush1.msra.mxu0 %v5919
      %5960 = vmatprep.subr.mxu0 0.0
      %5961 = vmatpush1.msra.mxu0 %v5918
      %5962 = vmatprep.subr.mxu0 0.0
      %5963 = vmatpush1.msra.mxu0 %v5917
      %5964 = vmatprep.subr.mxu0 0.0
      %5965 = vmatpush1.msra.mxu0 %v5916
      %5966 = vmatprep.subr.mxu0 0.0
      %5967 = vmatpush1.msra.mxu0 %v5915
      %5968 = vmatprep.subr.mxu0 0.0
      %5969 = vmatpush1.msra.mxu0 %v5914
      %5970 = vmatprep.subr.mxu0 0.0
      %5971 = vmatpush1.msra.mxu0 %v5913
      %5972 = vmatprep.subr.mxu0 0.0
      %5973 = vmatpush1.msra.mxu0 %v5912
      %5974 = vmatprep.subr.mxu0 0.0
      %5975 = vmatpush1.msra.mxu0 %v5911
      %5976 = vmatprep.subr.mxu0 0.0
      %5977 = vmatpush1.msra.mxu0 %v5910
      %5978 = vmatprep.subr.mxu0 0.0
      %5979 = vmatpush1.msra.mxu0 %v5909
      %5980 = vmatprep.subr.mxu0 0.0
      %5981 = vmatpush1.msra.mxu0 %v5908
      %5982 = vmatprep.subr.mxu0 0.0
      %5983 = vmatpush1.msra.mxu0 %v5907
      %5984 = vmatprep.subr.mxu0 0.0
      %5985 = vmatpush1.msra.mxu0 %v5906
      %5986 = vmatprep.subr.mxu0 0.0
      %5987 = vmatpush2.msra.mxu0 %v5937
      %5988 = vmatprep.subr.mxu0 0.0
      %5989 = vmatpush2.msra.mxu0 %v5936
      %5990 = vmatprep.subr.mxu0 0.0
      %5991 = vmatpush2.msra.mxu0 %v5935
      %5992 = vmatprep.subr.mxu0 0.0
      %5993 = vmatpush2.msra.mxu0 %v5934
      %5994 = vmatprep.subr.mxu0 0.0
      %5995 = vmatpush2.msra.mxu0 %v5933
      %5996 = vmatprep.subr.mxu0 0.0
      %5997 = vmatpush2.msra.mxu0 %v5932
      %5998 = vmatprep.subr.mxu0 0.0
      %5999 = vmatpush2.msra.mxu0 %v5931
      %6000 = vmatprep.subr.mxu0 0.0
      %6001 = vmatpush2.msra.mxu0 %v5930
      %6002 = vmatprep.subr.mxu0 0.0
      %6003 = vmatpush2.msra.mxu0 %v5929
      %6004 = vmatprep.subr.mxu0 0.0
      %6005 = vmatpush2.msra.mxu0 %v5928
      %6006 = vmatprep.subr.mxu0 0.0
      %6007 = vmatpush2.msra.mxu0 %v5927
      %6008 = vmatprep.subr.mxu0 0.0
      %6009 = vmatpush2.msra.mxu0 %v5926
      %6010 = vmatprep.subr.mxu0 0.0
      %6011 = vmatpush2.msra.mxu0 %v5925
      %6012 = vmatprep.subr.mxu0 0.0
      %6013 = vmatpush2.msra.mxu0 %v5924
      %6014 = vmatprep.subr.mxu0 0.0
      %6015 = vmatpush2.msra.mxu0 %v5923
      %6016 = vmatprep.subr.mxu0 0.0
      %6017 = vmatpush2.msra.mxu0 %v5922
      %6018 = vmatprep.mubr.f32.mxu0 %v5939
      %6019 = vmatmul.mubr.f32.gmra.mxu0 %v5938
      %v6020 = vpop.f32.mrf.mxu0
      %v6021 = vadd.f32 0.0, %v6020
      %v6022 = vpop.f32.mrf.mxu0
      %6023 = vmatprep.mubr.f32.mxu0 %v5941
      %6024 = vmatmul.mubr.f32.gmra.mxu0 %v5940
      %v6025 = vpop.f32.mrf.mxu0
      %v6026 = vadd.f32 0.0, %v6025
      %v6027 = vpop.f32.mrf.mxu0
      %6028 = vmatprep.mubr.f32.mxu0 %v5943
      %6029 = vmatmul.mubr.f32.gmra.mxu0 %v5942
      %v6030 = vpop.f32.mrf.mxu0
      %v6031 = vadd.f32 0.0, %v6030
      %v6032 = vpop.f32.mrf.mxu0
      %6033 = vmatprep.mubr.f32.mxu0 %v5945
      %6034 = vmatmul.mubr.f32.gmra.mxu0 %v5944
      %v6035 = vpop.f32.mrf.mxu0
      %v6036 = vadd.f32 0.0, %v6035
      %v6037 = vpop.f32.mrf.mxu0
      %6038 = vmatprep.mubr.f32.mxu0 %v5947
      %6039 = vmatmul.mubr.f32.gmra.mxu0 %v5946
      %v6040 = vpop.f32.mrf.mxu0
      %v6041 = vadd.f32 0.0, %v6040
      %v6042 = vpop.f32.mrf.mxu0
      %6043 = vmatprep.mubr.f32.mxu0 %v5949
      %6044 = vmatmul.mubr.f32.gmra.mxu0 %v5948
      %v6045 = vpop.f32.mrf.mxu0
      %v6046 = vadd.f32 0.0, %v6045
      %v6047 = vpop.f32.mrf.mxu0
      %6048 = vmatprep.mubr.f32.mxu0 %v5951
      %6049 = vmatmul.mubr.f32.gmra.mxu0 %v5950
      %v6050 = vpop.f32.mrf.mxu0
      %v6051 = vadd.f32 0.0, %v6050
      %v6052 = vpop.f32.mrf.mxu0
      %6053 = vmatprep.mubr.f32.mxu0 %v5953
      %6054 = vmatmul.mubr.f32.gmra.mxu0 %v5952
      %v6055 = vpop.f32.mrf.mxu0
      %v6056 = vadd.f32 0.0, %v6055
      %v6057 = vpop.f32.mrf.mxu0
      %6058 = vdwg.mxu0
      %6059 = vst [vmem:[%s352] sm:$0xff] %v6021
      %6060 = vst [vmem:[%s352 + $0x8] sm:$0xff] %v6026
      %6061 = vst [vmem:[%s352 + $0x10] sm:$0xff] %v6031
      %6062 = vst [vmem:[%s352 + $0x18] sm:$0xff] %v6036
      %6063 = vst [vmem:[%s352 + $0x20] sm:$0xff] %v6041
      %6064 = vst [vmem:[%s352 + $0x28] sm:$0xff] %v6046
      %6065 = vst [vmem:[%s352 + $0x30] sm:$0xff] %v6051
      %6066 = vst [vmem:[%s352 + $0x38] sm:$0xff] %v6056
      %p6067 = scmp.lt.s32.totalorder %s20, 1
      %s6068 = scalar_select %p6067, %s20, 1
      %s6069 = smul.addr %s6068, 8
      %s6070 = smul.addr %s6069, 8
      %s6071 = scalar_lea.vmem %s9, %s6070
      // Predicated region
      $region57: #{_lambda_.3} parent=55 // pred_check
        %p6072 = pneg %p237
      $region58: #{_lambda_.3} parent=55 // pred_check_branch
        %6074 = sbr.rel (%p6072) target = $region60
      $region59: #{_lambda_.3} parent=55 // pred_region
        _
      $region60: #{_lambda_.3} parent=55 // pred_fallthru
        _
    $region56: #{_lambda_.3} parent=5 // pred_fallthru
      _
    %p6075 = scmp.le.s32.totalorder 2, %s15
    // Predicated region
    $region61: #{_lambda_.3} parent=5 // pred_check
      %p6076 = pneg %p6075
    $region62: #{_lambda_.3} parent=5 // pred_check_branch
      %6078 = sbr.rel (%p6076) target = $region64
    $region63: #{_lambda_.3} parent=5 // pred_region
      %s6079 = ssub.s32 %s15, 2
      // Predicated region
      $region65: #{_lambda_.3} parent=63 // pred_check
        %p6080 = pneg %p243
      $region66: #{_lambda_.3} parent=63 // pred_check_branch
        %6082 = sbr.rel (%p6080) target = $region68
      $region67: #{_lambda_.3} parent=63 // pred_region
        %p6083 = scmp.lt.s32.totalorder %s21, 1
        %s6084 = scalar_select %p6083, %s21, 1
        %s6085 = smul.addr %s6084, 8
        %s6086 = smul.addr %s6085, 8
        %s6087 = scalar_lea.vmem %s9, %s6086
      $region68: #{_lambda_.3} parent=63 // pred_fallthru
        _
    $region64: #{_lambda_.3} parent=5 // pred_fallthru
      _
  $region6: #{_lambda_.3} parent=0 // loop_footer
    %s19 = sadd.s32 1, %s15
  $region7: #{_lambda_.3} parent=0 // loop_footer_branch
    %14 = sbr.rel target = $region3
  $region8: #{_lambda_.3} parent=0 // loop_exit
    _

</llo_original>
